<compile_context>
chip_gen: v7x
topology: tpu7x:2x2x1
jax: 0.10.0
libtpu: 0.0.40
codegen_flags: <defaults>
</compile_context>

<pallas_src>
import jax
import jax.numpy as jnp
from jax.experimental import pallas as pl
from jax.experimental.pallas import tpu as pltpu

C = 120
H = 28
W = 28
HW = H * W
EPS = 1e-5


def fused_kernel(s_ref, x125_ref, w_ref, gamma_ref, beta_ref, x119_ref, o_ref):
    # Per-channel sigmoid gate: exp on the EUP, reciprocal instead of a VALU
    # divide. Tiny (C,1) tile -> negligible, but keeps the VALU slot clear.
    gate = pl.reciprocal(1.0 + jnp.exp(-s_ref[...]))                  # (C, 1) f32

    # Gate the activations and feed the MXU in bf16 (accumulate in f32).
    y = (gate * x125_ref[...]).astype(jnp.bfloat16)                   # (C, HW)
    w = w_ref[...].astype(jnp.bfloat16)                               # (C, C)
    conv = jnp.dot(w, y, preferred_element_type=jnp.float32)          # (C, HW) f32

    # One-pass BN statistics: row sums as MXU dots against a 1/HW column
    # (MXU is otherwise idle after the tiny conv; keeps the reductions off
    # the XLU/VALU critical path). Biased variance, as PyTorch BN training.
    inv_hw_col = jnp.full((HW, 1), 1.0 / HW, dtype=jnp.float32)
    mean = jnp.dot(conv, inv_hw_col, preferred_element_type=jnp.float32)          # (C,1)
    mean_sq = jnp.dot(conv * conv, inv_hw_col, preferred_element_type=jnp.float32)  # (C,1)
    var = mean_sq - mean * mean

    # Fold gamma / rsqrt / mean / beta into one per-channel scale & bias so the
    # big (C, HW) tensors are touched exactly once more.
    scale = gamma_ref[...] * jax.lax.rsqrt(var + EPS)                 # (C, 1)
    bias = beta_ref[...] - mean * scale                               # (C, 1)

    # normalize + affine + residual add + ReLU in a single fused pass.
    o_ref[...] = jnp.maximum(x119_ref[...] + conv * scale + bias, 0.0)


@jax.jit
def fused_forward(x129, x125, x119, conv_w, gamma, beta):
    """x129: (1,C,1,1); x125, x119: (1,C,H,W); conv_w: (C,C); gamma, beta: (C,)."""
    s = x129.reshape(C, 1).astype(jnp.float32)
    a = x125.reshape(C, HW).astype(jnp.float32)
    r = x119.reshape(C, HW).astype(jnp.float32)
    g = gamma.reshape(C, 1).astype(jnp.float32)
    b = beta.reshape(C, 1).astype(jnp.float32)
    w = conv_w.reshape(C, C).astype(jnp.float32)

    vmem = pl.BlockSpec(memory_space=pltpu.MemorySpace.VMEM)
    out = pl.pallas_call(
        fused_kernel,
        out_shape=jax.ShapeDtypeStruct((C, HW), jnp.float32),
        in_specs=[vmem] * 6,
        out_specs=vmem,
    )(s, a, w, g, b, r)
    return out.reshape(1, C, H, W)


def reference_forward(x129, x125, x119, conv_w, gamma, beta,
                      matmul_dtype=jnp.float32):
    """Pure-JAX reference with PyTorch forward semantics.

    matmul_dtype lets us also build a reference that mirrors the kernel's
    bf16 matmul (f32 accumulation) for a tight numerical check.
    """
    gate = 1.0 / (1.0 + jnp.exp(-x129))                     # (1,C,1,1)
    y = (gate * x125).reshape(C, HW)
    conv = jnp.dot(conv_w.astype(matmul_dtype), y.astype(matmul_dtype),
                   preferred_element_type=jnp.float32)      # (C, HW) f32
    mean = conv.mean(axis=1, keepdims=True)
    var = ((conv - mean) ** 2).mean(axis=1, keepdims=True)  # biased, as PyTorch BN
    bn = (conv - mean) * jax.lax.rsqrt(var + EPS)
    bn = bn * gamma.reshape(C, 1) + beta.reshape(C, 1)
    out = jnp.maximum(x119.reshape(C, HW) + bn, 0.0)
    return out.reshape(1, C, H, W)


if __name__ == "__main__":
    key = jax.random.PRNGKey(0)
    k1, k2, k3, k4 = jax.random.split(key, 4)

    # deterministic example inputs (shapes implied by the module)
    x119 = jax.random.normal(k1, (1, C, H, W), dtype=jnp.float32)
    x125 = jax.random.normal(k2, (1, C, H, W), dtype=jnp.float32)
    x129 = jax.random.normal(k3, (1, C, 1, 1), dtype=jnp.float32)

    # deterministic parameters (PyTorch BN defaults: weight=1, bias=0)
    conv_w = jax.random.normal(k4, (C, C), dtype=jnp.float32) * 0.05
    gamma = jnp.ones((C,), dtype=jnp.float32)
    beta = jnp.zeros((C,), dtype=jnp.float32)

    out = fused_forward(x129, x125, x119, conv_w, gamma, beta)
    out = jax.block_until_ready(out)
    assert out.shape == (1, C, H, W)

    # Tight check vs a reference that mirrors the kernel's bf16 conv matmul.
    ref_bf16 = reference_forward(x129, x125, x119, conv_w, gamma, beta,
                                 matmul_dtype=jnp.bfloat16)
    assert jnp.allclose(out, ref_bf16, atol=1e-3, rtol=1e-3), \
        "mismatch vs bf16-matmul reference"

    # Loose check vs the exact f32 (PyTorch-semantics) reference: the only
    # deviation is bf16 rounding of the 1x1-conv operands (f32 accumulation).
    ref_f32 = reference_forward(x129, x125, x119, conv_w, gamma, beta,
                                matmul_dtype=jnp.float32)
    assert jnp.allclose(out, ref_f32, atol=2e-2, rtol=2e-2), \
        "mismatch vs f32 reference"

    print("KERNEL_OK")
</pallas_src>

<mosaic_0001>
module attributes {stable_mosaic.version = 11 : i64} {
  func.func @fused_kernel(%arg0: memref<120x1xf32, #tpu.memory_space<vmem>>, %arg1: memref<120x784xf32, #tpu.memory_space<vmem>>, %arg2: memref<120x120xf32, #tpu.memory_space<vmem>>, %arg3: memref<120x1xf32, #tpu.memory_space<vmem>>, %arg4: memref<120x1xf32, #tpu.memory_space<vmem>>, %arg5: memref<120x784xf32, #tpu.memory_space<vmem>>, %arg6: memref<120x784xf32, #tpu.memory_space<vmem>>) attributes {dimension_semantics = [], scalar_prefetch = 0 : i64, scratch_operands = 0 : i64, tpu.core_type = #tpu.core_type<tc>} {
    %c0 = arith.constant 0 : index
    %c0_0 = arith.constant 0 : index
    %0 = vector.load %arg0[%c0, %c0_0] : memref<120x1xf32, #tpu.memory_space<vmem>>, vector<120x1xf32>
    %cst = arith.constant 0.000000e+00 : f32
    %1 = vector.broadcast %cst : f32 to vector<120x1xf32>
    %2 = arith.subf %1, %0 : vector<120x1xf32>
    %3 = math.exp %2 : vector<120x1xf32>
    %cst_1 = arith.constant 1.000000e+00 : f32
    %4 = vector.broadcast %cst_1 : f32 to vector<120x1xf32>
    %5 = arith.addf %4, %3 : vector<120x1xf32>
    %6 = tpu.reciprocal %5 : vector<120x1xf32> -> vector<120x1xf32>
    %c0_2 = arith.constant 0 : index
    %c0_3 = arith.constant 0 : index
    %7 = vector.load %arg1[%c0_2, %c0_3] : memref<120x784xf32, #tpu.memory_space<vmem>>, vector<120x784xf32>
    %8 = vector.broadcast %6 : vector<120x1xf32> to vector<120x784xf32>
    %9 = arith.mulf %8, %7 : vector<120x784xf32>
    %10 = arith.truncf %9 : vector<120x784xf32> to vector<120x784xbf16>
    %c0_4 = arith.constant 0 : index
    %c0_5 = arith.constant 0 : index
    %11 = vector.load %arg2[%c0_4, %c0_5] : memref<120x120xf32, #tpu.memory_space<vmem>>, vector<120x120xf32>
    %12 = arith.truncf %11 : vector<120x120xf32> to vector<120x120xbf16>
    %cst_6 = arith.constant dense<0.000000e+00> : vector<120x784xf32>
    %13 = tpu.matmul %12, %10, %cst_6 {dimension_numbers = #tpu.dot_dimension_numbers<[1], [0], [0], [1], [0, 0, 1, 1], [], []>} : vector<120x120xbf16>, vector<120x784xbf16>, vector<120x784xf32> -> vector<120x784xf32>
    %cst_7 = arith.constant 0.00127551018 : f32
    %14 = vector.broadcast %cst_7 : f32 to vector<784x1xf32>
    %cst_8 = arith.constant dense<0.000000e+00> : vector<120x1xf32>
    %15 = tpu.matmul %13, %14, %cst_8 {dimension_numbers = #tpu.dot_dimension_numbers<[1], [0], [0], [1], [0, 0, 1, 1], [], []>} : vector<120x784xf32>, vector<784x1xf32>, vector<120x1xf32> -> vector<120x1xf32>
    %16 = arith.mulf %13, %13 : vector<120x784xf32>
    %cst_9 = arith.constant dense<0.000000e+00> : vector<120x1xf32>
    %17 = tpu.matmul %16, %14, %cst_9 {dimension_numbers = #tpu.dot_dimension_numbers<[1], [0], [0], [1], [0, 0, 1, 1], [], []>} : vector<120x784xf32>, vector<784x1xf32>, vector<120x1xf32> -> vector<120x1xf32>
    %18 = arith.mulf %15, %15 : vector<120x1xf32>
    %19 = arith.subf %17, %18 : vector<120x1xf32>
    %c0_10 = arith.constant 0 : index
    %c0_11 = arith.constant 0 : index
    %20 = vector.load %arg3[%c0_10, %c0_11] : memref<120x1xf32, #tpu.memory_space<vmem>>, vector<120x1xf32>
    %cst_12 = arith.constant 9.99999974E-6 : f32
    %21 = vector.broadcast %cst_12 : f32 to vector<120x1xf32>
    %22 = arith.addf %19, %21 : vector<120x1xf32>
    %23 = math.rsqrt %22 : vector<120x1xf32>
    %24 = arith.mulf %20, %23 : vector<120x1xf32>
    %c0_13 = arith.constant 0 : index
    %c0_14 = arith.constant 0 : index
    %25 = vector.load %arg4[%c0_13, %c0_14] : memref<120x1xf32, #tpu.memory_space<vmem>>, vector<120x1xf32>
    %26 = arith.mulf %15, %24 : vector<120x1xf32>
    %27 = arith.subf %25, %26 : vector<120x1xf32>
    %c0_15 = arith.constant 0 : index
    %c0_16 = arith.constant 0 : index
    %28 = vector.load %arg5[%c0_15, %c0_16] : memref<120x784xf32, #tpu.memory_space<vmem>>, vector<120x784xf32>
    %29 = vector.broadcast %24 : vector<120x1xf32> to vector<120x784xf32>
    %30 = arith.mulf %13, %29 : vector<120x784xf32>
    %31 = arith.addf %28, %30 : vector<120x784xf32>
    %32 = vector.broadcast %27 : vector<120x1xf32> to vector<120x784xf32>
    %33 = arith.addf %31, %32 : vector<120x784xf32>
    %cst_17 = arith.constant 0.000000e+00 : f32
    %34 = vector.broadcast %cst_17 : f32 to vector<120x784xf32>
    %35 = arith.maximumf %33, %34 : vector<120x784xf32>
    %c0_18 = arith.constant 0 : index
    %c0_19 = arith.constant 0 : index
    %36 = vector.load %arg6[%c0_18, %c0_19] : memref<120x784xf32, #tpu.memory_space<vmem>>, vector<120x784xf32>
    tpu.vector_store %arg6[%c0_18, %c0_19], %35 {strides = array<i32>} : memref<120x784xf32, #tpu.memory_space<vmem>>, vector<120x784xf32>,
    return
  }
}

</mosaic_0001>

<llo_original>
// kernel: fused_forward.1
$region0: #{fused_forward.1}
  #allocation0 [shape = 'u32[]', space=smem, size = 0x4, offset = 0x4, fixed_abs, tag = 'smem constant byte address 0x4 - core index']
  #allocation1 [shape = 'u32[144,128]{1,0:T(1,128)}', space=vmem, size = 0x12000, scoped, tag = 'internal scratch']
  %s0 = inlined_call_operand.vmem [shape: f32[120,1], index: 0, kind: input, shape index: {}]
  %s1 = inlined_call_operand.vmem [shape: f32[120,784], index: 1, kind: input, shape index: {}]
  %s2 = inlined_call_operand.vmem [shape: f32[120,120], index: 2, kind: input, shape index: {}]
  %s3 = inlined_call_operand.vmem [shape: f32[120,1], index: 3, kind: input, shape index: {}]
  %s4 = inlined_call_operand.vmem [shape: f32[120,1], index: 4, kind: input, shape index: {}]
  %s5 = inlined_call_operand.vmem [shape: f32[120,784], index: 5, kind: input, shape index: {}]
  %s6 = inlined_call_operand.vmem [shape: f32[120,784], index: 6, kind: output, shape index: {}]
  %s7 = sld [smem:[#allocation0]]
  $region34: #{fused_forward.1} parent=0
    _
  %s9 = ssub.s32 1, %s7
  %s10 = scalar_select 0, %s9, %s7
  // Predicated region
  $region2: #{fused_forward.1} parent=0 // pred_check
    _
  $region3: #{fused_forward.1} parent=0 // pred_check_branch
    %12 = sbr.rel (0) target = $region5
  $region4: #{fused_forward.1} parent=0 // pred_region
    _
  $region5: #{fused_forward.1} parent=0 // pred_fallthru
    _
  // Predicated region
  $region6: #{fused_forward.1} parent=0 // pred_check
    _
  $region7: #{fused_forward.1} parent=0 // pred_check_branch
    %14 = sbr.rel (0) target = $region9
  $region8: #{fused_forward.1} parent=0 // pred_region
    _
  $region9: #{fused_forward.1} parent=0 // pred_fallthru
    _
  // Predicated region
  $region10: #{fused_forward.1} parent=0 // pred_check
    _
  $region11: #{fused_forward.1} parent=0 // pred_check_branch
    %16 = sbr.rel (0) target = $region13
  $region12: #{fused_forward.1} parent=0 // pred_region
    _
  $region13: #{fused_forward.1} parent=0 // pred_fallthru
    _
  // Predicated region
  $region14: #{fused_forward.1} parent=0 // pred_check
    _
  $region15: #{fused_forward.1} parent=0 // pred_check_branch
    %18 = sbr.rel (0) target = $region17
  $region16: #{fused_forward.1} parent=0 // pred_region
    _
  $region17: #{fused_forward.1} parent=0 // pred_fallthru
    _
  // Predicated region
  $region18: #{fused_forward.1} parent=0 // pred_check
    _
  $region19: #{fused_forward.1} parent=0 // pred_check_branch
    %20 = sbr.rel (0) target = $region21
  $region20: #{fused_forward.1} parent=0 // pred_region
    _
  $region21: #{fused_forward.1} parent=0 // pred_fallthru
    _
  // Predicated region
  $region22: #{fused_forward.1} parent=0 // pred_check
    _
  $region23: #{fused_forward.1} parent=0 // pred_check_branch
    %22 = sbr.rel (0) target = $region25
  $region24: #{fused_forward.1} parent=0 // pred_region
    _
  $region25: #{fused_forward.1} parent=0 // pred_fallthru
    _
  %v24 = vld [vmem:[%s0] sm:$0xff]
  %v25 = vld [vmem:[%s0 + $0x8] sm:$0xff]
  %v26 = vld [vmem:[%s0 + $0x10] sm:$0xff]
  %v27 = vld [vmem:[%s0 + $0x18] sm:$0xff]
  %v28 = vld [vmem:[%s0 + $0x20] sm:$0xff]
  %v29 = vld [vmem:[%s0 + $0x28] sm:$0xff]
  %v30 = vld [vmem:[%s0 + $0x30] sm:$0xff]
  %v31 = vld [vmem:[%s0 + $0x38] sm:$0xff]
  %v32 = vld [vmem:[%s0 + $0x40] sm:$0xff]
  %v33 = vld [vmem:[%s0 + $0x48] sm:$0xff]
  %v34 = vld [vmem:[%s0 + $0x50] sm:$0xff]
  %v35 = vld [vmem:[%s0 + $0x58] sm:$0xff]
  %v36 = vld [vmem:[%s0 + $0x60] sm:$0xff]
  %v37 = vld [vmem:[%s0 + $0x68] sm:$0xff]
  %v38 = vld [vmem:[%s0 + $0x70] sm:$0xff]
  %v39 = vsub.f32 0.0, %v24
  %v40 = vsub.f32 0.0, %v25
  %v41 = vsub.f32 0.0, %v26
  %v42 = vsub.f32 0.0, %v27
  %v43 = vsub.f32 0.0, %v28
  %v44 = vsub.f32 0.0, %v29
  %v45 = vsub.f32 0.0, %v30
  %v46 = vsub.f32 0.0, %v31
  %v47 = vsub.f32 0.0, %v32
  %v48 = vsub.f32 0.0, %v33
  %v49 = vsub.f32 0.0, %v34
  %v50 = vsub.f32 0.0, %v35
  %v51 = vsub.f32 0.0, %v36
  %v52 = vsub.f32 0.0, %v37
  %v53 = vsub.f32 0.0, %v38
  %v54 = vmul.f32 %v39, 1.442695
  %v55 = vpow.pop %v54
  %v56 = vmul.f32 %v40, 1.442695
  %v57 = vpow.pop %v56
  %v58 = vmul.f32 %v41, 1.442695
  %v59 = vpow.pop %v58
  %v60 = vmul.f32 %v42, 1.442695
  %v61 = vpow.pop %v60
  %v62 = vmul.f32 %v43, 1.442695
  %v63 = vpow.pop %v62
  %v64 = vmul.f32 %v44, 1.442695
  %v65 = vpow.pop %v64
  %v66 = vmul.f32 %v45, 1.442695
  %v67 = vpow.pop %v66
  %v68 = vmul.f32 %v46, 1.442695
  %v69 = vpow.pop %v68
  %v70 = vmul.f32 %v47, 1.442695
  %v71 = vpow.pop %v70
  %v72 = vmul.f32 %v48, 1.442695
  %v73 = vpow.pop %v72
  %v74 = vmul.f32 %v49, 1.442695
  %v75 = vpow.pop %v74
  %v76 = vmul.f32 %v50, 1.442695
  %v77 = vpow.pop %v76
  %v78 = vmul.f32 %v51, 1.442695
  %v79 = vpow.pop %v78
  %v80 = vmul.f32 %v52, 1.442695
  %v81 = vpow.pop %v80
  %v82 = vmul.f32 %v53, 1.442695
  %v83 = vpow.pop %v82
  %v84 = vadd.f32 %v55, 1.0
  %v85 = vadd.f32 %v57, 1.0
  %v86 = vadd.f32 %v59, 1.0
  %v87 = vadd.f32 %v61, 1.0
  %v88 = vadd.f32 %v63, 1.0
  %v89 = vadd.f32 %v65, 1.0
  %v90 = vadd.f32 %v67, 1.0
  %v91 = vadd.f32 %v69, 1.0
  %v92 = vadd.f32 %v71, 1.0
  %v93 = vadd.f32 %v73, 1.0
  %v94 = vadd.f32 %v75, 1.0
  %v95 = vadd.f32 %v77, 1.0
  %v96 = vadd.f32 %v79, 1.0
  %v97 = vadd.f32 %v81, 1.0
  %v98 = vadd.f32 %v83, 1.0
  %v99 = vrcp.pop %v84
  %v100 = vrcp.pop %v85
  %v101 = vrcp.pop %v86
  %v102 = vrcp.pop %v87
  %v103 = vrcp.pop %v88
  %v104 = vrcp.pop %v89
  %v105 = vrcp.pop %v90
  %v106 = vrcp.pop %v91
  %v107 = vrcp.pop %v92
  %v108 = vrcp.pop %v93
  %v109 = vrcp.pop %v94
  %v110 = vrcp.pop %v95
  %v111 = vrcp.pop %v96
  %v112 = vrcp.pop %v97
  %v113 = vrcp.pop %v98
  %v114 = vld [vmem:[%s1] sm:$0xff]
  %v115 = vld [vmem:[%s1 + $0x8] sm:$0xff]
  %v116 = vld [vmem:[%s1 + $0x10] sm:$0xff]
  %v117 = vld [vmem:[%s1 + $0x18] sm:$0xff]
  %v118 = vld [vmem:[%s1 + $0x20] sm:$0xff]
  %v119 = vld [vmem:[%s1 + $0x28] sm:$0xff]
  %v120 = vld [vmem:[%s1 + $0x30] sm:$0xff]
  %v121 = vld [vmem:[%s1 + $0x38] sm:$0xff]
  %v122 = vld [vmem:[%s1 + $0x40] sm:$0xff]
  %v123 = vld [vmem:[%s1 + $0x48] sm:$0xff]
  %v124 = vld [vmem:[%s1 + $0x50] sm:$0xff]
  %v125 = vld [vmem:[%s1 + $0x58] sm:$0xff]
  %v126 = vld [vmem:[%s1 + $0x60] sm:$0xff]
  %v127 = vld [vmem:[%s1 + $0x68] sm:$0xff]
  %v128 = vld [vmem:[%s1 + $0x70] sm:$0xff]
  %v129 = vld [vmem:[%s1 + $0x78] sm:$0xff]
  %v130 = vld [vmem:[%s1 + $0x80] sm:$0xff]
  %v131 = vld [vmem:[%s1 + $0x88] sm:$0xff]
  %v132 = vld [vmem:[%s1 + $0x90] sm:$0xff]
  %v133 = vld [vmem:[%s1 + $0x98] sm:$0xff]
  %v134 = vld [vmem:[%s1 + $0xa0] sm:$0xff]
  %v135 = vld [vmem:[%s1 + $0xa8] sm:$0xff]
  %v136 = vld [vmem:[%s1 + $0xb0] sm:$0xff]
  %v137 = vld [vmem:[%s1 + $0xb8] sm:$0xff]
  %v138 = vld [vmem:[%s1 + $0xc0] sm:$0xff]
  %v139 = vld [vmem:[%s1 + $0xc8] sm:$0xff]
  %v140 = vld [vmem:[%s1 + $0xd0] sm:$0xff]
  %v141 = vld [vmem:[%s1 + $0xd8] sm:$0xff]
  %v142 = vld [vmem:[%s1 + $0xe0] sm:$0xff]
  %v143 = vld [vmem:[%s1 + $0xe8] sm:$0xff]
  %v144 = vld [vmem:[%s1 + $0xf0] sm:$0xff]
  %v145 = vld [vmem:[%s1 + $0xf8] sm:$0xff]
  %v146 = vld [vmem:[%s1 + $0x100] sm:$0xff]
  %v147 = vld [vmem:[%s1 + $0x108] sm:$0xff]
  %v148 = vld [vmem:[%s1 + $0x110] sm:$0xff]
  %v149 = vld [vmem:[%s1 + $0x118] sm:$0xff]
  %v150 = vld [vmem:[%s1 + $0x120] sm:$0xff]
  %v151 = vld [vmem:[%s1 + $0x128] sm:$0xff]
  %v152 = vld [vmem:[%s1 + $0x130] sm:$0xff]
  %v153 = vld [vmem:[%s1 + $0x138] sm:$0xff]
  %v154 = vld [vmem:[%s1 + $0x140] sm:$0xff]
  %v155 = vld [vmem:[%s1 + $0x148] sm:$0xff]
  %v156 = vld [vmem:[%s1 + $0x150] sm:$0xff]
  %v157 = vld [vmem:[%s1 + $0x158] sm:$0xff]
  %v158 = vld [vmem:[%s1 + $0x160] sm:$0xff]
  %v159 = vld [vmem:[%s1 + $0x168] sm:$0xff]
  %v160 = vld [vmem:[%s1 + $0x170] sm:$0xff]
  %v161 = vld [vmem:[%s1 + $0x178] sm:$0xff]
  %v162 = vld [vmem:[%s1 + $0x180] sm:$0xff]
  %v163 = vld [vmem:[%s1 + $0x188] sm:$0xff]
  %v164 = vld [vmem:[%s1 + $0x190] sm:$0xff]
  %v165 = vld [vmem:[%s1 + $0x198] sm:$0xff]
  %v166 = vld [vmem:[%s1 + $0x1a0] sm:$0xff]
  %v167 = vld [vmem:[%s1 + $0x1a8] sm:$0xff]
  %v168 = vld [vmem:[%s1 + $0x1b0] sm:$0xff]
  %v169 = vld [vmem:[%s1 + $0x1b8] sm:$0xff]
  %v170 = vld [vmem:[%s1 + $0x1c0] sm:$0xff]
  %v171 = vld [vmem:[%s1 + $0x1c8] sm:$0xff]
  %v172 = vld [vmem:[%s1 + $0x1d0] sm:$0xff]
  %v173 = vld [vmem:[%s1 + $0x1d8] sm:$0xff]
  %v174 = vld [vmem:[%s1 + $0x1e0] sm:$0xff]
  %v175 = vld [vmem:[%s1 + $0x1e8] sm:$0xff]
  %v176 = vld [vmem:[%s1 + $0x1f0] sm:$0xff]
  %v177 = vld [vmem:[%s1 + $0x1f8] sm:$0xff]
  %v178 = vld [vmem:[%s1 + $0x200] sm:$0xff]
  %v179 = vld [vmem:[%s1 + $0x208] sm:$0xff]
  %v180 = vld [vmem:[%s1 + $0x210] sm:$0xff]
  %v181 = vld [vmem:[%s1 + $0x218] sm:$0xff]
  %v182 = vld [vmem:[%s1 + $0x220] sm:$0xff]
  %v183 = vld [vmem:[%s1 + $0x228] sm:$0xff]
  %v184 = vld [vmem:[%s1 + $0x230] sm:$0xff]
  %v185 = vld [vmem:[%s1 + $0x238] sm:$0xff]
  %v186 = vld [vmem:[%s1 + $0x240] sm:$0xff]
  %v187 = vld [vmem:[%s1 + $0x248] sm:$0xff]
  %v188 = vld [vmem:[%s1 + $0x250] sm:$0xff]
  %v189 = vld [vmem:[%s1 + $0x258] sm:$0xff]
  %v190 = vld [vmem:[%s1 + $0x260] sm:$0xff]
  %v191 = vld [vmem:[%s1 + $0x268] sm:$0xff]
  %v192 = vld [vmem:[%s1 + $0x270] sm:$0xff]
  %v193 = vld [vmem:[%s1 + $0x278] sm:$0xff]
  %v194 = vld [vmem:[%s1 + $0x280] sm:$0xff]
  %v195 = vld [vmem:[%s1 + $0x288] sm:$0xff]
  %v196 = vld [vmem:[%s1 + $0x290] sm:$0xff]
  %v197 = vld [vmem:[%s1 + $0x298] sm:$0xff]
  %v198 = vld [vmem:[%s1 + $0x2a0] sm:$0xff]
  %v199 = vld [vmem:[%s1 + $0x2a8] sm:$0xff]
  %v200 = vld [vmem:[%s1 + $0x2b0] sm:$0xff]
  %v201 = vld [vmem:[%s1 + $0x2b8] sm:$0xff]
  %v202 = vld [vmem:[%s1 + $0x2c0] sm:$0xff]
  %v203 = vld [vmem:[%s1 + $0x2c8] sm:$0xff]
  %v204 = vld [vmem:[%s1 + $0x2d0] sm:$0xff]
  %v205 = vld [vmem:[%s1 + $0x2d8] sm:$0xff]
  %v206 = vld [vmem:[%s1 + $0x2e0] sm:$0xff]
  %v207 = vld [vmem:[%s1 + $0x2e8] sm:$0xff]
  %v208 = vld [vmem:[%s1 + $0x2f0] sm:$0xff]
  %v209 = vld [vmem:[%s1 + $0x2f8] sm:$0xff]
  %v210 = vld [vmem:[%s1 + $0x300] sm:$0xff]
  %v211 = vld [vmem:[%s1 + $0x308] sm:$0xff]
  %v212 = vld [vmem:[%s1 + $0x310] sm:$0xff]
  %v213 = vld [vmem:[%s1 + $0x318] sm:$0xff]
  %v214 = vld [vmem:[%s1 + $0x320] sm:$0xff]
  %v215 = vld [vmem:[%s1 + $0x328] sm:$0xff]
  %v216 = vld [vmem:[%s1 + $0x330] sm:$0xff]
  %v217 = vld [vmem:[%s1 + $0x338] sm:$0xff]
  %v218 = vld [vmem:[%s1 + $0x340] sm:$0xff]
  %220 = vset.pattern.permute.xlu0 0
  %221 = vperm.xlu0 %220, %v99
  %v222 = vpop.permute.xlu0 %221
  %225 = vset.pattern.permute.xlu0 0
  %226 = vperm.xlu0 %225, %v100
  %v227 = vpop.permute.xlu0 %226
  %230 = vset.pattern.permute.xlu0 0
  %231 = vperm.xlu0 %230, %v101
  %v232 = vpop.permute.xlu0 %231
  %235 = vset.pattern.permute.xlu0 0
  %236 = vperm.xlu0 %235, %v102
  %v237 = vpop.permute.xlu0 %236
  %240 = vset.pattern.permute.xlu0 0
  %241 = vperm.xlu0 %240, %v103
  %v242 = vpop.permute.xlu0 %241
  %245 = vset.pattern.permute.xlu0 0
  %246 = vperm.xlu0 %245, %v104
  %v247 = vpop.permute.xlu0 %246
  %250 = vset.pattern.permute.xlu0 0
  %251 = vperm.xlu0 %250, %v105
  %v252 = vpop.permute.xlu0 %251
  %255 = vset.pattern.permute.xlu0 0
  %256 = vperm.xlu0 %255, %v106
  %v257 = vpop.permute.xlu0 %256
  %260 = vset.pattern.permute.xlu0 0
  %261 = vperm.xlu0 %260, %v107
  %v262 = vpop.permute.xlu0 %261
  %265 = vset.pattern.permute.xlu0 0
  %266 = vperm.xlu0 %265, %v108
  %v267 = vpop.permute.xlu0 %266
  %270 = vset.pattern.permute.xlu0 0
  %271 = vperm.xlu0 %270, %v109
  %v272 = vpop.permute.xlu0 %271
  %275 = vset.pattern.permute.xlu0 0
  %276 = vperm.xlu0 %275, %v110
  %v277 = vpop.permute.xlu0 %276
  %280 = vset.pattern.permute.xlu0 0
  %281 = vperm.xlu0 %280, %v111
  %v282 = vpop.permute.xlu0 %281
  %285 = vset.pattern.permute.xlu0 0
  %286 = vperm.xlu0 %285, %v112
  %v287 = vpop.permute.xlu0 %286
  %290 = vset.pattern.permute.xlu0 0
  %291 = vperm.xlu0 %290, %v113
  %v292 = vpop.permute.xlu0 %291
  %v294 = vmul.f32 %v222, %v114
  %v295 = vmul.f32 %v222, %v115
  %v296 = vmul.f32 %v222, %v116
  %v297 = vmul.f32 %v222, %v117
  %v298 = vmul.f32 %v222, %v118
  %v299 = vmul.f32 %v222, %v119
  %v300 = vmul.f32 %v222, %v120
  %v301 = vmul.f32 %v227, %v121
  %v302 = vmul.f32 %v227, %v122
  %v303 = vmul.f32 %v227, %v123
  %v304 = vmul.f32 %v227, %v124
  %v305 = vmul.f32 %v227, %v125
  %v306 = vmul.f32 %v227, %v126
  %v307 = vmul.f32 %v227, %v127
  %v308 = vmul.f32 %v232, %v128
  %v309 = vmul.f32 %v232, %v129
  %v310 = vmul.f32 %v232, %v130
  %v311 = vmul.f32 %v232, %v131
  %v312 = vmul.f32 %v232, %v132
  %v313 = vmul.f32 %v232, %v133
  %v314 = vmul.f32 %v232, %v134
  %v315 = vmul.f32 %v237, %v135
  %v316 = vmul.f32 %v237, %v136
  %v317 = vmul.f32 %v237, %v137
  %v318 = vmul.f32 %v237, %v138
  %v319 = vmul.f32 %v237, %v139
  %v320 = vmul.f32 %v237, %v140
  %v321 = vmul.f32 %v237, %v141
  %v322 = vmul.f32 %v242, %v142
  %v323 = vmul.f32 %v242, %v143
  %v324 = vmul.f32 %v242, %v144
  %v325 = vmul.f32 %v242, %v145
  %v326 = vmul.f32 %v242, %v146
  %v327 = vmul.f32 %v242, %v147
  %v328 = vmul.f32 %v242, %v148
  %v329 = vmul.f32 %v247, %v149
  %v330 = vmul.f32 %v247, %v150
  %v331 = vmul.f32 %v247, %v151
  %v332 = vmul.f32 %v247, %v152
  %v333 = vmul.f32 %v247, %v153
  %v334 = vmul.f32 %v247, %v154
  %v335 = vmul.f32 %v247, %v155
  %v336 = vmul.f32 %v252, %v156
  %v337 = vmul.f32 %v252, %v157
  %v338 = vmul.f32 %v252, %v158
  %v339 = vmul.f32 %v252, %v159
  %v340 = vmul.f32 %v252, %v160
  %v341 = vmul.f32 %v252, %v161
  %v342 = vmul.f32 %v252, %v162
  %v343 = vmul.f32 %v257, %v163
  %v344 = vmul.f32 %v257, %v164
  %v345 = vmul.f32 %v257, %v165
  %v346 = vmul.f32 %v257, %v166
  %v347 = vmul.f32 %v257, %v167
  %v348 = vmul.f32 %v257, %v168
  %v349 = vmul.f32 %v257, %v169
  %v350 = vmul.f32 %v262, %v170
  %v351 = vmul.f32 %v262, %v171
  %v352 = vmul.f32 %v262, %v172
  %v353 = vmul.f32 %v262, %v173
  %v354 = vmul.f32 %v262, %v174
  %v355 = vmul.f32 %v262, %v175
  %v356 = vmul.f32 %v262, %v176
  %v357 = vmul.f32 %v267, %v177
  %v358 = vmul.f32 %v267, %v178
  %v359 = vmul.f32 %v267, %v179
  %v360 = vmul.f32 %v267, %v180
  %v361 = vmul.f32 %v267, %v181
  %v362 = vmul.f32 %v267, %v182
  %v363 = vmul.f32 %v267, %v183
  %v364 = vmul.f32 %v272, %v184
  %v365 = vmul.f32 %v272, %v185
  %v366 = vmul.f32 %v272, %v186
  %v367 = vmul.f32 %v272, %v187
  %v368 = vmul.f32 %v272, %v188
  %v369 = vmul.f32 %v272, %v189
  %v370 = vmul.f32 %v272, %v190
  %v371 = vmul.f32 %v277, %v191
  %v372 = vmul.f32 %v277, %v192
  %v373 = vmul.f32 %v277, %v193
  %v374 = vmul.f32 %v277, %v194
  %v375 = vmul.f32 %v277, %v195
  %v376 = vmul.f32 %v277, %v196
  %v377 = vmul.f32 %v277, %v197
  %v378 = vmul.f32 %v282, %v198
  %v379 = vmul.f32 %v282, %v199
  %v380 = vmul.f32 %v282, %v200
  %v381 = vmul.f32 %v282, %v201
  %v382 = vmul.f32 %v282, %v202
  %v383 = vmul.f32 %v282, %v203
  %v384 = vmul.f32 %v282, %v204
  %v385 = vmul.f32 %v287, %v205
  %v386 = vmul.f32 %v287, %v206
  %v387 = vmul.f32 %v287, %v207
  %v388 = vmul.f32 %v287, %v208
  %v389 = vmul.f32 %v287, %v209
  %v390 = vmul.f32 %v287, %v210
  %v391 = vmul.f32 %v287, %v211
  %v392 = vmul.f32 %v292, %v212
  %v393 = vmul.f32 %v292, %v213
  %v394 = vmul.f32 %v292, %v214
  %v395 = vmul.f32 %v292, %v215
  %v396 = vmul.f32 %v292, %v216
  %v397 = vmul.f32 %v292, %v217
  %v398 = vmul.f32 %v292, %v218
  %v399 = vpack.c.bf16 %v301, %v294
  %v400 = vpack.c.bf16 %v302, %v295
  %v401 = vpack.c.bf16 %v303, %v296
  %v402 = vpack.c.bf16 %v304, %v297
  %v403 = vpack.c.bf16 %v305, %v298
  %v404 = vpack.c.bf16 %v306, %v299
  %v405 = vpack.c.bf16 %v307, %v300
  %v406 = vpack.c.bf16 %v315, %v308
  %v407 = vpack.c.bf16 %v316, %v309
  %v408 = vpack.c.bf16 %v317, %v310
  %v409 = vpack.c.bf16 %v318, %v311
  %v410 = vpack.c.bf16 %v319, %v312
  %v411 = vpack.c.bf16 %v320, %v313
  %v412 = vpack.c.bf16 %v321, %v314
  %v413 = vpack.c.bf16 %v329, %v322
  %v414 = vpack.c.bf16 %v330, %v323
  %v415 = vpack.c.bf16 %v331, %v324
  %v416 = vpack.c.bf16 %v332, %v325
  %v417 = vpack.c.bf16 %v333, %v326
  %v418 = vpack.c.bf16 %v334, %v327
  %v419 = vpack.c.bf16 %v335, %v328
  %v420 = vpack.c.bf16 %v343, %v336
  %v421 = vpack.c.bf16 %v344, %v337
  %v422 = vpack.c.bf16 %v345, %v338
  %v423 = vpack.c.bf16 %v346, %v339
  %v424 = vpack.c.bf16 %v347, %v340
  %v425 = vpack.c.bf16 %v348, %v341
  %v426 = vpack.c.bf16 %v349, %v342
  %v427 = vpack.c.bf16 %v357, %v350
  %v428 = vpack.c.bf16 %v358, %v351
  %v429 = vpack.c.bf16 %v359, %v352
  %v430 = vpack.c.bf16 %v360, %v353
  %v431 = vpack.c.bf16 %v361, %v354
  %v432 = vpack.c.bf16 %v362, %v355
  %v433 = vpack.c.bf16 %v363, %v356
  %v434 = vpack.c.bf16 %v371, %v364
  %v435 = vpack.c.bf16 %v372, %v365
  %v436 = vpack.c.bf16 %v373, %v366
  %v437 = vpack.c.bf16 %v374, %v367
  %v438 = vpack.c.bf16 %v375, %v368
  %v439 = vpack.c.bf16 %v376, %v369
  %v440 = vpack.c.bf16 %v377, %v370
  %v441 = vpack.c.bf16 %v385, %v378
  %v442 = vpack.c.bf16 %v386, %v379
  %v443 = vpack.c.bf16 %v387, %v380
  %v444 = vpack.c.bf16 %v388, %v381
  %v445 = vpack.c.bf16 %v389, %v382
  %v446 = vpack.c.bf16 %v390, %v383
  %v447 = vpack.c.bf16 %v391, %v384
  %v448 = vpack.c.bf16 %v392, %v392
  %v449 = vpack.c.bf16 %v393, %v393
  %v450 = vpack.c.bf16 %v394, %v394
  %v451 = vpack.c.bf16 %v395, %v395
  %v452 = vpack.c.bf16 %v396, %v396
  %v453 = vpack.c.bf16 %v397, %v397
  %v454 = vpack.c.bf16 %v398, %v398
  %v455 = vld [vmem:[%s2] sm:$0xff]
  %v456 = vld [vmem:[%s2 + $0x8] sm:$0xff]
  %v457 = vld [vmem:[%s2 + $0x10] sm:$0xff]
  %v458 = vld [vmem:[%s2 + $0x18] sm:$0xff]
  %v459 = vld [vmem:[%s2 + $0x20] sm:$0xff]
  %v460 = vld [vmem:[%s2 + $0x28] sm:$0xff]
  %v461 = vld [vmem:[%s2 + $0x30] sm:$0xff]
  %v462 = vld [vmem:[%s2 + $0x38] sm:$0xff]
  %v463 = vld [vmem:[%s2 + $0x40] sm:$0xff]
  %v464 = vld [vmem:[%s2 + $0x48] sm:$0xff]
  %v465 = vld [vmem:[%s2 + $0x50] sm:$0xff]
  %v466 = vld [vmem:[%s2 + $0x58] sm:$0xff]
  %v467 = vld [vmem:[%s2 + $0x60] sm:$0xff]
  %v468 = vld [vmem:[%s2 + $0x68] sm:$0xff]
  %v469 = vld [vmem:[%s2 + $0x70] sm:$0xff]
  %v470 = vpack.c.bf16 %v456, %v455
  %v471 = vpack.c.bf16 %v458, %v457
  %v472 = vpack.c.bf16 %v460, %v459
  %v473 = vpack.c.bf16 %v462, %v461
  %v474 = vpack.c.bf16 %v464, %v463
  %v475 = vpack.c.bf16 %v466, %v465
  %v476 = vpack.c.bf16 %v468, %v467
  %v477 = vpack.c.bf16 %v469, %v469
  %vm478 = vcmask 982016
  %v480 = vsel %vm478, %v470, 0
  %v483 = vsel %vm478, %v471, 0
  %v486 = vsel %vm478, %v472, 0
  %v489 = vsel %vm478, %v473, 0
  %v492 = vsel %vm478, %v474, 0
  %v495 = vsel %vm478, %v475, 0
  %v498 = vsel %vm478, %v476, 0
  %v501 = vsel %vm478, %v477, 0
  %vm503 = vcmask 1043456
  %v505 = vsel %vm503, %v448, 0
  %v508 = vsel %vm503, %v449, 0
  %v511 = vsel %vm503, %v450, 0
  %v514 = vsel %vm503, %v451, 0
  %v517 = vsel %vm503, %v452, 0
  %v520 = vsel %vm503, %v453, 0
  %v523 = vsel %vm503, %v454, 0
  %525 = vmatprep.subr.bf16.mxu0 %v400
  %526 = vmatpush1.bf16.msra.mxu0 %v399
  %527 = vmatprep.subr.bf16.mxu0 %v407
  %528 = vmatpush1.bf16.msra.mxu0 %v406
  %529 = vmatprep.subr.bf16.mxu0 %v414
  %530 = vmatpush1.bf16.msra.mxu0 %v413
  %531 = vmatprep.subr.bf16.mxu0 %v421
  %532 = vmatpush1.bf16.msra.mxu0 %v420
  %533 = vmatprep.subr.bf16.mxu0 %v428
  %534 = vmatpush1.bf16.msra.mxu0 %v427
  %535 = vmatprep.subr.bf16.mxu0 %v435
  %536 = vmatpush1.bf16.msra.mxu0 %v434
  %537 = vmatprep.subr.bf16.mxu0 %v442
  %538 = vmatpush1.bf16.msra.mxu0 %v441
  %539 = vmatprep.subr.bf16.mxu0 %v508
  %540 = vmatpush1.bf16.msra.mxu0 %v505
  %541 = vmatprep.subr.bf16.mxu0 0
  %542 = vmatpush1.bf16.msra.mxu0 0
  %543 = vmatprep.subr.bf16.mxu0 0
  %544 = vmatpush1.bf16.msra.mxu0 0
  %545 = vmatprep.subr.bf16.mxu0 0
  %546 = vmatpush1.bf16.msra.mxu0 0
  %547 = vmatprep.subr.bf16.mxu0 0
  %548 = vmatpush1.bf16.msra.mxu0 0
  %549 = vmatprep.subr.bf16.mxu0 0
  %550 = vmatpush1.bf16.msra.mxu0 0
  %551 = vmatprep.subr.bf16.mxu0 0
  %552 = vmatpush1.bf16.msra.mxu0 0
  %553 = vmatprep.subr.bf16.mxu0 0
  %554 = vmatpush1.bf16.msra.mxu0 0
  %555 = vmatprep.subr.bf16.mxu0 0
  %556 = vmatpush1.bf16.msra.mxu0 0
  %557 = vmatprep.mubr.bf16.mxu0 0
  %558 = vmatmul.mubr.bf16.gmra.mrb[0].mxu0 %v480
  %v559 = vpop.f32.mrb[0].mxu0
  %v560 = vadd.f32 0.0, %v559
  %v561 = vpop.f32.mrb[0].mxu0
  %v562 = vadd.f32 0.0, %v561
  %v563 = vpop.f32.mrb[0].mxu0
  %v564 = vadd.f32 0.0, %v563
  %v565 = vpop.f32.mrb[0].mxu0
  %v566 = vadd.f32 0.0, %v565
  %567 = vmatprep.mubr.bf16.mxu0 0
  %568 = vmatmul.mubr.bf16.gmra.mrb[0].mxu0 %v483
  %v569 = vpop.f32.mrb[0].mxu0
  %v570 = vadd.f32 0.0, %v569
  %v571 = vpop.f32.mrb[0].mxu0
  %v572 = vadd.f32 0.0, %v571
  %v573 = vpop.f32.mrb[0].mxu0
  %v574 = vadd.f32 0.0, %v573
  %v575 = vpop.f32.mrb[0].mxu0
  %v576 = vadd.f32 0.0, %v575
  %577 = vmatprep.mubr.bf16.mxu0 0
  %578 = vmatmul.mubr.bf16.gmra.mrb[0].mxu0 %v486
  %v579 = vpop.f32.mrb[0].mxu0
  %v580 = vadd.f32 0.0, %v579
  %v581 = vpop.f32.mrb[0].mxu0
  %v582 = vadd.f32 0.0, %v581
  %v583 = vpop.f32.mrb[0].mxu0
  %v584 = vadd.f32 0.0, %v583
  %v585 = vpop.f32.mrb[0].mxu0
  %v586 = vadd.f32 0.0, %v585
  %587 = vmatprep.mubr.bf16.mxu0 0
  %588 = vmatmul.mubr.bf16.gmra.mrb[0].mxu0 %v489
  %v589 = vpop.f32.mrb[0].mxu0
  %v590 = vadd.f32 0.0, %v589
  %v591 = vpop.f32.mrb[0].mxu0
  %v592 = vadd.f32 0.0, %v591
  %v593 = vpop.f32.mrb[0].mxu0
  %v594 = vadd.f32 0.0, %v593
  %v595 = vpop.f32.mrb[0].mxu0
  %v596 = vadd.f32 0.0, %v595
  %597 = vmatprep.mubr.bf16.mxu0 0
  %598 = vmatmul.mubr.bf16.gmra.mrb[0].mxu0 %v492
  %v599 = vpop.f32.mrb[0].mxu0
  %v600 = vadd.f32 0.0, %v599
  %v601 = vpop.f32.mrb[0].mxu0
  %v602 = vadd.f32 0.0, %v601
  %v603 = vpop.f32.mrb[0].mxu0
  %v604 = vadd.f32 0.0, %v603
  %v605 = vpop.f32.mrb[0].mxu0
  %v606 = vadd.f32 0.0, %v605
  %607 = vmatprep.mubr.bf16.mxu0 0
  %608 = vmatmul.mubr.bf16.gmra.mrb[0].mxu0 %v495
  %v609 = vpop.f32.mrb[0].mxu0
  %v610 = vadd.f32 0.0, %v609
  %v611 = vpop.f32.mrb[0].mxu0
  %v612 = vadd.f32 0.0, %v611
  %v613 = vpop.f32.mrb[0].mxu0
  %v614 = vadd.f32 0.0, %v613
  %v615 = vpop.f32.mrb[0].mxu0
  %v616 = vadd.f32 0.0, %v615
  %617 = vmatprep.mubr.bf16.mxu0 0
  %618 = vmatmul.mubr.bf16.gmra.mrb[0].mxu0 %v498
  %v619 = vpop.f32.mrb[0].mxu0
  %v620 = vadd.f32 0.0, %v619
  %v621 = vpop.f32.mrb[0].mxu0
  %v622 = vadd.f32 0.0, %v621
  %v623 = vpop.f32.mrb[0].mxu0
  %v624 = vadd.f32 0.0, %v623
  %v625 = vpop.f32.mrb[0].mxu0
  %v626 = vadd.f32 0.0, %v625
  %627 = vmatprep.mubr.bf16.mxu0 0
  %628 = vmatmul.mubr.bf16.gmra.mrb[0].mxu0 %v501
  %v629 = vpop.f32.mrb[0].mxu0
  %v630 = vadd.f32 0.0, %v629
  %v631 = vpop.f32.mrb[0].mxu0
  %v632 = vadd.f32 0.0, %v631
  %v633 = vpop.f32.mrb[0].mxu0
  %v634 = vpop.f32.mrb[0].mxu0
  %635 = vdwg.mxu0
  %636 = vmatprep.subr.bf16.mxu0 %v402
  %637 = vmatpush1.bf16.msra.mxu0 %v401
  %638 = vmatprep.subr.bf16.mxu0 %v409
  %639 = vmatpush1.bf16.msra.mxu0 %v408
  %640 = vmatprep.subr.bf16.mxu0 %v416
  %641 = vmatpush1.bf16.msra.mxu0 %v415
  %642 = vmatprep.subr.bf16.mxu0 %v423
  %643 = vmatpush1.bf16.msra.mxu0 %v422
  %644 = vmatprep.subr.bf16.mxu0 %v430
  %645 = vmatpush1.bf16.msra.mxu0 %v429
  %646 = vmatprep.subr.bf16.mxu0 %v437
  %647 = vmatpush1.bf16.msra.mxu0 %v436
  %648 = vmatprep.subr.bf16.mxu0 %v444
  %649 = vmatpush1.bf16.msra.mxu0 %v443
  %650 = vmatprep.subr.bf16.mxu0 %v514
  %651 = vmatpush1.bf16.msra.mxu0 %v511
  %652 = vmatprep.subr.bf16.mxu0 0
  %653 = vmatpush1.bf16.msra.mxu0 0
  %654 = vmatprep.subr.bf16.mxu0 0
  %655 = vmatpush1.bf16.msra.mxu0 0
  %656 = vmatprep.subr.bf16.mxu0 0
  %657 = vmatpush1.bf16.msra.mxu0 0
  %658 = vmatprep.subr.bf16.mxu0 0
  %659 = vmatpush1.bf16.msra.mxu0 0
  %660 = vmatprep.subr.bf16.mxu0 0
  %661 = vmatpush1.bf16.msra.mxu0 0
  %662 = vmatprep.subr.bf16.mxu0 0
  %663 = vmatpush1.bf16.msra.mxu0 0
  %664 = vmatprep.subr.bf16.mxu0 0
  %665 = vmatpush1.bf16.msra.mxu0 0
  %666 = vmatprep.subr.bf16.mxu0 0
  %667 = vmatpush1.bf16.msra.mxu0 0
  %668 = vmatprep.mubr.bf16.mxu0 0
  %669 = vmatmul.mubr.bf16.gmra.mrb[0].mxu0 %v480
  %v670 = vpop.f32.mrb[0].mxu0
  %v671 = vadd.f32 0.0, %v670
  %v672 = vpop.f32.mrb[0].mxu0
  %v673 = vadd.f32 0.0, %v672
  %v674 = vpop.f32.mrb[0].mxu0
  %v675 = vadd.f32 0.0, %v674
  %v676 = vpop.f32.mrb[0].mxu0
  %v677 = vadd.f32 0.0, %v676
  %678 = vmatprep.mubr.bf16.mxu0 0
  %679 = vmatmul.mubr.bf16.gmra.mrb[0].mxu0 %v483
  %v680 = vpop.f32.mrb[0].mxu0
  %v681 = vadd.f32 0.0, %v680
  %v682 = vpop.f32.mrb[0].mxu0
  %v683 = vadd.f32 0.0, %v682
  %v684 = vpop.f32.mrb[0].mxu0
  %v685 = vadd.f32 0.0, %v684
  %v686 = vpop.f32.mrb[0].mxu0
  %v687 = vadd.f32 0.0, %v686
  %688 = vmatprep.mubr.bf16.mxu0 0
  %689 = vmatmul.mubr.bf16.gmra.mrb[0].mxu0 %v486
  %v690 = vpop.f32.mrb[0].mxu0
  %v691 = vadd.f32 0.0, %v690
  %v692 = vpop.f32.mrb[0].mxu0
  %v693 = vadd.f32 0.0, %v692
  %v694 = vpop.f32.mrb[0].mxu0
  %v695 = vadd.f32 0.0, %v694
  %v696 = vpop.f32.mrb[0].mxu0
  %v697 = vadd.f32 0.0, %v696
  %698 = vmatprep.mubr.bf16.mxu0 0
  %699 = vmatmul.mubr.bf16.gmra.mrb[0].mxu0 %v489
  %v700 = vpop.f32.mrb[0].mxu0
  %v701 = vadd.f32 0.0, %v700
  %v702 = vpop.f32.mrb[0].mxu0
  %v703 = vadd.f32 0.0, %v702
  %v704 = vpop.f32.mrb[0].mxu0
  %v705 = vadd.f32 0.0, %v704
  %v706 = vpop.f32.mrb[0].mxu0
  %v707 = vadd.f32 0.0, %v706
  %708 = vmatprep.mubr.bf16.mxu0 0
  %709 = vmatmul.mubr.bf16.gmra.mrb[0].mxu0 %v492
  %v710 = vpop.f32.mrb[0].mxu0
  %v711 = vadd.f32 0.0, %v710
  %v712 = vpop.f32.mrb[0].mxu0
  %v713 = vadd.f32 0.0, %v712
  %v714 = vpop.f32.mrb[0].mxu0
  %v715 = vadd.f32 0.0, %v714
  %v716 = vpop.f32.mrb[0].mxu0
  %v717 = vadd.f32 0.0, %v716
  %718 = vmatprep.mubr.bf16.mxu0 0
  %719 = vmatmul.mubr.bf16.gmra.mrb[0].mxu0 %v495
  %v720 = vpop.f32.mrb[0].mxu0
  %v721 = vadd.f32 0.0, %v720
  %v722 = vpop.f32.mrb[0].mxu0
  %v723 = vadd.f32 0.0, %v722
  %v724 = vpop.f32.mrb[0].mxu0
  %v725 = vadd.f32 0.0, %v724
  %v726 = vpop.f32.mrb[0].mxu0
  %v727 = vadd.f32 0.0, %v726
  %728 = vmatprep.mubr.bf16.mxu0 0
  %729 = vmatmul.mubr.bf16.gmra.mrb[0].mxu0 %v498
  %v730 = vpop.f32.mrb[0].mxu0
  %v731 = vadd.f32 0.0, %v730
  %v732 = vpop.f32.mrb[0].mxu0
  %v733 = vadd.f32 0.0, %v732
  %v734 = vpop.f32.mrb[0].mxu0
  %v735 = vadd.f32 0.0, %v734
  %v736 = vpop.f32.mrb[0].mxu0
  %v737 = vadd.f32 0.0, %v736
  %738 = vmatprep.mubr.bf16.mxu0 0
  %739 = vmatmul.mubr.bf16.gmra.mrb[0].mxu0 %v501
  %v740 = vpop.f32.mrb[0].mxu0
  %v741 = vadd.f32 0.0, %v740
  %v742 = vpop.f32.mrb[0].mxu0
  %v743 = vadd.f32 0.0, %v742
  %v744 = vpop.f32.mrb[0].mxu0
  %v745 = vpop.f32.mrb[0].mxu0
  %746 = vdwg.mxu0
  %747 = vmatprep.subr.bf16.mxu0 %v404
  %748 = vmatpush1.bf16.msra.mxu0 %v403
  %749 = vmatprep.subr.bf16.mxu0 %v411
  %750 = vmatpush1.bf16.msra.mxu0 %v410
  %751 = vmatprep.subr.bf16.mxu0 %v418
  %752 = vmatpush1.bf16.msra.mxu0 %v417
  %753 = vmatprep.subr.bf16.mxu0 %v425
  %754 = vmatpush1.bf16.msra.mxu0 %v424
  %755 = vmatprep.subr.bf16.mxu0 %v432
  %756 = vmatpush1.bf16.msra.mxu0 %v431
  %757 = vmatprep.subr.bf16.mxu0 %v439
  %758 = vmatpush1.bf16.msra.mxu0 %v438
  %759 = vmatprep.subr.bf16.mxu0 %v446
  %760 = vmatpush1.bf16.msra.mxu0 %v445
  %761 = vmatprep.subr.bf16.mxu0 %v520
  %762 = vmatpush1.bf16.msra.mxu0 %v517
  %763 = vmatprep.subr.bf16.mxu0 0
  %764 = vmatpush1.bf16.msra.mxu0 0
  %765 = vmatprep.subr.bf16.mxu0 0
  %766 = vmatpush1.bf16.msra.mxu0 0
  %767 = vmatprep.subr.bf16.mxu0 0
  %768 = vmatpush1.bf16.msra.mxu0 0
  %769 = vmatprep.subr.bf16.mxu0 0
  %770 = vmatpush1.bf16.msra.mxu0 0
  %771 = vmatprep.subr.bf16.mxu0 0
  %772 = vmatpush1.bf16.msra.mxu0 0
  %773 = vmatprep.subr.bf16.mxu0 0
  %774 = vmatpush1.bf16.msra.mxu0 0
  %775 = vmatprep.subr.bf16.mxu0 0
  %776 = vmatpush1.bf16.msra.mxu0 0
  %777 = vmatprep.subr.bf16.mxu0 0
  %778 = vmatpush1.bf16.msra.mxu0 0
  %779 = vmatprep.mubr.bf16.mxu0 0
  %780 = vmatmul.mubr.bf16.gmra.mrb[0].mxu0 %v480
  %v781 = vpop.f32.mrb[0].mxu0
  %v782 = vadd.f32 0.0, %v781
  %v783 = vpop.f32.mrb[0].mxu0
  %v784 = vadd.f32 0.0, %v783
  %v785 = vpop.f32.mrb[0].mxu0
  %v786 = vadd.f32 0.0, %v785
  %v787 = vpop.f32.mrb[0].mxu0
  %v788 = vadd.f32 0.0, %v787
  %789 = vmatprep.mubr.bf16.mxu0 0
  %790 = vmatmul.mubr.bf16.gmra.mrb[0].mxu0 %v483
  %v791 = vpop.f32.mrb[0].mxu0
  %v792 = vadd.f32 0.0, %v791
  %v793 = vpop.f32.mrb[0].mxu0
  %v794 = vadd.f32 0.0, %v793
  %v795 = vpop.f32.mrb[0].mxu0
  %v796 = vadd.f32 0.0, %v795
  %v797 = vpop.f32.mrb[0].mxu0
  %v798 = vadd.f32 0.0, %v797
  %799 = vmatprep.mubr.bf16.mxu0 0
  %800 = vmatmul.mubr.bf16.gmra.mrb[0].mxu0 %v486
  %v801 = vpop.f32.mrb[0].mxu0
  %v802 = vadd.f32 0.0, %v801
  %v803 = vpop.f32.mrb[0].mxu0
  %v804 = vadd.f32 0.0, %v803
  %v805 = vpop.f32.mrb[0].mxu0
  %v806 = vadd.f32 0.0, %v805
  %v807 = vpop.f32.mrb[0].mxu0
  %v808 = vadd.f32 0.0, %v807
  %809 = vmatprep.mubr.bf16.mxu0 0
  %810 = vmatmul.mubr.bf16.gmra.mrb[0].mxu0 %v489
  %v811 = vpop.f32.mrb[0].mxu0
  %v812 = vadd.f32 0.0, %v811
  %v813 = vpop.f32.mrb[0].mxu0
  %v814 = vadd.f32 0.0, %v813
  %v815 = vpop.f32.mrb[0].mxu0
  %v816 = vadd.f32 0.0, %v815
  %v817 = vpop.f32.mrb[0].mxu0
  %v818 = vadd.f32 0.0, %v817
  %819 = vmatprep.mubr.bf16.mxu0 0
  %820 = vmatmul.mubr.bf16.gmra.mrb[0].mxu0 %v492
  %v821 = vpop.f32.mrb[0].mxu0
  %v822 = vadd.f32 0.0, %v821
  %v823 = vpop.f32.mrb[0].mxu0
  %v824 = vadd.f32 0.0, %v823
  %v825 = vpop.f32.mrb[0].mxu0
  %v826 = vadd.f32 0.0, %v825
  %v827 = vpop.f32.mrb[0].mxu0
  %v828 = vadd.f32 0.0, %v827
  %829 = vmatprep.mubr.bf16.mxu0 0
  %830 = vmatmul.mubr.bf16.gmra.mrb[0].mxu0 %v495
  %v831 = vpop.f32.mrb[0].mxu0
  %v832 = vadd.f32 0.0, %v831
  %v833 = vpop.f32.mrb[0].mxu0
  %v834 = vadd.f32 0.0, %v833
  %v835 = vpop.f32.mrb[0].mxu0
  %v836 = vadd.f32 0.0, %v835
  %v837 = vpop.f32.mrb[0].mxu0
  %v838 = vadd.f32 0.0, %v837
  %839 = vmatprep.mubr.bf16.mxu0 0
  %840 = vmatmul.mubr.bf16.gmra.mrb[0].mxu0 %v498
  %v841 = vpop.f32.mrb[0].mxu0
  %v842 = vadd.f32 0.0, %v841
  %v843 = vpop.f32.mrb[0].mxu0
  %v844 = vadd.f32 0.0, %v843
  %v845 = vpop.f32.mrb[0].mxu0
  %v846 = vadd.f32 0.0, %v845
  %v847 = vpop.f32.mrb[0].mxu0
  %v848 = vadd.f32 0.0, %v847
  %849 = vmatprep.mubr.bf16.mxu0 0
  %850 = vmatmul.mubr.bf16.gmra.mrb[0].mxu0 %v501
  %v851 = vpop.f32.mrb[0].mxu0
  %v852 = vadd.f32 0.0, %v851
  %v853 = vpop.f32.mrb[0].mxu0
  %v854 = vadd.f32 0.0, %v853
  %v855 = vpop.f32.mrb[0].mxu0
  %v856 = vpop.f32.mrb[0].mxu0
  %857 = vdwg.mxu0
  %858 = vmatprep.subr.bf16.mxu0 0
  %859 = vmatpush1.bf16.msra.mxu0 %v405
  %860 = vmatprep.subr.bf16.mxu0 0
  %861 = vmatpush1.bf16.msra.mxu0 %v412
  %862 = vmatprep.subr.bf16.mxu0 0
  %863 = vmatpush1.bf16.msra.mxu0 %v419
  %864 = vmatprep.subr.bf16.mxu0 0
  %865 = vmatpush1.bf16.msra.mxu0 %v426
  %866 = vmatprep.subr.bf16.mxu0 0
  %867 = vmatpush1.bf16.msra.mxu0 %v433
  %868 = vmatprep.subr.bf16.mxu0 0
  %869 = vmatpush1.bf16.msra.mxu0 %v440
  %870 = vmatprep.subr.bf16.mxu0 0
  %871 = vmatpush1.bf16.msra.mxu0 %v447
  %872 = vmatprep.subr.bf16.mxu0 0
  %873 = vmatpush1.bf16.msra.mxu0 %v523
  %874 = vmatprep.subr.bf16.mxu0 0
  %875 = vmatpush1.bf16.msra.mxu0 0
  %876 = vmatprep.subr.bf16.mxu0 0
  %877 = vmatpush1.bf16.msra.mxu0 0
  %878 = vmatprep.subr.bf16.mxu0 0
  %879 = vmatpush1.bf16.msra.mxu0 0
  %880 = vmatprep.subr.bf16.mxu0 0
  %881 = vmatpush1.bf16.msra.mxu0 0
  %882 = vmatprep.subr.bf16.mxu0 0
  %883 = vmatpush1.bf16.msra.mxu0 0
  %884 = vmatprep.subr.bf16.mxu0 0
  %885 = vmatpush1.bf16.msra.mxu0 0
  %886 = vmatprep.subr.bf16.mxu0 0
  %887 = vmatpush1.bf16.msra.mxu0 0
  %888 = vmatprep.subr.bf16.mxu0 0
  %889 = vmatpush1.bf16.msra.mxu0 0
  %890 = vmatprep.mubr.bf16.mxu0 0
  %891 = vmatmul.mubr.bf16.gmra.mrb[0].mxu0 %v480
  %v892 = vpop.f32.mrb[0].mxu0
  %v893 = vadd.f32 0.0, %v892
  %v894 = vpop.f32.mrb[0].mxu0
  %v895 = vpop.f32.mrb[0].mxu0
  %v896 = vadd.f32 0.0, %v895
  %v897 = vpop.f32.mrb[0].mxu0
  %898 = vmatprep.mubr.bf16.mxu0 0
  %899 = vmatmul.mubr.bf16.gmra.mrb[0].mxu0 %v483
  %v900 = vpop.f32.mrb[0].mxu0
  %v901 = vadd.f32 0.0, %v900
  %v902 = vpop.f32.mrb[0].mxu0
  %v903 = vpop.f32.mrb[0].mxu0
  %v904 = vadd.f32 0.0, %v903
  %v905 = vpop.f32.mrb[0].mxu0
  %906 = vmatprep.mubr.bf16.mxu0 0
  %907 = vmatmul.mubr.bf16.gmra.mrb[0].mxu0 %v486
  %v908 = vpop.f32.mrb[0].mxu0
  %v909 = vadd.f32 0.0, %v908
  %v910 = vpop.f32.mrb[0].mxu0
  %v911 = vpop.f32.mrb[0].mxu0
  %v912 = vadd.f32 0.0, %v911
  %v913 = vpop.f32.mrb[0].mxu0
  %914 = vmatprep.mubr.bf16.mxu0 0
  %915 = vmatmul.mubr.bf16.gmra.mrb[0].mxu0 %v489
  %v916 = vpop.f32.mrb[0].mxu0
  %v917 = vadd.f32 0.0, %v916
  %v918 = vpop.f32.mrb[0].mxu0
  %v919 = vpop.f32.mrb[0].mxu0
  %v920 = vadd.f32 0.0, %v919
  %v921 = vpop.f32.mrb[0].mxu0
  %922 = vmatprep.mubr.bf16.mxu0 0
  %923 = vmatmul.mubr.bf16.gmra.mrb[0].mxu0 %v492
  %v924 = vpop.f32.mrb[0].mxu0
  %v925 = vadd.f32 0.0, %v924
  %v926 = vpop.f32.mrb[0].mxu0
  %v927 = vpop.f32.mrb[0].mxu0
  %v928 = vadd.f32 0.0, %v927
  %v929 = vpop.f32.mrb[0].mxu0
  %930 = vmatprep.mubr.bf16.mxu0 0
  %931 = vmatmul.mubr.bf16.gmra.mrb[0].mxu0 %v495
  %v932 = vpop.f32.mrb[0].mxu0
  %v933 = vadd.f32 0.0, %v932
  %v934 = vpop.f32.mrb[0].mxu0
  %v935 = vpop.f32.mrb[0].mxu0
  %v936 = vadd.f32 0.0, %v935
  %v937 = vpop.f32.mrb[0].mxu0
  %938 = vmatprep.mubr.bf16.mxu0 0
  %939 = vmatmul.mubr.bf16.gmra.mrb[0].mxu0 %v498
  %v940 = vpop.f32.mrb[0].mxu0
  %v941 = vadd.f32 0.0, %v940
  %v942 = vpop.f32.mrb[0].mxu0
  %v943 = vpop.f32.mrb[0].mxu0
  %v944 = vadd.f32 0.0, %v943
  %v945 = vpop.f32.mrb[0].mxu0
  %946 = vmatprep.mubr.bf16.mxu0 0
  %947 = vmatmul.mubr.bf16.gmra.mrb[0].mxu0 %v501
  %v948 = vpop.f32.mrb[0].mxu0
  %v949 = vadd.f32 0.0, %v948
  %v950 = vpop.f32.mrb[0].mxu0
  %v951 = vpop.f32.mrb[0].mxu0
  %v952 = vpop.f32.mrb[0].mxu0
  %953 = vdwg.mxu0
  %vm954 = vcmask 130048
  %v956 = vsel %vm954, %v893, 0
  %v959 = vsel %vm954, %v896, 0
  %v962 = vsel %vm954, %v901, 0
  %v965 = vsel %vm954, %v904, 0
  %v968 = vsel %vm954, %v909, 0
  %v971 = vsel %vm954, %v912, 0
  %v974 = vsel %vm954, %v917, 0
  %v977 = vsel %vm954, %v920, 0
  %v980 = vsel %vm954, %v925, 0
  %v983 = vsel %vm954, %v928, 0
  %v986 = vsel %vm954, %v933, 0
  %v989 = vsel %vm954, %v936, 0
  %v992 = vsel %vm954, %v941, 0
  %v995 = vsel %vm954, %v944, 0
  %v998 = vsel %vm954, %v949, 0
  %1000 = vmatprep.subr.mxu0 0.0
  %1001 = vmatpush1.msra.mxu0 0.0012755102
  %1002 = vmatprep.subr.mxu0 0.0
  %1003 = vmatpush1.msra.mxu0 0.0012755102
  %1004 = vmatprep.subr.mxu0 0.0
  %1005 = vmatpush1.msra.mxu0 0.0012755102
  %1006 = vmatprep.subr.mxu0 0.0
  %1007 = vmatpush1.msra.mxu0 0.0012755102
  %1008 = vmatprep.subr.mxu0 0.0
  %1009 = vmatpush1.msra.mxu0 0.0012755102
  %1010 = vmatprep.subr.mxu0 0.0
  %1011 = vmatpush1.msra.mxu0 0.0012755102
  %1012 = vmatprep.subr.mxu0 0.0
  %1013 = vmatpush1.msra.mxu0 0.0012755102
  %1014 = vmatprep.subr.mxu0 0.0
  %1015 = vmatpush1.msra.mxu0 0.0012755102
  %1016 = vmatprep.subr.mxu0 0.0
  %1017 = vmatpush1.msra.mxu0 0.0012755102
  %1018 = vmatprep.subr.mxu0 0.0
  %1019 = vmatpush1.msra.mxu0 0.0012755102
  %1020 = vmatprep.subr.mxu0 0.0
  %1021 = vmatpush1.msra.mxu0 0.0012755102
  %1022 = vmatprep.subr.mxu0 0.0
  %1023 = vmatpush1.msra.mxu0 0.0012755102
  %1024 = vmatprep.subr.mxu0 0.0
  %1025 = vmatpush1.msra.mxu0 0.0012755102
  %1026 = vmatprep.subr.mxu0 0.0
  %1027 = vmatpush1.msra.mxu0 0.0012755102
  %1028 = vmatprep.subr.mxu0 0.0
  %1029 = vmatpush1.msra.mxu0 0.0012755102
  %1030 = vmatprep.subr.mxu0 0.0
  %1031 = vmatpush1.msra.mxu0 0.0012755102
  %1032 = vmatprep.subr.mxu0 0.0
  %1033 = vmatpush1.msra.mxu0 0.0012755102
  %1034 = vmatprep.subr.mxu0 0.0
  %1035 = vmatpush1.msra.mxu0 0.0012755102
  %1036 = vmatprep.subr.mxu0 0.0
  %1037 = vmatpush1.msra.mxu0 0.0012755102
  %1038 = vmatprep.subr.mxu0 0.0
  %1039 = vmatpush1.msra.mxu0 0.0012755102
  %1040 = vmatprep.subr.mxu0 0.0
  %1041 = vmatpush1.msra.mxu0 0.0012755102
  %1042 = vmatprep.subr.mxu0 0.0
  %1043 = vmatpush1.msra.mxu0 0.0012755102
  %1044 = vmatprep.subr.mxu0 0.0
  %1045 = vmatpush1.msra.mxu0 0.0012755102
  %1046 = vmatprep.subr.mxu0 0.0
  %1047 = vmatpush1.msra.mxu0 0.0012755102
  %1048 = vmatprep.subr.mxu0 0.0
  %1049 = vmatpush1.msra.mxu0 0.0012755102
  %1050 = vmatprep.subr.mxu0 0.0
  %1051 = vmatpush1.msra.mxu0 0.0012755102
  %1052 = vmatprep.subr.mxu0 0.0
  %1053 = vmatpush1.msra.mxu0 0.0012755102
  %1054 = vmatprep.subr.mxu0 0.0
  %1055 = vmatpush1.msra.mxu0 0.0012755102
  %1056 = vmatprep.subr.mxu0 0.0
  %1057 = vmatpush1.msra.mxu0 0.0012755102
  %1058 = vmatprep.subr.mxu0 0.0
  %1059 = vmatpush1.msra.mxu0 0.0012755102
  %1060 = vmatprep.subr.mxu0 0.0
  %1061 = vmatpush1.msra.mxu0 0.0012755102
  %1062 = vmatprep.subr.mxu0 0.0
  %1063 = vmatpush1.msra.mxu0 0.0012755102
  %1064 = vmatprep.mubr.f32.mxu0 %v562
  %1065 = vmatmul.mubr.f32.gmra.mrb[0].mxu0 %v560
  %v1066 = vpop.f32.mrb[0].mxu0
  %v1067 = vadd.f32 0.0, %v1066
  %v1068 = vpop.f32.mrb[0].mxu0
  %1069 = vmatprep.mubr.f32.mxu0 %v566
  %1070 = vmatmul.mubr.f32.gmra.mrb[0].mxu0 %v564
  %v1071 = vpop.f32.mrb[0].mxu0
  %v1072 = vadd.f32 0.0, %v1071
  %v1073 = vpop.f32.mrb[0].mxu0
  %1074 = vmatprep.mubr.f32.mxu0 %v572
  %1075 = vmatmul.mubr.f32.gmra.mrb[0].mxu0 %v570
  %v1076 = vpop.f32.mrb[0].mxu0
  %v1077 = vadd.f32 0.0, %v1076
  %v1078 = vpop.f32.mrb[0].mxu0
  %1079 = vmatprep.mubr.f32.mxu0 %v576
  %1080 = vmatmul.mubr.f32.gmra.mrb[0].mxu0 %v574
  %v1081 = vpop.f32.mrb[0].mxu0
  %v1082 = vadd.f32 0.0, %v1081
  %v1083 = vpop.f32.mrb[0].mxu0
  %1084 = vmatprep.mubr.f32.mxu0 %v582
  %1085 = vmatmul.mubr.f32.gmra.mrb[0].mxu0 %v580
  %v1086 = vpop.f32.mrb[0].mxu0
  %v1087 = vadd.f32 0.0, %v1086
  %v1088 = vpop.f32.mrb[0].mxu0
  %1089 = vmatprep.mubr.f32.mxu0 %v586
  %1090 = vmatmul.mubr.f32.gmra.mrb[0].mxu0 %v584
  %v1091 = vpop.f32.mrb[0].mxu0
  %v1092 = vadd.f32 0.0, %v1091
  %v1093 = vpop.f32.mrb[0].mxu0
  %1094 = vmatprep.mubr.f32.mxu0 %v592
  %1095 = vmatmul.mubr.f32.gmra.mrb[0].mxu0 %v590
  %v1096 = vpop.f32.mrb[0].mxu0
  %v1097 = vadd.f32 0.0, %v1096
  %v1098 = vpop.f32.mrb[0].mxu0
  %1099 = vmatprep.mubr.f32.mxu0 %v596
  %1100 = vmatmul.mubr.f32.gmra.mrb[0].mxu0 %v594
  %v1101 = vpop.f32.mrb[0].mxu0
  %v1102 = vadd.f32 0.0, %v1101
  %v1103 = vpop.f32.mrb[0].mxu0
  %1104 = vmatprep.mubr.f32.mxu0 %v602
  %1105 = vmatmul.mubr.f32.gmra.mrb[0].mxu0 %v600
  %v1106 = vpop.f32.mrb[0].mxu0
  %v1107 = vadd.f32 0.0, %v1106
  %v1108 = vpop.f32.mrb[0].mxu0
  %1109 = vmatprep.mubr.f32.mxu0 %v606
  %1110 = vmatmul.mubr.f32.gmra.mrb[0].mxu0 %v604
  %v1111 = vpop.f32.mrb[0].mxu0
  %v1112 = vadd.f32 0.0, %v1111
  %v1113 = vpop.f32.mrb[0].mxu0
  %1114 = vmatprep.mubr.f32.mxu0 %v612
  %1115 = vmatmul.mubr.f32.gmra.mrb[0].mxu0 %v610
  %v1116 = vpop.f32.mrb[0].mxu0
  %v1117 = vadd.f32 0.0, %v1116
  %v1118 = vpop.f32.mrb[0].mxu0
  %1119 = vmatprep.mubr.f32.mxu0 %v616
  %1120 = vmatmul.mubr.f32.gmra.mrb[0].mxu0 %v614
  %v1121 = vpop.f32.mrb[0].mxu0
  %v1122 = vadd.f32 0.0, %v1121
  %v1123 = vpop.f32.mrb[0].mxu0
  %1124 = vmatprep.mubr.f32.mxu0 %v622
  %1125 = vmatmul.mubr.f32.gmra.mrb[0].mxu0 %v620
  %v1126 = vpop.f32.mrb[0].mxu0
  %v1127 = vadd.f32 0.0, %v1126
  %v1128 = vpop.f32.mrb[0].mxu0
  %1129 = vmatprep.mubr.f32.mxu0 %v626
  %1130 = vmatmul.mubr.f32.gmra.mrb[0].mxu0 %v624
  %v1131 = vpop.f32.mrb[0].mxu0
  %v1132 = vadd.f32 0.0, %v1131
  %v1133 = vpop.f32.mrb[0].mxu0
  %1134 = vmatprep.mubr.f32.mxu0 %v632
  %1135 = vmatmul.mubr.f32.gmra.mrb[0].mxu0 %v630
  %v1136 = vpop.f32.mrb[0].mxu0
  %v1137 = vadd.f32 0.0, %v1136
  %v1138 = vpop.f32.mrb[0].mxu0
  %1139 = vdwg.mxu0
  %1140 = vmatprep.subr.mxu0 0.0
  %1141 = vmatpush1.msra.mxu0 0.0012755102
  %1142 = vmatprep.subr.mxu0 0.0
  %1143 = vmatpush1.msra.mxu0 0.0012755102
  %1144 = vmatprep.subr.mxu0 0.0
  %1145 = vmatpush1.msra.mxu0 0.0012755102
  %1146 = vmatprep.subr.mxu0 0.0
  %1147 = vmatpush1.msra.mxu0 0.0012755102
  %1148 = vmatprep.subr.mxu0 0.0
  %1149 = vmatpush1.msra.mxu0 0.0012755102
  %1150 = vmatprep.subr.mxu0 0.0
  %1151 = vmatpush1.msra.mxu0 0.0012755102
  %1152 = vmatprep.subr.mxu0 0.0
  %1153 = vmatpush1.msra.mxu0 0.0012755102
  %1154 = vmatprep.subr.mxu0 0.0
  %1155 = vmatpush1.msra.mxu0 0.0012755102
  %1156 = vmatprep.subr.mxu0 0.0
  %1157 = vmatpush1.msra.mxu0 0.0012755102
  %1158 = vmatprep.subr.mxu0 0.0
  %1159 = vmatpush1.msra.mxu0 0.0012755102
  %1160 = vmatprep.subr.mxu0 0.0
  %1161 = vmatpush1.msra.mxu0 0.0012755102
  %1162 = vmatprep.subr.mxu0 0.0
  %1163 = vmatpush1.msra.mxu0 0.0012755102
  %1164 = vmatprep.subr.mxu0 0.0
  %1165 = vmatpush1.msra.mxu0 0.0012755102
  %1166 = vmatprep.subr.mxu0 0.0
  %1167 = vmatpush1.msra.mxu0 0.0012755102
  %1168 = vmatprep.subr.mxu0 0.0
  %1169 = vmatpush1.msra.mxu0 0.0012755102
  %1170 = vmatprep.subr.mxu0 0.0
  %1171 = vmatpush1.msra.mxu0 0.0012755102
  %1172 = vmatprep.subr.mxu0 0.0
  %1173 = vmatpush1.msra.mxu0 0.0012755102
  %1174 = vmatprep.subr.mxu0 0.0
  %1175 = vmatpush1.msra.mxu0 0.0012755102
  %1176 = vmatprep.subr.mxu0 0.0
  %1177 = vmatpush1.msra.mxu0 0.0012755102
  %1178 = vmatprep.subr.mxu0 0.0
  %1179 = vmatpush1.msra.mxu0 0.0012755102
  %1180 = vmatprep.subr.mxu0 0.0
  %1181 = vmatpush1.msra.mxu0 0.0012755102
  %1182 = vmatprep.subr.mxu0 0.0
  %1183 = vmatpush1.msra.mxu0 0.0012755102
  %1184 = vmatprep.subr.mxu0 0.0
  %1185 = vmatpush1.msra.mxu0 0.0012755102
  %1186 = vmatprep.subr.mxu0 0.0
  %1187 = vmatpush1.msra.mxu0 0.0012755102
  %1188 = vmatprep.subr.mxu0 0.0
  %1189 = vmatpush1.msra.mxu0 0.0012755102
  %1190 = vmatprep.subr.mxu0 0.0
  %1191 = vmatpush1.msra.mxu0 0.0012755102
  %1192 = vmatprep.subr.mxu0 0.0
  %1193 = vmatpush1.msra.mxu0 0.0012755102
  %1194 = vmatprep.subr.mxu0 0.0
  %1195 = vmatpush1.msra.mxu0 0.0012755102
  %1196 = vmatprep.subr.mxu0 0.0
  %1197 = vmatpush1.msra.mxu0 0.0012755102
  %1198 = vmatprep.subr.mxu0 0.0
  %1199 = vmatpush1.msra.mxu0 0.0012755102
  %1200 = vmatprep.subr.mxu0 0.0
  %1201 = vmatpush1.msra.mxu0 0.0012755102
  %1202 = vmatprep.subr.mxu0 0.0
  %1203 = vmatpush1.msra.mxu0 0.0012755102
  %1204 = vmatprep.mubr.f32.mxu0 %v673
  %1205 = vmatmul.mubr.f32.gmra.mrb[0].mxu0 %v671
  %v1206 = vpop.f32.mrb[0].mxu0
  %v1207 = vadd.f32 %v1067, %v1206
  %v1208 = vpop.f32.mrb[0].mxu0
  %1209 = vmatprep.mubr.f32.mxu0 %v677
  %1210 = vmatmul.mubr.f32.gmra.mrb[0].mxu0 %v675
  %v1211 = vpop.f32.mrb[0].mxu0
  %v1212 = vadd.f32 %v1072, %v1211
  %v1213 = vpop.f32.mrb[0].mxu0
  %1214 = vmatprep.mubr.f32.mxu0 %v683
  %1215 = vmatmul.mubr.f32.gmra.mrb[0].mxu0 %v681
  %v1216 = vpop.f32.mrb[0].mxu0
  %v1217 = vadd.f32 %v1077, %v1216
  %v1218 = vpop.f32.mrb[0].mxu0
  %1219 = vmatprep.mubr.f32.mxu0 %v687
  %1220 = vmatmul.mubr.f32.gmra.mrb[0].mxu0 %v685
  %v1221 = vpop.f32.mrb[0].mxu0
  %v1222 = vadd.f32 %v1082, %v1221
  %v1223 = vpop.f32.mrb[0].mxu0
  %1224 = vmatprep.mubr.f32.mxu0 %v693
  %1225 = vmatmul.mubr.f32.gmra.mrb[0].mxu0 %v691
  %v1226 = vpop.f32.mrb[0].mxu0
  %v1227 = vadd.f32 %v1087, %v1226
  %v1228 = vpop.f32.mrb[0].mxu0
  %1229 = vmatprep.mubr.f32.mxu0 %v697
  %1230 = vmatmul.mubr.f32.gmra.mrb[0].mxu0 %v695
  %v1231 = vpop.f32.mrb[0].mxu0
  %v1232 = vadd.f32 %v1092, %v1231
  %v1233 = vpop.f32.mrb[0].mxu0
  %1234 = vmatprep.mubr.f32.mxu0 %v703
  %1235 = vmatmul.mubr.f32.gmra.mrb[0].mxu0 %v701
  %v1236 = vpop.f32.mrb[0].mxu0
  %v1237 = vadd.f32 %v1097, %v1236
  %v1238 = vpop.f32.mrb[0].mxu0
  %1239 = vmatprep.mubr.f32.mxu0 %v707
  %1240 = vmatmul.mubr.f32.gmra.mrb[0].mxu0 %v705
  %v1241 = vpop.f32.mrb[0].mxu0
  %v1242 = vadd.f32 %v1102, %v1241
  %v1243 = vpop.f32.mrb[0].mxu0
  %1244 = vmatprep.mubr.f32.mxu0 %v713
  %1245 = vmatmul.mubr.f32.gmra.mrb[0].mxu0 %v711
  %v1246 = vpop.f32.mrb[0].mxu0
  %v1247 = vadd.f32 %v1107, %v1246
  %v1248 = vpop.f32.mrb[0].mxu0
  %1249 = vmatprep.mubr.f32.mxu0 %v717
  %1250 = vmatmul.mubr.f32.gmra.mrb[0].mxu0 %v715
  %v1251 = vpop.f32.mrb[0].mxu0
  %v1252 = vadd.f32 %v1112, %v1251
  %v1253 = vpop.f32.mrb[0].mxu0
  %1254 = vmatprep.mubr.f32.mxu0 %v723
  %1255 = vmatmul.mubr.f32.gmra.mrb[0].mxu0 %v721
  %v1256 = vpop.f32.mrb[0].mxu0
  %v1257 = vadd.f32 %v1117, %v1256
  %v1258 = vpop.f32.mrb[0].mxu0
  %1259 = vmatprep.mubr.f32.mxu0 %v727
  %1260 = vmatmul.mubr.f32.gmra.mrb[0].mxu0 %v725
  %v1261 = vpop.f32.mrb[0].mxu0
  %v1262 = vadd.f32 %v1122, %v1261
  %v1263 = vpop.f32.mrb[0].mxu0
  %1264 = vmatprep.mubr.f32.mxu0 %v733
  %1265 = vmatmul.mubr.f32.gmra.mrb[0].mxu0 %v731
  %v1266 = vpop.f32.mrb[0].mxu0
  %v1267 = vadd.f32 %v1127, %v1266
  %v1268 = vpop.f32.mrb[0].mxu0
  %1269 = vmatprep.mubr.f32.mxu0 %v737
  %1270 = vmatmul.mubr.f32.gmra.mrb[0].mxu0 %v735
  %v1271 = vpop.f32.mrb[0].mxu0
  %v1272 = vadd.f32 %v1132, %v1271
  %v1273 = vpop.f32.mrb[0].mxu0
  %1274 = vmatprep.mubr.f32.mxu0 %v743
  %1275 = vmatmul.mubr.f32.gmra.mrb[0].mxu0 %v741
  %v1276 = vpop.f32.mrb[0].mxu0
  %v1277 = vadd.f32 %v1137, %v1276
  %v1278 = vpop.f32.mrb[0].mxu0
  %1279 = vdwg.mxu0
  %1280 = vmatprep.subr.mxu0 0.0
  %1281 = vmatpush1.msra.mxu0 0.0012755102
  %1282 = vmatprep.subr.mxu0 0.0
  %1283 = vmatpush1.msra.mxu0 0.0012755102
  %1284 = vmatprep.subr.mxu0 0.0
  %1285 = vmatpush1.msra.mxu0 0.0012755102
  %1286 = vmatprep.subr.mxu0 0.0
  %1287 = vmatpush1.msra.mxu0 0.0012755102
  %1288 = vmatprep.subr.mxu0 0.0
  %1289 = vmatpush1.msra.mxu0 0.0012755102
  %1290 = vmatprep.subr.mxu0 0.0
  %1291 = vmatpush1.msra.mxu0 0.0012755102
  %1292 = vmatprep.subr.mxu0 0.0
  %1293 = vmatpush1.msra.mxu0 0.0012755102
  %1294 = vmatprep.subr.mxu0 0.0
  %1295 = vmatpush1.msra.mxu0 0.0012755102
  %1296 = vmatprep.subr.mxu0 0.0
  %1297 = vmatpush1.msra.mxu0 0.0012755102
  %1298 = vmatprep.subr.mxu0 0.0
  %1299 = vmatpush1.msra.mxu0 0.0012755102
  %1300 = vmatprep.subr.mxu0 0.0
  %1301 = vmatpush1.msra.mxu0 0.0012755102
  %1302 = vmatprep.subr.mxu0 0.0
  %1303 = vmatpush1.msra.mxu0 0.0012755102
  %1304 = vmatprep.subr.mxu0 0.0
  %1305 = vmatpush1.msra.mxu0 0.0012755102
  %1306 = vmatprep.subr.mxu0 0.0
  %1307 = vmatpush1.msra.mxu0 0.0012755102
  %1308 = vmatprep.subr.mxu0 0.0
  %1309 = vmatpush1.msra.mxu0 0.0012755102
  %1310 = vmatprep.subr.mxu0 0.0
  %1311 = vmatpush1.msra.mxu0 0.0012755102
  %1312 = vmatprep.subr.mxu0 0.0
  %1313 = vmatpush1.msra.mxu0 0.0012755102
  %1314 = vmatprep.subr.mxu0 0.0
  %1315 = vmatpush1.msra.mxu0 0.0012755102
  %1316 = vmatprep.subr.mxu0 0.0
  %1317 = vmatpush1.msra.mxu0 0.0012755102
  %1318 = vmatprep.subr.mxu0 0.0
  %1319 = vmatpush1.msra.mxu0 0.0012755102
  %1320 = vmatprep.subr.mxu0 0.0
  %1321 = vmatpush1.msra.mxu0 0.0012755102
  %1322 = vmatprep.subr.mxu0 0.0
  %1323 = vmatpush1.msra.mxu0 0.0012755102
  %1324 = vmatprep.subr.mxu0 0.0
  %1325 = vmatpush1.msra.mxu0 0.0012755102
  %1326 = vmatprep.subr.mxu0 0.0
  %1327 = vmatpush1.msra.mxu0 0.0012755102
  %1328 = vmatprep.subr.mxu0 0.0
  %1329 = vmatpush1.msra.mxu0 0.0012755102
  %1330 = vmatprep.subr.mxu0 0.0
  %1331 = vmatpush1.msra.mxu0 0.0012755102
  %1332 = vmatprep.subr.mxu0 0.0
  %1333 = vmatpush1.msra.mxu0 0.0012755102
  %1334 = vmatprep.subr.mxu0 0.0
  %1335 = vmatpush1.msra.mxu0 0.0012755102
  %1336 = vmatprep.subr.mxu0 0.0
  %1337 = vmatpush1.msra.mxu0 0.0012755102
  %1338 = vmatprep.subr.mxu0 0.0
  %1339 = vmatpush1.msra.mxu0 0.0012755102
  %1340 = vmatprep.subr.mxu0 0.0
  %1341 = vmatpush1.msra.mxu0 0.0012755102
  %1342 = vmatprep.subr.mxu0 0.0
  %1343 = vmatpush1.msra.mxu0 0.0012755102
  %1344 = vmatprep.mubr.f32.mxu0 %v784
  %1345 = vmatmul.mubr.f32.gmra.mrb[0].mxu0 %v782
  %v1346 = vpop.f32.mrb[0].mxu0
  %v1347 = vadd.f32 %v1207, %v1346
  %v1348 = vpop.f32.mrb[0].mxu0
  %1349 = vmatprep.mubr.f32.mxu0 %v788
  %1350 = vmatmul.mubr.f32.gmra.mrb[0].mxu0 %v786
  %v1351 = vpop.f32.mrb[0].mxu0
  %v1352 = vadd.f32 %v1212, %v1351
  %v1353 = vpop.f32.mrb[0].mxu0
  %1354 = vmatprep.mubr.f32.mxu0 %v794
  %1355 = vmatmul.mubr.f32.gmra.mrb[0].mxu0 %v792
  %v1356 = vpop.f32.mrb[0].mxu0
  %v1357 = vadd.f32 %v1217, %v1356
  %v1358 = vpop.f32.mrb[0].mxu0
  %1359 = vmatprep.mubr.f32.mxu0 %v798
  %1360 = vmatmul.mubr.f32.gmra.mrb[0].mxu0 %v796
  %v1361 = vpop.f32.mrb[0].mxu0
  %v1362 = vadd.f32 %v1222, %v1361
  %v1363 = vpop.f32.mrb[0].mxu0
  %1364 = vmatprep.mubr.f32.mxu0 %v804
  %1365 = vmatmul.mubr.f32.gmra.mrb[0].mxu0 %v802
  %v1366 = vpop.f32.mrb[0].mxu0
  %v1367 = vadd.f32 %v1227, %v1366
  %v1368 = vpop.f32.mrb[0].mxu0
  %1369 = vmatprep.mubr.f32.mxu0 %v808
  %1370 = vmatmul.mubr.f32.gmra.mrb[0].mxu0 %v806
  %v1371 = vpop.f32.mrb[0].mxu0
  %v1372 = vadd.f32 %v1232, %v1371
  %v1373 = vpop.f32.mrb[0].mxu0
  %1374 = vmatprep.mubr.f32.mxu0 %v814
  %1375 = vmatmul.mubr.f32.gmra.mrb[0].mxu0 %v812
  %v1376 = vpop.f32.mrb[0].mxu0
  %v1377 = vadd.f32 %v1237, %v1376
  %v1378 = vpop.f32.mrb[0].mxu0
  %1379 = vmatprep.mubr.f32.mxu0 %v818
  %1380 = vmatmul.mubr.f32.gmra.mrb[0].mxu0 %v816
  %v1381 = vpop.f32.mrb[0].mxu0
  %v1382 = vadd.f32 %v1242, %v1381
  %v1383 = vpop.f32.mrb[0].mxu0
  %1384 = vmatprep.mubr.f32.mxu0 %v824
  %1385 = vmatmul.mubr.f32.gmra.mrb[0].mxu0 %v822
  %v1386 = vpop.f32.mrb[0].mxu0
  %v1387 = vadd.f32 %v1247, %v1386
  %v1388 = vpop.f32.mrb[0].mxu0
  %1389 = vmatprep.mubr.f32.mxu0 %v828
  %1390 = vmatmul.mubr.f32.gmra.mrb[0].mxu0 %v826
  %v1391 = vpop.f32.mrb[0].mxu0
  %v1392 = vadd.f32 %v1252, %v1391
  %v1393 = vpop.f32.mrb[0].mxu0
  %1394 = vmatprep.mubr.f32.mxu0 %v834
  %1395 = vmatmul.mubr.f32.gmra.mrb[0].mxu0 %v832
  %v1396 = vpop.f32.mrb[0].mxu0
  %v1397 = vadd.f32 %v1257, %v1396
  %v1398 = vpop.f32.mrb[0].mxu0
  %1399 = vmatprep.mubr.f32.mxu0 %v838
  %1400 = vmatmul.mubr.f32.gmra.mrb[0].mxu0 %v836
  %v1401 = vpop.f32.mrb[0].mxu0
  %v1402 = vadd.f32 %v1262, %v1401
  %v1403 = vpop.f32.mrb[0].mxu0
  %1404 = vmatprep.mubr.f32.mxu0 %v844
  %1405 = vmatmul.mubr.f32.gmra.mrb[0].mxu0 %v842
  %v1406 = vpop.f32.mrb[0].mxu0
  %v1407 = vadd.f32 %v1267, %v1406
  %v1408 = vpop.f32.mrb[0].mxu0
  %1409 = vmatprep.mubr.f32.mxu0 %v848
  %1410 = vmatmul.mubr.f32.gmra.mrb[0].mxu0 %v846
  %v1411 = vpop.f32.mrb[0].mxu0
  %v1412 = vadd.f32 %v1272, %v1411
  %v1413 = vpop.f32.mrb[0].mxu0
  %1414 = vmatprep.mubr.f32.mxu0 %v854
  %1415 = vmatmul.mubr.f32.gmra.mrb[0].mxu0 %v852
  %v1416 = vpop.f32.mrb[0].mxu0
  %v1417 = vadd.f32 %v1277, %v1416
  %v1418 = vpop.f32.mrb[0].mxu0
  %1419 = vdwg.mxu0
  %1420 = vmatprep.subr.mxu0 0.0
  %1421 = vmatpush1.msra.mxu0 0.0012755102
  %1422 = vmatprep.subr.mxu0 0.0
  %1423 = vmatpush1.msra.mxu0 0.0012755102
  %1424 = vmatprep.subr.mxu0 0.0
  %1425 = vmatpush1.msra.mxu0 0.0
  %1426 = vmatprep.subr.mxu0 0.0
  %1427 = vmatpush1.msra.mxu0 0.0
  %1428 = vmatprep.subr.mxu0 0.0
  %1429 = vmatpush1.msra.mxu0 0.0
  %1430 = vmatprep.subr.mxu0 0.0
  %1431 = vmatpush1.msra.mxu0 0.0
  %1432 = vmatprep.subr.mxu0 0.0
  %1433 = vmatpush1.msra.mxu0 0.0
  %1434 = vmatprep.subr.mxu0 0.0
  %1435 = vmatpush1.msra.mxu0 0.0
  %1436 = vmatprep.subr.mxu0 0.0
  %1437 = vmatpush1.msra.mxu0 0.0
  %1438 = vmatprep.subr.mxu0 0.0
  %1439 = vmatpush1.msra.mxu0 0.0
  %1440 = vmatprep.subr.mxu0 0.0
  %1441 = vmatpush1.msra.mxu0 0.0
  %1442 = vmatprep.subr.mxu0 0.0
  %1443 = vmatpush1.msra.mxu0 0.0
  %1444 = vmatprep.subr.mxu0 0.0
  %1445 = vmatpush1.msra.mxu0 0.0
  %1446 = vmatprep.subr.mxu0 0.0
  %1447 = vmatpush1.msra.mxu0 0.0
  %1448 = vmatprep.subr.mxu0 0.0
  %1449 = vmatpush1.msra.mxu0 0.0
  %1450 = vmatprep.subr.mxu0 0.0
  %1451 = vmatpush1.msra.mxu0 0.0
  %1452 = vmatprep.subr.mxu0 0.0
  %1453 = vmatpush1.msra.mxu0 0.0
  %1454 = vmatprep.subr.mxu0 0.0
  %1455 = vmatpush1.msra.mxu0 0.0
  %1456 = vmatprep.subr.mxu0 0.0
  %1457 = vmatpush1.msra.mxu0 0.0
  %1458 = vmatprep.subr.mxu0 0.0
  %1459 = vmatpush1.msra.mxu0 0.0
  %1460 = vmatprep.subr.mxu0 0.0
  %1461 = vmatpush1.msra.mxu0 0.0
  %1462 = vmatprep.subr.mxu0 0.0
  %1463 = vmatpush1.msra.mxu0 0.0
  %1464 = vmatprep.subr.mxu0 0.0
  %1465 = vmatpush1.msra.mxu0 0.0
  %1466 = vmatprep.subr.mxu0 0.0
  %1467 = vmatpush1.msra.mxu0 0.0
  %1468 = vmatprep.subr.mxu0 0.0
  %1469 = vmatpush1.msra.mxu0 0.0
  %1470 = vmatprep.subr.mxu0 0.0
  %1471 = vmatpush1.msra.mxu0 0.0
  %1472 = vmatprep.subr.mxu0 0.0
  %1473 = vmatpush1.msra.mxu0 0.0
  %1474 = vmatprep.subr.mxu0 0.0
  %1475 = vmatpush1.msra.mxu0 0.0
  %1476 = vmatprep.subr.mxu0 0.0
  %1477 = vmatpush1.msra.mxu0 0.0
  %1478 = vmatprep.subr.mxu0 0.0
  %1479 = vmatpush1.msra.mxu0 0.0
  %1480 = vmatprep.subr.mxu0 0.0
  %1481 = vmatpush1.msra.mxu0 0.0
  %1482 = vmatprep.subr.mxu0 0.0
  %1483 = vmatpush1.msra.mxu0 0.0
  %1484 = vmatprep.mubr.f32.mxu0 0.0
  %1485 = vmatmul.mubr.f32.gmra.mrb[0].mxu0 %v956
  %v1486 = vpop.f32.mrb[0].mxu0
  %v1487 = vadd.f32 %v1347, %v1486
  %v1488 = vpop.f32.mrb[0].mxu0
  %1489 = vmatprep.mubr.f32.mxu0 0.0
  %1490 = vmatmul.mubr.f32.gmra.mrb[0].mxu0 %v959
  %v1491 = vpop.f32.mrb[0].mxu0
  %v1492 = vadd.f32 %v1352, %v1491
  %v1493 = vpop.f32.mrb[0].mxu0
  %1494 = vmatprep.mubr.f32.mxu0 0.0
  %1495 = vmatmul.mubr.f32.gmra.mrb[0].mxu0 %v962
  %v1496 = vpop.f32.mrb[0].mxu0
  %v1497 = vadd.f32 %v1357, %v1496
  %v1498 = vpop.f32.mrb[0].mxu0
  %1499 = vmatprep.mubr.f32.mxu0 0.0
  %1500 = vmatmul.mubr.f32.gmra.mrb[0].mxu0 %v965
  %v1501 = vpop.f32.mrb[0].mxu0
  %v1502 = vadd.f32 %v1362, %v1501
  %v1503 = vpop.f32.mrb[0].mxu0
  %1504 = vmatprep.mubr.f32.mxu0 0.0
  %1505 = vmatmul.mubr.f32.gmra.mrb[0].mxu0 %v968
  %v1506 = vpop.f32.mrb[0].mxu0
  %v1507 = vadd.f32 %v1367, %v1506
  %v1508 = vpop.f32.mrb[0].mxu0
  %1509 = vmatprep.mubr.f32.mxu0 0.0
  %1510 = vmatmul.mubr.f32.gmra.mrb[0].mxu0 %v971
  %v1511 = vpop.f32.mrb[0].mxu0
  %v1512 = vadd.f32 %v1372, %v1511
  %v1513 = vpop.f32.mrb[0].mxu0
  %1514 = vmatprep.mubr.f32.mxu0 0.0
  %1515 = vmatmul.mubr.f32.gmra.mrb[0].mxu0 %v974
  %v1516 = vpop.f32.mrb[0].mxu0
  %v1517 = vadd.f32 %v1377, %v1516
  %v1518 = vpop.f32.mrb[0].mxu0
  %1519 = vmatprep.mubr.f32.mxu0 0.0
  %1520 = vmatmul.mubr.f32.gmra.mrb[0].mxu0 %v977
  %v1521 = vpop.f32.mrb[0].mxu0
  %v1522 = vadd.f32 %v1382, %v1521
  %v1523 = vpop.f32.mrb[0].mxu0
  %1524 = vmatprep.mubr.f32.mxu0 0.0
  %1525 = vmatmul.mubr.f32.gmra.mrb[0].mxu0 %v980
  %v1526 = vpop.f32.mrb[0].mxu0
  %v1527 = vadd.f32 %v1387, %v1526
  %v1528 = vpop.f32.mrb[0].mxu0
  %1529 = vmatprep.mubr.f32.mxu0 0.0
  %1530 = vmatmul.mubr.f32.gmra.mrb[0].mxu0 %v983
  %v1531 = vpop.f32.mrb[0].mxu0
  %v1532 = vadd.f32 %v1392, %v1531
  %v1533 = vpop.f32.mrb[0].mxu0
  %1534 = vmatprep.mubr.f32.mxu0 0.0
  %1535 = vmatmul.mubr.f32.gmra.mrb[0].mxu0 %v986
  %v1536 = vpop.f32.mrb[0].mxu0
  %v1537 = vadd.f32 %v1397, %v1536
  %v1538 = vpop.f32.mrb[0].mxu0
  %1539 = vmatprep.mubr.f32.mxu0 0.0
  %1540 = vmatmul.mubr.f32.gmra.mrb[0].mxu0 %v989
  %v1541 = vpop.f32.mrb[0].mxu0
  %v1542 = vadd.f32 %v1402, %v1541
  %v1543 = vpop.f32.mrb[0].mxu0
  %1544 = vmatprep.mubr.f32.mxu0 0.0
  %1545 = vmatmul.mubr.f32.gmra.mrb[0].mxu0 %v992
  %v1546 = vpop.f32.mrb[0].mxu0
  %v1547 = vadd.f32 %v1407, %v1546
  %v1548 = vpop.f32.mrb[0].mxu0
  %1549 = vmatprep.mubr.f32.mxu0 0.0
  %1550 = vmatmul.mubr.f32.gmra.mrb[0].mxu0 %v995
  %v1551 = vpop.f32.mrb[0].mxu0
  %v1552 = vadd.f32 %v1412, %v1551
  %v1553 = vpop.f32.mrb[0].mxu0
  %1554 = vmatprep.mubr.f32.mxu0 0.0
  %1555 = vmatmul.mubr.f32.gmra.mrb[0].mxu0 %v998
  %v1556 = vpop.f32.mrb[0].mxu0
  %v1557 = vadd.f32 %v1417, %v1556
  %v1558 = vpop.f32.mrb[0].mxu0
  %1559 = vdwg.mxu0
  %v1560 = vmul.f32 %v560, %v560
  %v1561 = vmul.f32 %v562, %v562
  %v1562 = vmul.f32 %v671, %v671
  %v1563 = vmul.f32 %v673, %v673
  %v1564 = vmul.f32 %v782, %v782
  %v1565 = vmul.f32 %v784, %v784
  %v1566 = vmul.f32 %v893, %v893
  %v1567 = vmul.f32 %v564, %v564
  %v1568 = vmul.f32 %v566, %v566
  %v1569 = vmul.f32 %v675, %v675
  %v1570 = vmul.f32 %v677, %v677
  %v1571 = vmul.f32 %v786, %v786
  %v1572 = vmul.f32 %v788, %v788
  %v1573 = vmul.f32 %v896, %v896
  %v1574 = vmul.f32 %v570, %v570
  %v1575 = vmul.f32 %v572, %v572
  %v1576 = vmul.f32 %v681, %v681
  %v1577 = vmul.f32 %v683, %v683
  %v1578 = vmul.f32 %v792, %v792
  %v1579 = vmul.f32 %v794, %v794
  %v1580 = vmul.f32 %v901, %v901
  %v1581 = vmul.f32 %v574, %v574
  %v1582 = vmul.f32 %v576, %v576
  %v1583 = vmul.f32 %v685, %v685
  %v1584 = vmul.f32 %v687, %v687
  %v1585 = vmul.f32 %v796, %v796
  %v1586 = vmul.f32 %v798, %v798
  %v1587 = vmul.f32 %v904, %v904
  %v1588 = vmul.f32 %v580, %v580
  %v1589 = vmul.f32 %v582, %v582
  %v1590 = vmul.f32 %v691, %v691
  %v1591 = vmul.f32 %v693, %v693
  %v1592 = vmul.f32 %v802, %v802
  %v1593 = vmul.f32 %v804, %v804
  %v1594 = vmul.f32 %v909, %v909
  %v1595 = vmul.f32 %v584, %v584
  %v1596 = vmul.f32 %v586, %v586
  %v1597 = vmul.f32 %v695, %v695
  %v1598 = vmul.f32 %v697, %v697
  %v1599 = vmul.f32 %v806, %v806
  %v1600 = vmul.f32 %v808, %v808
  %v1601 = vmul.f32 %v912, %v912
  %v1602 = vmul.f32 %v590, %v590
  %v1603 = vmul.f32 %v592, %v592
  %v1604 = vmul.f32 %v701, %v701
  %v1605 = vmul.f32 %v703, %v703
  %v1606 = vmul.f32 %v812, %v812
  %v1607 = vmul.f32 %v814, %v814
  %v1608 = vmul.f32 %v917, %v917
  %v1609 = vmul.f32 %v594, %v594
  %v1610 = vmul.f32 %v596, %v596
  %v1611 = vmul.f32 %v705, %v705
  %v1612 = vmul.f32 %v707, %v707
  %v1613 = vmul.f32 %v816, %v816
  %v1614 = vmul.f32 %v818, %v818
  %v1615 = vmul.f32 %v920, %v920
  %v1616 = vmul.f32 %v600, %v600
  %v1617 = vmul.f32 %v602, %v602
  %v1618 = vmul.f32 %v711, %v711
  %v1619 = vmul.f32 %v713, %v713
  %v1620 = vmul.f32 %v822, %v822
  %v1621 = vmul.f32 %v824, %v824
  %v1622 = vmul.f32 %v925, %v925
  %v1623 = vmul.f32 %v604, %v604
  %v1624 = vmul.f32 %v606, %v606
  %v1625 = vmul.f32 %v715, %v715
  %v1626 = vmul.f32 %v717, %v717
  %v1627 = vmul.f32 %v826, %v826
  %v1628 = vmul.f32 %v828, %v828
  %v1629 = vmul.f32 %v928, %v928
  %v1630 = vmul.f32 %v610, %v610
  %v1631 = vmul.f32 %v612, %v612
  %v1632 = vmul.f32 %v721, %v721
  %v1633 = vmul.f32 %v723, %v723
  %v1634 = vmul.f32 %v832, %v832
  %v1635 = vmul.f32 %v834, %v834
  %v1636 = vmul.f32 %v933, %v933
  %v1637 = vmul.f32 %v614, %v614
  %v1638 = vmul.f32 %v616, %v616
  %v1639 = vmul.f32 %v725, %v725
  %v1640 = vmul.f32 %v727, %v727
  %v1641 = vmul.f32 %v836, %v836
  %v1642 = vmul.f32 %v838, %v838
  %v1643 = vmul.f32 %v936, %v936
  %v1644 = vmul.f32 %v620, %v620
  %v1645 = vmul.f32 %v622, %v622
  %v1646 = vmul.f32 %v731, %v731
  %v1647 = vmul.f32 %v733, %v733
  %v1648 = vmul.f32 %v842, %v842
  %v1649 = vmul.f32 %v844, %v844
  %v1650 = vmul.f32 %v941, %v941
  %v1651 = vmul.f32 %v624, %v624
  %v1652 = vmul.f32 %v626, %v626
  %v1653 = vmul.f32 %v735, %v735
  %v1654 = vmul.f32 %v737, %v737
  %v1655 = vmul.f32 %v846, %v846
  %v1656 = vmul.f32 %v848, %v848
  %v1657 = vmul.f32 %v944, %v944
  %v1658 = vmul.f32 %v630, %v630
  %v1659 = vmul.f32 %v632, %v632
  %v1660 = vmul.f32 %v741, %v741
  %v1661 = vmul.f32 %v743, %v743
  %v1662 = vmul.f32 %v852, %v852
  %v1663 = vmul.f32 %v854, %v854
  %v1664 = vmul.f32 %v949, %v949
  %v1666 = vsel %vm954, %v1566, 0
  %v1669 = vsel %vm954, %v1573, 0
  %v1672 = vsel %vm954, %v1580, 0
  %v1675 = vsel %vm954, %v1587, 0
  %v1678 = vsel %vm954, %v1594, 0
  %v1681 = vsel %vm954, %v1601, 0
  %v1684 = vsel %vm954, %v1608, 0
  %v1687 = vsel %vm954, %v1615, 0
  %v1690 = vsel %vm954, %v1622, 0
  %v1693 = vsel %vm954, %v1629, 0
  %v1696 = vsel %vm954, %v1636, 0
  %v1699 = vsel %vm954, %v1643, 0
  %v1702 = vsel %vm954, %v1650, 0
  %v1705 = vsel %vm954, %v1657, 0
  %v1708 = vsel %vm954, %v1664, 0
  %1710 = vmatprep.subr.mxu0 0.0
  %1711 = vmatpush1.msra.mxu0 0.0012755102
  %1712 = vmatprep.subr.mxu0 0.0
  %1713 = vmatpush1.msra.mxu0 0.0012755102
  %1714 = vmatprep.subr.mxu0 0.0
  %1715 = vmatpush1.msra.mxu0 0.0012755102
  %1716 = vmatprep.subr.mxu0 0.0
  %1717 = vmatpush1.msra.mxu0 0.0012755102
  %1718 = vmatprep.subr.mxu0 0.0
  %1719 = vmatpush1.msra.mxu0 0.0012755102
  %1720 = vmatprep.subr.mxu0 0.0
  %1721 = vmatpush1.msra.mxu0 0.0012755102
  %1722 = vmatprep.subr.mxu0 0.0
  %1723 = vmatpush1.msra.mxu0 0.0012755102
  %1724 = vmatprep.subr.mxu0 0.0
  %1725 = vmatpush1.msra.mxu0 0.0012755102
  %1726 = vmatprep.subr.mxu0 0.0
  %1727 = vmatpush1.msra.mxu0 0.0012755102
  %1728 = vmatprep.subr.mxu0 0.0
  %1729 = vmatpush1.msra.mxu0 0.0012755102
  %1730 = vmatprep.subr.mxu0 0.0
  %1731 = vmatpush1.msra.mxu0 0.0012755102
  %1732 = vmatprep.subr.mxu0 0.0
  %1733 = vmatpush1.msra.mxu0 0.0012755102
  %1734 = vmatprep.subr.mxu0 0.0
  %1735 = vmatpush1.msra.mxu0 0.0012755102
  %1736 = vmatprep.subr.mxu0 0.0
  %1737 = vmatpush1.msra.mxu0 0.0012755102
  %1738 = vmatprep.subr.mxu0 0.0
  %1739 = vmatpush1.msra.mxu0 0.0012755102
  %1740 = vmatprep.subr.mxu0 0.0
  %1741 = vmatpush1.msra.mxu0 0.0012755102
  %1742 = vmatprep.subr.mxu0 0.0
  %1743 = vmatpush1.msra.mxu0 0.0012755102
  %1744 = vmatprep.subr.mxu0 0.0
  %1745 = vmatpush1.msra.mxu0 0.0012755102
  %1746 = vmatprep.subr.mxu0 0.0
  %1747 = vmatpush1.msra.mxu0 0.0012755102
  %1748 = vmatprep.subr.mxu0 0.0
  %1749 = vmatpush1.msra.mxu0 0.0012755102
  %1750 = vmatprep.subr.mxu0 0.0
  %1751 = vmatpush1.msra.mxu0 0.0012755102
  %1752 = vmatprep.subr.mxu0 0.0
  %1753 = vmatpush1.msra.mxu0 0.0012755102
  %1754 = vmatprep.subr.mxu0 0.0
  %1755 = vmatpush1.msra.mxu0 0.0012755102
  %1756 = vmatprep.subr.mxu0 0.0
  %1757 = vmatpush1.msra.mxu0 0.0012755102
  %1758 = vmatprep.subr.mxu0 0.0
  %1759 = vmatpush1.msra.mxu0 0.0012755102
  %1760 = vmatprep.subr.mxu0 0.0
  %1761 = vmatpush1.msra.mxu0 0.0012755102
  %1762 = vmatprep.subr.mxu0 0.0
  %1763 = vmatpush1.msra.mxu0 0.0012755102
  %1764 = vmatprep.subr.mxu0 0.0
  %1765 = vmatpush1.msra.mxu0 0.0012755102
  %1766 = vmatprep.subr.mxu0 0.0
  %1767 = vmatpush1.msra.mxu0 0.0012755102
  %1768 = vmatprep.subr.mxu0 0.0
  %1769 = vmatpush1.msra.mxu0 0.0012755102
  %1770 = vmatprep.subr.mxu0 0.0
  %1771 = vmatpush1.msra.mxu0 0.0012755102
  %1772 = vmatprep.subr.mxu0 0.0
  %1773 = vmatpush1.msra.mxu0 0.0012755102
  %1774 = vmatprep.mubr.f32.mxu0 %v1561
  %1775 = vmatmul.mubr.f32.gmra.mrb[0].mxu0 %v1560
  %v1776 = vpop.f32.mrb[0].mxu0
  %v1777 = vadd.f32 0.0, %v1776
  %v1778 = vpop.f32.mrb[0].mxu0
  %1779 = vmatprep.mubr.f32.mxu0 %v1568
  %1780 = vmatmul.mubr.f32.gmra.mrb[0].mxu0 %v1567
  %v1781 = vpop.f32.mrb[0].mxu0
  %v1782 = vadd.f32 0.0, %v1781
  %v1783 = vpop.f32.mrb[0].mxu0
  %1784 = vmatprep.mubr.f32.mxu0 %v1575
  %1785 = vmatmul.mubr.f32.gmra.mrb[0].mxu0 %v1574
  %v1786 = vpop.f32.mrb[0].mxu0
  %v1787 = vadd.f32 0.0, %v1786
  %v1788 = vpop.f32.mrb[0].mxu0
  %1789 = vmatprep.mubr.f32.mxu0 %v1582
  %1790 = vmatmul.mubr.f32.gmra.mrb[0].mxu0 %v1581
  %v1791 = vpop.f32.mrb[0].mxu0
  %v1792 = vadd.f32 0.0, %v1791
  %v1793 = vpop.f32.mrb[0].mxu0
  %1794 = vmatprep.mubr.f32.mxu0 %v1589
  %1795 = vmatmul.mubr.f32.gmra.mrb[0].mxu0 %v1588
  %v1796 = vpop.f32.mrb[0].mxu0
  %v1797 = vadd.f32 0.0, %v1796
  %v1798 = vpop.f32.mrb[0].mxu0
  %1799 = vmatprep.mubr.f32.mxu0 %v1596
  %1800 = vmatmul.mubr.f32.gmra.mrb[0].mxu0 %v1595
  %v1801 = vpop.f32.mrb[0].mxu0
  %v1802 = vadd.f32 0.0, %v1801
  %v1803 = vpop.f32.mrb[0].mxu0
  %1804 = vmatprep.mubr.f32.mxu0 %v1603
  %1805 = vmatmul.mubr.f32.gmra.mrb[0].mxu0 %v1602
  %v1806 = vpop.f32.mrb[0].mxu0
  %v1807 = vadd.f32 0.0, %v1806
  %v1808 = vpop.f32.mrb[0].mxu0
  %1809 = vmatprep.mubr.f32.mxu0 %v1610
  %1810 = vmatmul.mubr.f32.gmra.mrb[0].mxu0 %v1609
  %v1811 = vpop.f32.mrb[0].mxu0
  %v1812 = vadd.f32 0.0, %v1811
  %v1813 = vpop.f32.mrb[0].mxu0
  %1814 = vmatprep.mubr.f32.mxu0 %v1617
  %1815 = vmatmul.mubr.f32.gmra.mrb[0].mxu0 %v1616
  %v1816 = vpop.f32.mrb[0].mxu0
  %v1817 = vadd.f32 0.0, %v1816
  %v1818 = vpop.f32.mrb[0].mxu0
  %1819 = vmatprep.mubr.f32.mxu0 %v1624
  %1820 = vmatmul.mubr.f32.gmra.mrb[0].mxu0 %v1623
  %v1821 = vpop.f32.mrb[0].mxu0
  %v1822 = vadd.f32 0.0, %v1821
  %v1823 = vpop.f32.mrb[0].mxu0
  %1824 = vmatprep.mubr.f32.mxu0 %v1631
  %1825 = vmatmul.mubr.f32.gmra.mrb[0].mxu0 %v1630
  %v1826 = vpop.f32.mrb[0].mxu0
  %v1827 = vadd.f32 0.0, %v1826
  %v1828 = vpop.f32.mrb[0].mxu0
  %1829 = vmatprep.mubr.f32.mxu0 %v1638
  %1830 = vmatmul.mubr.f32.gmra.mrb[0].mxu0 %v1637
  %v1831 = vpop.f32.mrb[0].mxu0
  %v1832 = vadd.f32 0.0, %v1831
  %v1833 = vpop.f32.mrb[0].mxu0
  %1834 = vmatprep.mubr.f32.mxu0 %v1645
  %1835 = vmatmul.mubr.f32.gmra.mrb[0].mxu0 %v1644
  %v1836 = vpop.f32.mrb[0].mxu0
  %v1837 = vadd.f32 0.0, %v1836
  %v1838 = vpop.f32.mrb[0].mxu0
  %1839 = vmatprep.mubr.f32.mxu0 %v1652
  %1840 = vmatmul.mubr.f32.gmra.mrb[0].mxu0 %v1651
  %v1841 = vpop.f32.mrb[0].mxu0
  %v1842 = vadd.f32 0.0, %v1841
  %v1843 = vpop.f32.mrb[0].mxu0
  %1844 = vmatprep.mubr.f32.mxu0 %v1659
  %1845 = vmatmul.mubr.f32.gmra.mrb[0].mxu0 %v1658
  %v1846 = vpop.f32.mrb[0].mxu0
  %v1847 = vadd.f32 0.0, %v1846
  %v1848 = vpop.f32.mrb[0].mxu0
  %1849 = vdwg.mxu0
  %1850 = vmatprep.subr.mxu0 0.0
  %1851 = vmatpush1.msra.mxu0 0.0012755102
  %1852 = vmatprep.subr.mxu0 0.0
  %1853 = vmatpush1.msra.mxu0 0.0012755102
  %1854 = vmatprep.subr.mxu0 0.0
  %1855 = vmatpush1.msra.mxu0 0.0012755102
  %1856 = vmatprep.subr.mxu0 0.0
  %1857 = vmatpush1.msra.mxu0 0.0012755102
  %1858 = vmatprep.subr.mxu0 0.0
  %1859 = vmatpush1.msra.mxu0 0.0012755102
  %1860 = vmatprep.subr.mxu0 0.0
  %1861 = vmatpush1.msra.mxu0 0.0012755102
  %1862 = vmatprep.subr.mxu0 0.0
  %1863 = vmatpush1.msra.mxu0 0.0012755102
  %1864 = vmatprep.subr.mxu0 0.0
  %1865 = vmatpush1.msra.mxu0 0.0012755102
  %1866 = vmatprep.subr.mxu0 0.0
  %1867 = vmatpush1.msra.mxu0 0.0012755102
  %1868 = vmatprep.subr.mxu0 0.0
  %1869 = vmatpush1.msra.mxu0 0.0012755102
  %1870 = vmatprep.subr.mxu0 0.0
  %1871 = vmatpush1.msra.mxu0 0.0012755102
  %1872 = vmatprep.subr.mxu0 0.0
  %1873 = vmatpush1.msra.mxu0 0.0012755102
  %1874 = vmatprep.subr.mxu0 0.0
  %1875 = vmatpush1.msra.mxu0 0.0012755102
  %1876 = vmatprep.subr.mxu0 0.0
  %1877 = vmatpush1.msra.mxu0 0.0012755102
  %1878 = vmatprep.subr.mxu0 0.0
  %1879 = vmatpush1.msra.mxu0 0.0012755102
  %1880 = vmatprep.subr.mxu0 0.0
  %1881 = vmatpush1.msra.mxu0 0.0012755102
  %1882 = vmatprep.subr.mxu0 0.0
  %1883 = vmatpush1.msra.mxu0 0.0012755102
  %1884 = vmatprep.subr.mxu0 0.0
  %1885 = vmatpush1.msra.mxu0 0.0012755102
  %1886 = vmatprep.subr.mxu0 0.0
  %1887 = vmatpush1.msra.mxu0 0.0012755102
  %1888 = vmatprep.subr.mxu0 0.0
  %1889 = vmatpush1.msra.mxu0 0.0012755102
  %1890 = vmatprep.subr.mxu0 0.0
  %1891 = vmatpush1.msra.mxu0 0.0012755102
  %1892 = vmatprep.subr.mxu0 0.0
  %1893 = vmatpush1.msra.mxu0 0.0012755102
  %1894 = vmatprep.subr.mxu0 0.0
  %1895 = vmatpush1.msra.mxu0 0.0012755102
  %1896 = vmatprep.subr.mxu0 0.0
  %1897 = vmatpush1.msra.mxu0 0.0012755102
  %1898 = vmatprep.subr.mxu0 0.0
  %1899 = vmatpush1.msra.mxu0 0.0012755102
  %1900 = vmatprep.subr.mxu0 0.0
  %1901 = vmatpush1.msra.mxu0 0.0012755102
  %1902 = vmatprep.subr.mxu0 0.0
  %1903 = vmatpush1.msra.mxu0 0.0012755102
  %1904 = vmatprep.subr.mxu0 0.0
  %1905 = vmatpush1.msra.mxu0 0.0012755102
  %1906 = vmatprep.subr.mxu0 0.0
  %1907 = vmatpush1.msra.mxu0 0.0012755102
  %1908 = vmatprep.subr.mxu0 0.0
  %1909 = vmatpush1.msra.mxu0 0.0012755102
  %1910 = vmatprep.subr.mxu0 0.0
  %1911 = vmatpush1.msra.mxu0 0.0012755102
  %1912 = vmatprep.subr.mxu0 0.0
  %1913 = vmatpush1.msra.mxu0 0.0012755102
  %1914 = vmatprep.mubr.f32.mxu0 %v1563
  %1915 = vmatmul.mubr.f32.gmra.mrb[0].mxu0 %v1562
  %v1916 = vpop.f32.mrb[0].mxu0
  %v1917 = vadd.f32 %v1777, %v1916
  %v1918 = vpop.f32.mrb[0].mxu0
  %1919 = vmatprep.mubr.f32.mxu0 %v1570
  %1920 = vmatmul.mubr.f32.gmra.mrb[0].mxu0 %v1569
  %v1921 = vpop.f32.mrb[0].mxu0
  %v1922 = vadd.f32 %v1782, %v1921
  %v1923 = vpop.f32.mrb[0].mxu0
  %1924 = vmatprep.mubr.f32.mxu0 %v1577
  %1925 = vmatmul.mubr.f32.gmra.mrb[0].mxu0 %v1576
  %v1926 = vpop.f32.mrb[0].mxu0
  %v1927 = vadd.f32 %v1787, %v1926
  %v1928 = vpop.f32.mrb[0].mxu0
  %1929 = vmatprep.mubr.f32.mxu0 %v1584
  %1930 = vmatmul.mubr.f32.gmra.mrb[0].mxu0 %v1583
  %v1931 = vpop.f32.mrb[0].mxu0
  %v1932 = vadd.f32 %v1792, %v1931
  %v1933 = vpop.f32.mrb[0].mxu0
  %1934 = vmatprep.mubr.f32.mxu0 %v1591
  %1935 = vmatmul.mubr.f32.gmra.mrb[0].mxu0 %v1590
  %v1936 = vpop.f32.mrb[0].mxu0
  %v1937 = vadd.f32 %v1797, %v1936
  %v1938 = vpop.f32.mrb[0].mxu0
  %1939 = vmatprep.mubr.f32.mxu0 %v1598
  %1940 = vmatmul.mubr.f32.gmra.mrb[0].mxu0 %v1597
  %v1941 = vpop.f32.mrb[0].mxu0
  %v1942 = vadd.f32 %v1802, %v1941
  %v1943 = vpop.f32.mrb[0].mxu0
  %1944 = vmatprep.mubr.f32.mxu0 %v1605
  %1945 = vmatmul.mubr.f32.gmra.mrb[0].mxu0 %v1604
  %v1946 = vpop.f32.mrb[0].mxu0
  %v1947 = vadd.f32 %v1807, %v1946
  %v1948 = vpop.f32.mrb[0].mxu0
  %1949 = vmatprep.mubr.f32.mxu0 %v1612
  %1950 = vmatmul.mubr.f32.gmra.mrb[0].mxu0 %v1611
  %v1951 = vpop.f32.mrb[0].mxu0
  %v1952 = vadd.f32 %v1812, %v1951
  %v1953 = vpop.f32.mrb[0].mxu0
  %1954 = vmatprep.mubr.f32.mxu0 %v1619
  %1955 = vmatmul.mubr.f32.gmra.mrb[0].mxu0 %v1618
  %v1956 = vpop.f32.mrb[0].mxu0
  %v1957 = vadd.f32 %v1817, %v1956
  %v1958 = vpop.f32.mrb[0].mxu0
  %1959 = vmatprep.mubr.f32.mxu0 %v1626
  %1960 = vmatmul.mubr.f32.gmra.mrb[0].mxu0 %v1625
  %v1961 = vpop.f32.mrb[0].mxu0
  %v1962 = vadd.f32 %v1822, %v1961
  %v1963 = vpop.f32.mrb[0].mxu0
  %1964 = vmatprep.mubr.f32.mxu0 %v1633
  %1965 = vmatmul.mubr.f32.gmra.mrb[0].mxu0 %v1632
  %v1966 = vpop.f32.mrb[0].mxu0
  %v1967 = vadd.f32 %v1827, %v1966
  %v1968 = vpop.f32.mrb[0].mxu0
  %1969 = vmatprep.mubr.f32.mxu0 %v1640
  %1970 = vmatmul.mubr.f32.gmra.mrb[0].mxu0 %v1639
  %v1971 = vpop.f32.mrb[0].mxu0
  %v1972 = vadd.f32 %v1832, %v1971
  %v1973 = vpop.f32.mrb[0].mxu0
  %1974 = vmatprep.mubr.f32.mxu0 %v1647
  %1975 = vmatmul.mubr.f32.gmra.mrb[0].mxu0 %v1646
  %v1976 = vpop.f32.mrb[0].mxu0
  %v1977 = vadd.f32 %v1837, %v1976
  %v1978 = vpop.f32.mrb[0].mxu0
  %1979 = vmatprep.mubr.f32.mxu0 %v1654
  %1980 = vmatmul.mubr.f32.gmra.mrb[0].mxu0 %v1653
  %v1981 = vpop.f32.mrb[0].mxu0
  %v1982 = vadd.f32 %v1842, %v1981
  %v1983 = vpop.f32.mrb[0].mxu0
  %1984 = vmatprep.mubr.f32.mxu0 %v1661
  %1985 = vmatmul.mubr.f32.gmra.mrb[0].mxu0 %v1660
  %v1986 = vpop.f32.mrb[0].mxu0
  %v1987 = vadd.f32 %v1847, %v1986
  %v1988 = vpop.f32.mrb[0].mxu0
  %1989 = vdwg.mxu0
  %1990 = vmatprep.subr.mxu0 0.0
  %1991 = vmatpush1.msra.mxu0 0.0012755102
  %1992 = vmatprep.subr.mxu0 0.0
  %1993 = vmatpush1.msra.mxu0 0.0012755102
  %1994 = vmatprep.subr.mxu0 0.0
  %1995 = vmatpush1.msra.mxu0 0.0012755102
  %1996 = vmatprep.subr.mxu0 0.0
  %1997 = vmatpush1.msra.mxu0 0.0012755102
  %1998 = vmatprep.subr.mxu0 0.0
  %1999 = vmatpush1.msra.mxu0 0.0012755102
  %2000 = vmatprep.subr.mxu0 0.0
  %2001 = vmatpush1.msra.mxu0 0.0012755102
  %2002 = vmatprep.subr.mxu0 0.0
  %2003 = vmatpush1.msra.mxu0 0.0012755102
  %2004 = vmatprep.subr.mxu0 0.0
  %2005 = vmatpush1.msra.mxu0 0.0012755102
  %2006 = vmatprep.subr.mxu0 0.0
  %2007 = vmatpush1.msra.mxu0 0.0012755102
  %2008 = vmatprep.subr.mxu0 0.0
  %2009 = vmatpush1.msra.mxu0 0.0012755102
  %2010 = vmatprep.subr.mxu0 0.0
  %2011 = vmatpush1.msra.mxu0 0.0012755102
  %2012 = vmatprep.subr.mxu0 0.0
  %2013 = vmatpush1.msra.mxu0 0.0012755102
  %2014 = vmatprep.subr.mxu0 0.0
  %2015 = vmatpush1.msra.mxu0 0.0012755102
  %2016 = vmatprep.subr.mxu0 0.0
  %2017 = vmatpush1.msra.mxu0 0.0012755102
  %2018 = vmatprep.subr.mxu0 0.0
  %2019 = vmatpush1.msra.mxu0 0.0012755102
  %2020 = vmatprep.subr.mxu0 0.0
  %2021 = vmatpush1.msra.mxu0 0.0012755102
  %2022 = vmatprep.subr.mxu0 0.0
  %2023 = vmatpush1.msra.mxu0 0.0012755102
  %2024 = vmatprep.subr.mxu0 0.0
  %2025 = vmatpush1.msra.mxu0 0.0012755102
  %2026 = vmatprep.subr.mxu0 0.0
  %2027 = vmatpush1.msra.mxu0 0.0012755102
  %2028 = vmatprep.subr.mxu0 0.0
  %2029 = vmatpush1.msra.mxu0 0.0012755102
  %2030 = vmatprep.subr.mxu0 0.0
  %2031 = vmatpush1.msra.mxu0 0.0012755102
  %2032 = vmatprep.subr.mxu0 0.0
  %2033 = vmatpush1.msra.mxu0 0.0012755102
  %2034 = vmatprep.subr.mxu0 0.0
  %2035 = vmatpush1.msra.mxu0 0.0012755102
  %2036 = vmatprep.subr.mxu0 0.0
  %2037 = vmatpush1.msra.mxu0 0.0012755102
  %2038 = vmatprep.subr.mxu0 0.0
  %2039 = vmatpush1.msra.mxu0 0.0012755102
  %2040 = vmatprep.subr.mxu0 0.0
  %2041 = vmatpush1.msra.mxu0 0.0012755102
  %2042 = vmatprep.subr.mxu0 0.0
  %2043 = vmatpush1.msra.mxu0 0.0012755102
  %2044 = vmatprep.subr.mxu0 0.0
  %2045 = vmatpush1.msra.mxu0 0.0012755102
  %2046 = vmatprep.subr.mxu0 0.0
  %2047 = vmatpush1.msra.mxu0 0.0012755102
  %2048 = vmatprep.subr.mxu0 0.0
  %2049 = vmatpush1.msra.mxu0 0.0012755102
  %2050 = vmatprep.subr.mxu0 0.0
  %2051 = vmatpush1.msra.mxu0 0.0012755102
  %2052 = vmatprep.subr.mxu0 0.0
  %2053 = vmatpush1.msra.mxu0 0.0012755102
  %2054 = vmatprep.mubr.f32.mxu0 %v1565
  %2055 = vmatmul.mubr.f32.gmra.mrb[0].mxu0 %v1564
  %v2056 = vpop.f32.mrb[0].mxu0
  %v2057 = vadd.f32 %v1917, %v2056
  %v2058 = vpop.f32.mrb[0].mxu0
  %2059 = vmatprep.mubr.f32.mxu0 %v1572
  %2060 = vmatmul.mubr.f32.gmra.mrb[0].mxu0 %v1571
  %v2061 = vpop.f32.mrb[0].mxu0
  %v2062 = vadd.f32 %v1922, %v2061
  %v2063 = vpop.f32.mrb[0].mxu0
  %2064 = vmatprep.mubr.f32.mxu0 %v1579
  %2065 = vmatmul.mubr.f32.gmra.mrb[0].mxu0 %v1578
  %v2066 = vpop.f32.mrb[0].mxu0
  %v2067 = vadd.f32 %v1927, %v2066
  %v2068 = vpop.f32.mrb[0].mxu0
  %2069 = vmatprep.mubr.f32.mxu0 %v1586
  %2070 = vmatmul.mubr.f32.gmra.mrb[0].mxu0 %v1585
  %v2071 = vpop.f32.mrb[0].mxu0
  %v2072 = vadd.f32 %v1932, %v2071
  %v2073 = vpop.f32.mrb[0].mxu0
  %2074 = vmatprep.mubr.f32.mxu0 %v1593
  %2075 = vmatmul.mubr.f32.gmra.mrb[0].mxu0 %v1592
  %v2076 = vpop.f32.mrb[0].mxu0
  %v2077 = vadd.f32 %v1937, %v2076
  %v2078 = vpop.f32.mrb[0].mxu0
  %2079 = vmatprep.mubr.f32.mxu0 %v1600
  %2080 = vmatmul.mubr.f32.gmra.mrb[0].mxu0 %v1599
  %v2081 = vpop.f32.mrb[0].mxu0
  %v2082 = vadd.f32 %v1942, %v2081
  %v2083 = vpop.f32.mrb[0].mxu0
  %2084 = vmatprep.mubr.f32.mxu0 %v1607
  %2085 = vmatmul.mubr.f32.gmra.mrb[0].mxu0 %v1606
  %v2086 = vpop.f32.mrb[0].mxu0
  %v2087 = vadd.f32 %v1947, %v2086
  %v2088 = vpop.f32.mrb[0].mxu0
  %2089 = vmatprep.mubr.f32.mxu0 %v1614
  %2090 = vmatmul.mubr.f32.gmra.mrb[0].mxu0 %v1613
  %v2091 = vpop.f32.mrb[0].mxu0
  %v2092 = vadd.f32 %v1952, %v2091
  %v2093 = vpop.f32.mrb[0].mxu0
  %2094 = vmatprep.mubr.f32.mxu0 %v1621
  %2095 = vmatmul.mubr.f32.gmra.mrb[0].mxu0 %v1620
  %v2096 = vpop.f32.mrb[0].mxu0
  %v2097 = vadd.f32 %v1957, %v2096
  %v2098 = vpop.f32.mrb[0].mxu0
  %2099 = vmatprep.mubr.f32.mxu0 %v1628
  %2100 = vmatmul.mubr.f32.gmra.mrb[0].mxu0 %v1627
  %v2101 = vpop.f32.mrb[0].mxu0
  %v2102 = vadd.f32 %v1962, %v2101
  %v2103 = vpop.f32.mrb[0].mxu0
  %2104 = vmatprep.mubr.f32.mxu0 %v1635
  %2105 = vmatmul.mubr.f32.gmra.mrb[0].mxu0 %v1634
  %v2106 = vpop.f32.mrb[0].mxu0
  %v2107 = vadd.f32 %v1967, %v2106
  %v2108 = vpop.f32.mrb[0].mxu0
  %2109 = vmatprep.mubr.f32.mxu0 %v1642
  %2110 = vmatmul.mubr.f32.gmra.mrb[0].mxu0 %v1641
  %v2111 = vpop.f32.mrb[0].mxu0
  %v2112 = vadd.f32 %v1972, %v2111
  %v2113 = vpop.f32.mrb[0].mxu0
  %2114 = vmatprep.mubr.f32.mxu0 %v1649
  %2115 = vmatmul.mubr.f32.gmra.mrb[0].mxu0 %v1648
  %v2116 = vpop.f32.mrb[0].mxu0
  %v2117 = vadd.f32 %v1977, %v2116
  %v2118 = vpop.f32.mrb[0].mxu0
  %2119 = vmatprep.mubr.f32.mxu0 %v1656
  %2120 = vmatmul.mubr.f32.gmra.mrb[0].mxu0 %v1655
  %v2121 = vpop.f32.mrb[0].mxu0
  %v2122 = vadd.f32 %v1982, %v2121
  %v2123 = vpop.f32.mrb[0].mxu0
  %2124 = vmatprep.mubr.f32.mxu0 %v1663
  %2125 = vmatmul.mubr.f32.gmra.mrb[0].mxu0 %v1662
  %v2126 = vpop.f32.mrb[0].mxu0
  %v2127 = vadd.f32 %v1987, %v2126
  %v2128 = vpop.f32.mrb[0].mxu0
  %2129 = vdwg.mxu0
  %2130 = vmatprep.subr.mxu0 0.0
  %2131 = vmatpush1.msra.mxu0 0.0012755102
  %2132 = vmatprep.subr.mxu0 0.0
  %2133 = vmatpush1.msra.mxu0 0.0012755102
  %2134 = vmatprep.subr.mxu0 0.0
  %2135 = vmatpush1.msra.mxu0 0.0
  %2136 = vmatprep.subr.mxu0 0.0
  %2137 = vmatpush1.msra.mxu0 0.0
  %2138 = vmatprep.subr.mxu0 0.0
  %2139 = vmatpush1.msra.mxu0 0.0
  %2140 = vmatprep.subr.mxu0 0.0
  %2141 = vmatpush1.msra.mxu0 0.0
  %2142 = vmatprep.subr.mxu0 0.0
  %2143 = vmatpush1.msra.mxu0 0.0
  %2144 = vmatprep.subr.mxu0 0.0
  %2145 = vmatpush1.msra.mxu0 0.0
  %2146 = vmatprep.subr.mxu0 0.0
  %2147 = vmatpush1.msra.mxu0 0.0
  %2148 = vmatprep.subr.mxu0 0.0
  %2149 = vmatpush1.msra.mxu0 0.0
  %2150 = vmatprep.subr.mxu0 0.0
  %2151 = vmatpush1.msra.mxu0 0.0
  %2152 = vmatprep.subr.mxu0 0.0
  %2153 = vmatpush1.msra.mxu0 0.0
  %2154 = vmatprep.subr.mxu0 0.0
  %2155 = vmatpush1.msra.mxu0 0.0
  %2156 = vmatprep.subr.mxu0 0.0
  %2157 = vmatpush1.msra.mxu0 0.0
  %2158 = vmatprep.subr.mxu0 0.0
  %2159 = vmatpush1.msra.mxu0 0.0
  %2160 = vmatprep.subr.mxu0 0.0
  %2161 = vmatpush1.msra.mxu0 0.0
  %2162 = vmatprep.subr.mxu0 0.0
  %2163 = vmatpush1.msra.mxu0 0.0
  %2164 = vmatprep.subr.mxu0 0.0
  %2165 = vmatpush1.msra.mxu0 0.0
  %2166 = vmatprep.subr.mxu0 0.0
  %2167 = vmatpush1.msra.mxu0 0.0
  %2168 = vmatprep.subr.mxu0 0.0
  %2169 = vmatpush1.msra.mxu0 0.0
  %2170 = vmatprep.subr.mxu0 0.0
  %2171 = vmatpush1.msra.mxu0 0.0
  %2172 = vmatprep.subr.mxu0 0.0
  %2173 = vmatpush1.msra.mxu0 0.0
  %2174 = vmatprep.subr.mxu0 0.0
  %2175 = vmatpush1.msra.mxu0 0.0
  %2176 = vmatprep.subr.mxu0 0.0
  %2177 = vmatpush1.msra.mxu0 0.0
  %2178 = vmatprep.subr.mxu0 0.0
  %2179 = vmatpush1.msra.mxu0 0.0
  %2180 = vmatprep.subr.mxu0 0.0
  %2181 = vmatpush1.msra.mxu0 0.0
  %2182 = vmatprep.subr.mxu0 0.0
  %2183 = vmatpush1.msra.mxu0 0.0
  %2184 = vmatprep.subr.mxu0 0.0
  %2185 = vmatpush1.msra.mxu0 0.0
  %2186 = vmatprep.subr.mxu0 0.0
  %2187 = vmatpush1.msra.mxu0 0.0
  %2188 = vmatprep.subr.mxu0 0.0
  %2189 = vmatpush1.msra.mxu0 0.0
  %2190 = vmatprep.subr.mxu0 0.0
  %2191 = vmatpush1.msra.mxu0 0.0
  %2192 = vmatprep.subr.mxu0 0.0
  %2193 = vmatpush1.msra.mxu0 0.0
  %2194 = vmatprep.mubr.f32.mxu0 0.0
  %2195 = vmatmul.mubr.f32.gmra.mrb[0].mxu0 %v1666
  %v2196 = vpop.f32.mrb[0].mxu0
  %v2197 = vadd.f32 %v2057, %v2196
  %v2198 = vpop.f32.mrb[0].mxu0
  %2199 = vmatprep.mubr.f32.mxu0 0.0
  %2200 = vmatmul.mubr.f32.gmra.mrb[0].mxu0 %v1669
  %v2201 = vpop.f32.mrb[0].mxu0
  %v2202 = vadd.f32 %v2062, %v2201
  %v2203 = vpop.f32.mrb[0].mxu0
  %2204 = vmatprep.mubr.f32.mxu0 0.0
  %2205 = vmatmul.mubr.f32.gmra.mrb[0].mxu0 %v1672
  %v2206 = vpop.f32.mrb[0].mxu0
  %v2207 = vadd.f32 %v2067, %v2206
  %v2208 = vpop.f32.mrb[0].mxu0
  %2209 = vmatprep.mubr.f32.mxu0 0.0
  %2210 = vmatmul.mubr.f32.gmra.mrb[0].mxu0 %v1675
  %v2211 = vpop.f32.mrb[0].mxu0
  %v2212 = vadd.f32 %v2072, %v2211
  %v2213 = vpop.f32.mrb[0].mxu0
  %2214 = vmatprep.mubr.f32.mxu0 0.0
  %2215 = vmatmul.mubr.f32.gmra.mrb[0].mxu0 %v1678
  %v2216 = vpop.f32.mrb[0].mxu0
  %v2217 = vadd.f32 %v2077, %v2216
  %v2218 = vpop.f32.mrb[0].mxu0
  %2219 = vmatprep.mubr.f32.mxu0 0.0
  %2220 = vmatmul.mubr.f32.gmra.mrb[0].mxu0 %v1681
  %v2221 = vpop.f32.mrb[0].mxu0
  %v2222 = vadd.f32 %v2082, %v2221
  %v2223 = vpop.f32.mrb[0].mxu0
  %2224 = vmatprep.mubr.f32.mxu0 0.0
  %2225 = vmatmul.mubr.f32.gmra.mrb[0].mxu0 %v1684
  %v2226 = vpop.f32.mrb[0].mxu0
  %v2227 = vadd.f32 %v2087, %v2226
  %v2228 = vpop.f32.mrb[0].mxu0
  %2229 = vmatprep.mubr.f32.mxu0 0.0
  %2230 = vmatmul.mubr.f32.gmra.mrb[0].mxu0 %v1687
  %v2231 = vpop.f32.mrb[0].mxu0
  %v2232 = vadd.f32 %v2092, %v2231
  %v2233 = vpop.f32.mrb[0].mxu0
  %2234 = vmatprep.mubr.f32.mxu0 0.0
  %2235 = vmatmul.mubr.f32.gmra.mrb[0].mxu0 %v1690
  %v2236 = vpop.f32.mrb[0].mxu0
  %v2237 = vadd.f32 %v2097, %v2236
  %v2238 = vpop.f32.mrb[0].mxu0
  %2239 = vmatprep.mubr.f32.mxu0 0.0
  %2240 = vmatmul.mubr.f32.gmra.mrb[0].mxu0 %v1693
  %v2241 = vpop.f32.mrb[0].mxu0
  %v2242 = vadd.f32 %v2102, %v2241
  %v2243 = vpop.f32.mrb[0].mxu0
  %2244 = vmatprep.mubr.f32.mxu0 0.0
  %2245 = vmatmul.mubr.f32.gmra.mrb[0].mxu0 %v1696
  %v2246 = vpop.f32.mrb[0].mxu0
  %v2247 = vadd.f32 %v2107, %v2246
  %v2248 = vpop.f32.mrb[0].mxu0
  %2249 = vmatprep.mubr.f32.mxu0 0.0
  %2250 = vmatmul.mubr.f32.gmra.mrb[0].mxu0 %v1699
  %v2251 = vpop.f32.mrb[0].mxu0
  %v2252 = vadd.f32 %v2112, %v2251
  %v2253 = vpop.f32.mrb[0].mxu0
  %2254 = vmatprep.mubr.f32.mxu0 0.0
  %2255 = vmatmul.mubr.f32.gmra.mrb[0].mxu0 %v1702
  %v2256 = vpop.f32.mrb[0].mxu0
  %v2257 = vadd.f32 %v2117, %v2256
  %v2258 = vpop.f32.mrb[0].mxu0
  %2259 = vmatprep.mubr.f32.mxu0 0.0
  %2260 = vmatmul.mubr.f32.gmra.mrb[0].mxu0 %v1705
  %v2261 = vpop.f32.mrb[0].mxu0
  %v2262 = vadd.f32 %v2122, %v2261
  %v2263 = vpop.f32.mrb[0].mxu0
  %2264 = vmatprep.mubr.f32.mxu0 0.0
  %2265 = vmatmul.mubr.f32.gmra.mrb[0].mxu0 %v1708
  %v2266 = vpop.f32.mrb[0].mxu0
  %v2267 = vadd.f32 %v2127, %v2266
  %v2268 = vpop.f32.mrb[0].mxu0
  %2269 = vdwg.mxu0
  %v2270 = vmul.f32 %v1487, %v1487
  %v2271 = vmul.f32 %v1492, %v1492
  %v2272 = vmul.f32 %v1497, %v1497
  %v2273 = vmul.f32 %v1502, %v1502
  %v2274 = vmul.f32 %v1507, %v1507
  %v2275 = vmul.f32 %v1512, %v1512
  %v2276 = vmul.f32 %v1517, %v1517
  %v2277 = vmul.f32 %v1522, %v1522
  %v2278 = vmul.f32 %v1527, %v1527
  %v2279 = vmul.f32 %v1532, %v1532
  %v2280 = vmul.f32 %v1537, %v1537
  %v2281 = vmul.f32 %v1542, %v1542
  %v2282 = vmul.f32 %v1547, %v1547
  %v2283 = vmul.f32 %v1552, %v1552
  %v2284 = vmul.f32 %v1557, %v1557
  %v2285 = vsub.f32 %v2197, %v2270
  %v2286 = vsub.f32 %v2202, %v2271
  %v2287 = vsub.f32 %v2207, %v2272
  %v2288 = vsub.f32 %v2212, %v2273
  %v2289 = vsub.f32 %v2217, %v2274
  %v2290 = vsub.f32 %v2222, %v2275
  %v2291 = vsub.f32 %v2227, %v2276
  %v2292 = vsub.f32 %v2232, %v2277
  %v2293 = vsub.f32 %v2237, %v2278
  %v2294 = vsub.f32 %v2242, %v2279
  %v2295 = vsub.f32 %v2247, %v2280
  %v2296 = vsub.f32 %v2252, %v2281
  %v2297 = vsub.f32 %v2257, %v2282
  %v2298 = vsub.f32 %v2262, %v2283
  %v2299 = vsub.f32 %v2267, %v2284
  %v2300 = vld [vmem:[%s3] sm:$0xff]
  %v2301 = vld [vmem:[%s3 + $0x8] sm:$0xff]
  %v2302 = vld [vmem:[%s3 + $0x10] sm:$0xff]
  %v2303 = vld [vmem:[%s3 + $0x18] sm:$0xff]
  %v2304 = vld [vmem:[%s3 + $0x20] sm:$0xff]
  %v2305 = vld [vmem:[%s3 + $0x28] sm:$0xff]
  %v2306 = vld [vmem:[%s3 + $0x30] sm:$0xff]
  %v2307 = vld [vmem:[%s3 + $0x38] sm:$0xff]
  %v2308 = vld [vmem:[%s3 + $0x40] sm:$0xff]
  %v2309 = vld [vmem:[%s3 + $0x48] sm:$0xff]
  %v2310 = vld [vmem:[%s3 + $0x50] sm:$0xff]
  %v2311 = vld [vmem:[%s3 + $0x58] sm:$0xff]
  %v2312 = vld [vmem:[%s3 + $0x60] sm:$0xff]
  %v2313 = vld [vmem:[%s3 + $0x68] sm:$0xff]
  %v2314 = vld [vmem:[%s3 + $0x70] sm:$0xff]
  %v2315 = vadd.f32 %v2285, 1e-05
  %v2316 = vadd.f32 %v2286, 1e-05
  %v2317 = vadd.f32 %v2287, 1e-05
  %v2318 = vadd.f32 %v2288, 1e-05
  %v2319 = vadd.f32 %v2289, 1e-05
  %v2320 = vadd.f32 %v2290, 1e-05
  %v2321 = vadd.f32 %v2291, 1e-05
  %v2322 = vadd.f32 %v2292, 1e-05
  %v2323 = vadd.f32 %v2293, 1e-05
  %v2324 = vadd.f32 %v2294, 1e-05
  %v2325 = vadd.f32 %v2295, 1e-05
  %v2326 = vadd.f32 %v2296, 1e-05
  %v2327 = vadd.f32 %v2297, 1e-05
  %v2328 = vadd.f32 %v2298, 1e-05
  %v2329 = vadd.f32 %v2299, 1e-05
  %v2330 = vrsqrt.pop %v2315
  %v2331 = vrsqrt.pop %v2316
  %v2332 = vrsqrt.pop %v2317
  %v2333 = vrsqrt.pop %v2318
  %v2334 = vrsqrt.pop %v2319
  %v2335 = vrsqrt.pop %v2320
  %v2336 = vrsqrt.pop %v2321
  %v2337 = vrsqrt.pop %v2322
  %v2338 = vrsqrt.pop %v2323
  %v2339 = vrsqrt.pop %v2324
  %v2340 = vrsqrt.pop %v2325
  %v2341 = vrsqrt.pop %v2326
  %v2342 = vrsqrt.pop %v2327
  %v2343 = vrsqrt.pop %v2328
  %v2344 = vrsqrt.pop %v2329
  %v2345 = vmul.f32 %v2300, %v2330
  %v2346 = vmul.f32 %v2301, %v2331
  %v2347 = vmul.f32 %v2302, %v2332
  %v2348 = vmul.f32 %v2303, %v2333
  %v2349 = vmul.f32 %v2304, %v2334
  %v2350 = vmul.f32 %v2305, %v2335
  %v2351 = vmul.f32 %v2306, %v2336
  %v2352 = vmul.f32 %v2307, %v2337
  %v2353 = vmul.f32 %v2308, %v2338
  %v2354 = vmul.f32 %v2309, %v2339
  %v2355 = vmul.f32 %v2310, %v2340
  %v2356 = vmul.f32 %v2311, %v2341
  %v2357 = vmul.f32 %v2312, %v2342
  %v2358 = vmul.f32 %v2313, %v2343
  %v2359 = vmul.f32 %v2314, %v2344
  %v2360 = vld [vmem:[%s4] sm:$0xff]
  %v2361 = vld [vmem:[%s4 + $0x8] sm:$0xff]
  %v2362 = vld [vmem:[%s4 + $0x10] sm:$0xff]
  %v2363 = vld [vmem:[%s4 + $0x18] sm:$0xff]
  %v2364 = vld [vmem:[%s4 + $0x20] sm:$0xff]
  %v2365 = vld [vmem:[%s4 + $0x28] sm:$0xff]
  %v2366 = vld [vmem:[%s4 + $0x30] sm:$0xff]
  %v2367 = vld [vmem:[%s4 + $0x38] sm:$0xff]
  %v2368 = vld [vmem:[%s4 + $0x40] sm:$0xff]
  %v2369 = vld [vmem:[%s4 + $0x48] sm:$0xff]
  %v2370 = vld [vmem:[%s4 + $0x50] sm:$0xff]
  %v2371 = vld [vmem:[%s4 + $0x58] sm:$0xff]
  %v2372 = vld [vmem:[%s4 + $0x60] sm:$0xff]
  %v2373 = vld [vmem:[%s4 + $0x68] sm:$0xff]
  %v2374 = vld [vmem:[%s4 + $0x70] sm:$0xff]
  %v2375 = vmul.f32 %v1487, %v2345
  %v2376 = vmul.f32 %v1492, %v2346
  %v2377 = vmul.f32 %v1497, %v2347
  %v2378 = vmul.f32 %v1502, %v2348
  %v2379 = vmul.f32 %v1507, %v2349
  %v2380 = vmul.f32 %v1512, %v2350
  %v2381 = vmul.f32 %v1517, %v2351
  %v2382 = vmul.f32 %v1522, %v2352
  %v2383 = vmul.f32 %v1527, %v2353
  %v2384 = vmul.f32 %v1532, %v2354
  %v2385 = vmul.f32 %v1537, %v2355
  %v2386 = vmul.f32 %v1542, %v2356
  %v2387 = vmul.f32 %v1547, %v2357
  %v2388 = vmul.f32 %v1552, %v2358
  %v2389 = vmul.f32 %v1557, %v2359
  %v2390 = vsub.f32 %v2360, %v2375
  %v2391 = vsub.f32 %v2361, %v2376
  %v2392 = vsub.f32 %v2362, %v2377
  %v2393 = vsub.f32 %v2363, %v2378
  %v2394 = vsub.f32 %v2364, %v2379
  %v2395 = vsub.f32 %v2365, %v2380
  %v2396 = vsub.f32 %v2366, %v2381
  %v2397 = vsub.f32 %v2367, %v2382
  %v2398 = vsub.f32 %v2368, %v2383
  %v2399 = vsub.f32 %v2369, %v2384
  %v2400 = vsub.f32 %v2370, %v2385
  %v2401 = vsub.f32 %v2371, %v2386
  %v2402 = vsub.f32 %v2372, %v2387
  %v2403 = vsub.f32 %v2373, %v2388
  %v2404 = vsub.f32 %v2374, %v2389
  %v2405 = vld [vmem:[%s5] sm:$0xff]
  %v2406 = vld [vmem:[%s5 + $0x8] sm:$0xff]
  %v2407 = vld [vmem:[%s5 + $0x10] sm:$0xff]
  %v2408 = vld [vmem:[%s5 + $0x18] sm:$0xff]
  %v2409 = vld [vmem:[%s5 + $0x20] sm:$0xff]
  %v2410 = vld [vmem:[%s5 + $0x28] sm:$0xff]
  %v2411 = vld [vmem:[%s5 + $0x30] sm:$0xff]
  %v2412 = vld [vmem:[%s5 + $0x38] sm:$0xff]
  %v2413 = vld [vmem:[%s5 + $0x40] sm:$0xff]
  %v2414 = vld [vmem:[%s5 + $0x48] sm:$0xff]
  %v2415 = vld [vmem:[%s5 + $0x50] sm:$0xff]
  %v2416 = vld [vmem:[%s5 + $0x58] sm:$0xff]
  %v2417 = vld [vmem:[%s5 + $0x60] sm:$0xff]
  %v2418 = vld [vmem:[%s5 + $0x68] sm:$0xff]
  %v2419 = vld [vmem:[%s5 + $0x70] sm:$0xff]
  %v2420 = vld [vmem:[%s5 + $0x78] sm:$0xff]
  %v2421 = vld [vmem:[%s5 + $0x80] sm:$0xff]
  %v2422 = vld [vmem:[%s5 + $0x88] sm:$0xff]
  %v2423 = vld [vmem:[%s5 + $0x90] sm:$0xff]
  %v2424 = vld [vmem:[%s5 + $0x98] sm:$0xff]
  %v2425 = vld [vmem:[%s5 + $0xa0] sm:$0xff]
  %v2426 = vld [vmem:[%s5 + $0xa8] sm:$0xff]
  %v2427 = vld [vmem:[%s5 + $0xb0] sm:$0xff]
  %v2428 = vld [vmem:[%s5 + $0xb8] sm:$0xff]
  %v2429 = vld [vmem:[%s5 + $0xc0] sm:$0xff]
  %v2430 = vld [vmem:[%s5 + $0xc8] sm:$0xff]
  %v2431 = vld [vmem:[%s5 + $0xd0] sm:$0xff]
  %v2432 = vld [vmem:[%s5 + $0xd8] sm:$0xff]
  %v2433 = vld [vmem:[%s5 + $0xe0] sm:$0xff]
  %v2434 = vld [vmem:[%s5 + $0xe8] sm:$0xff]
  %v2435 = vld [vmem:[%s5 + $0xf0] sm:$0xff]
  %v2436 = vld [vmem:[%s5 + $0xf8] sm:$0xff]
  %v2437 = vld [vmem:[%s5 + $0x100] sm:$0xff]
  %v2438 = vld [vmem:[%s5 + $0x108] sm:$0xff]
  %v2439 = vld [vmem:[%s5 + $0x110] sm:$0xff]
  %v2440 = vld [vmem:[%s5 + $0x118] sm:$0xff]
  %v2441 = vld [vmem:[%s5 + $0x120] sm:$0xff]
  %v2442 = vld [vmem:[%s5 + $0x128] sm:$0xff]
  %v2443 = vld [vmem:[%s5 + $0x130] sm:$0xff]
  %v2444 = vld [vmem:[%s5 + $0x138] sm:$0xff]
  %v2445 = vld [vmem:[%s5 + $0x140] sm:$0xff]
  %v2446 = vld [vmem:[%s5 + $0x148] sm:$0xff]
  %v2447 = vld [vmem:[%s5 + $0x150] sm:$0xff]
  %v2448 = vld [vmem:[%s5 + $0x158] sm:$0xff]
  %v2449 = vld [vmem:[%s5 + $0x160] sm:$0xff]
  %v2450 = vld [vmem:[%s5 + $0x168] sm:$0xff]
  %v2451 = vld [vmem:[%s5 + $0x170] sm:$0xff]
  %v2452 = vld [vmem:[%s5 + $0x178] sm:$0xff]
  %v2453 = vld [vmem:[%s5 + $0x180] sm:$0xff]
  %v2454 = vld [vmem:[%s5 + $0x188] sm:$0xff]
  %v2455 = vld [vmem:[%s5 + $0x190] sm:$0xff]
  %v2456 = vld [vmem:[%s5 + $0x198] sm:$0xff]
  %v2457 = vld [vmem:[%s5 + $0x1a0] sm:$0xff]
  %v2458 = vld [vmem:[%s5 + $0x1a8] sm:$0xff]
  %v2459 = vld [vmem:[%s5 + $0x1b0] sm:$0xff]
  %v2460 = vld [vmem:[%s5 + $0x1b8] sm:$0xff]
  %v2461 = vld [vmem:[%s5 + $0x1c0] sm:$0xff]
  %v2462 = vld [vmem:[%s5 + $0x1c8] sm:$0xff]
  %v2463 = vld [vmem:[%s5 + $0x1d0] sm:$0xff]
  %v2464 = vld [vmem:[%s5 + $0x1d8] sm:$0xff]
  %v2465 = vld [vmem:[%s5 + $0x1e0] sm:$0xff]
  %v2466 = vld [vmem:[%s5 + $0x1e8] sm:$0xff]
  %v2467 = vld [vmem:[%s5 + $0x1f0] sm:$0xff]
  %v2468 = vld [vmem:[%s5 + $0x1f8] sm:$0xff]
  %v2469 = vld [vmem:[%s5 + $0x200] sm:$0xff]
  %v2470 = vld [vmem:[%s5 + $0x208] sm:$0xff]
  %v2471 = vld [vmem:[%s5 + $0x210] sm:$0xff]
  %v2472 = vld [vmem:[%s5 + $0x218] sm:$0xff]
  %v2473 = vld [vmem:[%s5 + $0x220] sm:$0xff]
  %v2474 = vld [vmem:[%s5 + $0x228] sm:$0xff]
  %v2475 = vld [vmem:[%s5 + $0x230] sm:$0xff]
  %v2476 = vld [vmem:[%s5 + $0x238] sm:$0xff]
  %v2477 = vld [vmem:[%s5 + $0x240] sm:$0xff]
  %v2478 = vld [vmem:[%s5 + $0x248] sm:$0xff]
  %v2479 = vld [vmem:[%s5 + $0x250] sm:$0xff]
  %v2480 = vld [vmem:[%s5 + $0x258] sm:$0xff]
  %v2481 = vld [vmem:[%s5 + $0x260] sm:$0xff]
  %v2482 = vld [vmem:[%s5 + $0x268] sm:$0xff]
  %v2483 = vld [vmem:[%s5 + $0x270] sm:$0xff]
  %v2484 = vld [vmem:[%s5 + $0x278] sm:$0xff]
  %v2485 = vld [vmem:[%s5 + $0x280] sm:$0xff]
  %v2486 = vld [vmem:[%s5 + $0x288] sm:$0xff]
  %v2487 = vld [vmem:[%s5 + $0x290] sm:$0xff]
  %v2488 = vld [vmem:[%s5 + $0x298] sm:$0xff]
  %v2489 = vld [vmem:[%s5 + $0x2a0] sm:$0xff]
  %v2490 = vld [vmem:[%s5 + $0x2a8] sm:$0xff]
  %v2491 = vld [vmem:[%s5 + $0x2b0] sm:$0xff]
  %v2492 = vld [vmem:[%s5 + $0x2b8] sm:$0xff]
  %v2493 = vld [vmem:[%s5 + $0x2c0] sm:$0xff]
  %v2494 = vld [vmem:[%s5 + $0x2c8] sm:$0xff]
  %v2495 = vld [vmem:[%s5 + $0x2d0] sm:$0xff]
  %v2496 = vld [vmem:[%s5 + $0x2d8] sm:$0xff]
  %v2497 = vld [vmem:[%s5 + $0x2e0] sm:$0xff]
  %v2498 = vld [vmem:[%s5 + $0x2e8] sm:$0xff]
  %v2499 = vld [vmem:[%s5 + $0x2f0] sm:$0xff]
  %v2500 = vld [vmem:[%s5 + $0x2f8] sm:$0xff]
  %v2501 = vld [vmem:[%s5 + $0x300] sm:$0xff]
  %v2502 = vld [vmem:[%s5 + $0x308] sm:$0xff]
  %v2503 = vld [vmem:[%s5 + $0x310] sm:$0xff]
  %v2504 = vld [vmem:[%s5 + $0x318] sm:$0xff]
  %v2505 = vld [vmem:[%s5 + $0x320] sm:$0xff]
  %v2506 = vld [vmem:[%s5 + $0x328] sm:$0xff]
  %v2507 = vld [vmem:[%s5 + $0x330] sm:$0xff]
  %v2508 = vld [vmem:[%s5 + $0x338] sm:$0xff]
  %v2509 = vld [vmem:[%s5 + $0x340] sm:$0xff]
  %2511 = vset.pattern.permute.xlu0 0
  %2512 = vperm.xlu0 %2511, %v2345
  %v2513 = vpop.permute.xlu0 %2512
  %2516 = vset.pattern.permute.xlu0 0
  %2517 = vperm.xlu0 %2516, %v2346
  %v2518 = vpop.permute.xlu0 %2517
  %2521 = vset.pattern.permute.xlu0 0
  %2522 = vperm.xlu0 %2521, %v2347
  %v2523 = vpop.permute.xlu0 %2522
  %2526 = vset.pattern.permute.xlu0 0
  %2527 = vperm.xlu0 %2526, %v2348
  %v2528 = vpop.permute.xlu0 %2527
  %2531 = vset.pattern.permute.xlu0 0
  %2532 = vperm.xlu0 %2531, %v2349
  %v2533 = vpop.permute.xlu0 %2532
  %2536 = vset.pattern.permute.xlu0 0
  %2537 = vperm.xlu0 %2536, %v2350
  %v2538 = vpop.permute.xlu0 %2537
  %2541 = vset.pattern.permute.xlu0 0
  %2542 = vperm.xlu0 %2541, %v2351
  %v2543 = vpop.permute.xlu0 %2542
  %2546 = vset.pattern.permute.xlu0 0
  %2547 = vperm.xlu0 %2546, %v2352
  %v2548 = vpop.permute.xlu0 %2547
  %2551 = vset.pattern.permute.xlu0 0
  %2552 = vperm.xlu0 %2551, %v2353
  %v2553 = vpop.permute.xlu0 %2552
  %2556 = vset.pattern.permute.xlu0 0
  %2557 = vperm.xlu0 %2556, %v2354
  %v2558 = vpop.permute.xlu0 %2557
  %2561 = vset.pattern.permute.xlu0 0
  %2562 = vperm.xlu0 %2561, %v2355
  %v2563 = vpop.permute.xlu0 %2562
  %2566 = vset.pattern.permute.xlu0 0
  %2567 = vperm.xlu0 %2566, %v2356
  %v2568 = vpop.permute.xlu0 %2567
  %2571 = vset.pattern.permute.xlu0 0
  %2572 = vperm.xlu0 %2571, %v2357
  %v2573 = vpop.permute.xlu0 %2572
  %2576 = vset.pattern.permute.xlu0 0
  %2577 = vperm.xlu0 %2576, %v2358
  %v2578 = vpop.permute.xlu0 %2577
  %2581 = vset.pattern.permute.xlu0 0
  %2582 = vperm.xlu0 %2581, %v2359
  %v2583 = vpop.permute.xlu0 %2582
  %v2585 = vmul.f32 %v560, %v2513
  %v2586 = vmul.f32 %v562, %v2513
  %v2587 = vmul.f32 %v671, %v2513
  %v2588 = vmul.f32 %v673, %v2513
  %v2589 = vmul.f32 %v782, %v2513
  %v2590 = vmul.f32 %v784, %v2513
  %v2591 = vmul.f32 %v893, %v2513
  %v2592 = vmul.f32 %v564, %v2518
  %v2593 = vmul.f32 %v566, %v2518
  %v2594 = vmul.f32 %v675, %v2518
  %v2595 = vmul.f32 %v677, %v2518
  %v2596 = vmul.f32 %v786, %v2518
  %v2597 = vmul.f32 %v788, %v2518
  %v2598 = vmul.f32 %v896, %v2518
  %v2599 = vmul.f32 %v570, %v2523
  %v2600 = vmul.f32 %v572, %v2523
  %v2601 = vmul.f32 %v681, %v2523
  %v2602 = vmul.f32 %v683, %v2523
  %v2603 = vmul.f32 %v792, %v2523
  %v2604 = vmul.f32 %v794, %v2523
  %v2605 = vmul.f32 %v901, %v2523
  %v2606 = vmul.f32 %v574, %v2528
  %v2607 = vmul.f32 %v576, %v2528
  %v2608 = vmul.f32 %v685, %v2528
  %v2609 = vmul.f32 %v687, %v2528
  %v2610 = vmul.f32 %v796, %v2528
  %v2611 = vmul.f32 %v798, %v2528
  %v2612 = vmul.f32 %v904, %v2528
  %v2613 = vmul.f32 %v580, %v2533
  %v2614 = vmul.f32 %v582, %v2533
  %v2615 = vmul.f32 %v691, %v2533
  %v2616 = vmul.f32 %v693, %v2533
  %v2617 = vmul.f32 %v802, %v2533
  %v2618 = vmul.f32 %v804, %v2533
  %v2619 = vmul.f32 %v909, %v2533
  %v2620 = vmul.f32 %v584, %v2538
  %v2621 = vmul.f32 %v586, %v2538
  %v2622 = vmul.f32 %v695, %v2538
  %v2623 = vmul.f32 %v697, %v2538
  %v2624 = vmul.f32 %v806, %v2538
  %v2625 = vmul.f32 %v808, %v2538
  %v2626 = vmul.f32 %v912, %v2538
  %v2627 = vmul.f32 %v590, %v2543
  %v2628 = vmul.f32 %v592, %v2543
  %v2629 = vmul.f32 %v701, %v2543
  %v2630 = vmul.f32 %v703, %v2543
  %v2631 = vmul.f32 %v812, %v2543
  %v2632 = vmul.f32 %v814, %v2543
  %v2633 = vmul.f32 %v917, %v2543
  %v2634 = vmul.f32 %v594, %v2548
  %v2635 = vmul.f32 %v596, %v2548
  %v2636 = vmul.f32 %v705, %v2548
  %v2637 = vmul.f32 %v707, %v2548
  %v2638 = vmul.f32 %v816, %v2548
  %v2639 = vmul.f32 %v818, %v2548
  %v2640 = vmul.f32 %v920, %v2548
  %v2641 = vmul.f32 %v600, %v2553
  %v2642 = vmul.f32 %v602, %v2553
  %v2643 = vmul.f32 %v711, %v2553
  %v2644 = vmul.f32 %v713, %v2553
  %v2645 = vmul.f32 %v822, %v2553
  %v2646 = vmul.f32 %v824, %v2553
  %v2647 = vmul.f32 %v925, %v2553
  %v2648 = vmul.f32 %v604, %v2558
  %v2649 = vmul.f32 %v606, %v2558
  %v2650 = vmul.f32 %v715, %v2558
  %v2651 = vmul.f32 %v717, %v2558
  %v2652 = vmul.f32 %v826, %v2558
  %v2653 = vmul.f32 %v828, %v2558
  %v2654 = vmul.f32 %v928, %v2558
  %v2655 = vmul.f32 %v610, %v2563
  %v2656 = vmul.f32 %v612, %v2563
  %v2657 = vmul.f32 %v721, %v2563
  %v2658 = vmul.f32 %v723, %v2563
  %v2659 = vmul.f32 %v832, %v2563
  %v2660 = vmul.f32 %v834, %v2563
  %v2661 = vmul.f32 %v933, %v2563
  %v2662 = vmul.f32 %v614, %v2568
  %v2663 = vmul.f32 %v616, %v2568
  %v2664 = vmul.f32 %v725, %v2568
  %v2665 = vmul.f32 %v727, %v2568
  %v2666 = vmul.f32 %v836, %v2568
  %v2667 = vmul.f32 %v838, %v2568
  %v2668 = vmul.f32 %v936, %v2568
  %v2669 = vmul.f32 %v620, %v2573
  %v2670 = vmul.f32 %v622, %v2573
  %v2671 = vmul.f32 %v731, %v2573
  %v2672 = vmul.f32 %v733, %v2573
  %v2673 = vmul.f32 %v842, %v2573
  %v2674 = vmul.f32 %v844, %v2573
  %v2675 = vmul.f32 %v941, %v2573
  %v2676 = vmul.f32 %v624, %v2578
  %v2677 = vmul.f32 %v626, %v2578
  %v2678 = vmul.f32 %v735, %v2578
  %v2679 = vmul.f32 %v737, %v2578
  %v2680 = vmul.f32 %v846, %v2578
  %v2681 = vmul.f32 %v848, %v2578
  %v2682 = vmul.f32 %v944, %v2578
  %v2683 = vmul.f32 %v630, %v2583
  %v2684 = vmul.f32 %v632, %v2583
  %v2685 = vmul.f32 %v741, %v2583
  %v2686 = vmul.f32 %v743, %v2583
  %v2687 = vmul.f32 %v852, %v2583
  %v2688 = vmul.f32 %v854, %v2583
  %v2689 = vmul.f32 %v949, %v2583
  %v2690 = vadd.f32 %v2405, %v2585
  %v2691 = vadd.f32 %v2406, %v2586
  %v2692 = vadd.f32 %v2407, %v2587
  %v2693 = vadd.f32 %v2408, %v2588
  %v2694 = vadd.f32 %v2409, %v2589
  %v2695 = vadd.f32 %v2410, %v2590
  %v2696 = vadd.f32 %v2411, %v2591
  %v2697 = vadd.f32 %v2412, %v2592
  %v2698 = vadd.f32 %v2413, %v2593
  %v2699 = vadd.f32 %v2414, %v2594
  %v2700 = vadd.f32 %v2415, %v2595
  %v2701 = vadd.f32 %v2416, %v2596
  %v2702 = vadd.f32 %v2417, %v2597
  %v2703 = vadd.f32 %v2418, %v2598
  %v2704 = vadd.f32 %v2419, %v2599
  %v2705 = vadd.f32 %v2420, %v2600
  %v2706 = vadd.f32 %v2421, %v2601
  %v2707 = vadd.f32 %v2422, %v2602
  %v2708 = vadd.f32 %v2423, %v2603
  %v2709 = vadd.f32 %v2424, %v2604
  %v2710 = vadd.f32 %v2425, %v2605
  %v2711 = vadd.f32 %v2426, %v2606
  %v2712 = vadd.f32 %v2427, %v2607
  %v2713 = vadd.f32 %v2428, %v2608
  %v2714 = vadd.f32 %v2429, %v2609
  %v2715 = vadd.f32 %v2430, %v2610
  %v2716 = vadd.f32 %v2431, %v2611
  %v2717 = vadd.f32 %v2432, %v2612
  %v2718 = vadd.f32 %v2433, %v2613
  %v2719 = vadd.f32 %v2434, %v2614
  %v2720 = vadd.f32 %v2435, %v2615
  %v2721 = vadd.f32 %v2436, %v2616
  %v2722 = vadd.f32 %v2437, %v2617
  %v2723 = vadd.f32 %v2438, %v2618
  %v2724 = vadd.f32 %v2439, %v2619
  %v2725 = vadd.f32 %v2440, %v2620
  %v2726 = vadd.f32 %v2441, %v2621
  %v2727 = vadd.f32 %v2442, %v2622
  %v2728 = vadd.f32 %v2443, %v2623
  %v2729 = vadd.f32 %v2444, %v2624
  %v2730 = vadd.f32 %v2445, %v2625
  %v2731 = vadd.f32 %v2446, %v2626
  %v2732 = vadd.f32 %v2447, %v2627
  %v2733 = vadd.f32 %v2448, %v2628
  %v2734 = vadd.f32 %v2449, %v2629
  %v2735 = vadd.f32 %v2450, %v2630
  %v2736 = vadd.f32 %v2451, %v2631
  %v2737 = vadd.f32 %v2452, %v2632
  %v2738 = vadd.f32 %v2453, %v2633
  %v2739 = vadd.f32 %v2454, %v2634
  %v2740 = vadd.f32 %v2455, %v2635
  %v2741 = vadd.f32 %v2456, %v2636
  %v2742 = vadd.f32 %v2457, %v2637
  %v2743 = vadd.f32 %v2458, %v2638
  %v2744 = vadd.f32 %v2459, %v2639
  %v2745 = vadd.f32 %v2460, %v2640
  %v2746 = vadd.f32 %v2461, %v2641
  %v2747 = vadd.f32 %v2462, %v2642
  %v2748 = vadd.f32 %v2463, %v2643
  %v2749 = vadd.f32 %v2464, %v2644
  %v2750 = vadd.f32 %v2465, %v2645
  %v2751 = vadd.f32 %v2466, %v2646
  %v2752 = vadd.f32 %v2467, %v2647
  %v2753 = vadd.f32 %v2468, %v2648
  %v2754 = vadd.f32 %v2469, %v2649
  %v2755 = vadd.f32 %v2470, %v2650
  %v2756 = vadd.f32 %v2471, %v2651
  %v2757 = vadd.f32 %v2472, %v2652
  %v2758 = vadd.f32 %v2473, %v2653
  %v2759 = vadd.f32 %v2474, %v2654
  %v2760 = vadd.f32 %v2475, %v2655
  %v2761 = vadd.f32 %v2476, %v2656
  %v2762 = vadd.f32 %v2477, %v2657
  %v2763 = vadd.f32 %v2478, %v2658
  %v2764 = vadd.f32 %v2479, %v2659
  %v2765 = vadd.f32 %v2480, %v2660
  %v2766 = vadd.f32 %v2481, %v2661
  %v2767 = vadd.f32 %v2482, %v2662
  %v2768 = vadd.f32 %v2483, %v2663
  %v2769 = vadd.f32 %v2484, %v2664
  %v2770 = vadd.f32 %v2485, %v2665
  %v2771 = vadd.f32 %v2486, %v2666
  %v2772 = vadd.f32 %v2487, %v2667
  %v2773 = vadd.f32 %v2488, %v2668
  %v2774 = vadd.f32 %v2489, %v2669
  %v2775 = vadd.f32 %v2490, %v2670
  %v2776 = vadd.f32 %v2491, %v2671
  %v2777 = vadd.f32 %v2492, %v2672
  %v2778 = vadd.f32 %v2493, %v2673
  %v2779 = vadd.f32 %v2494, %v2674
  %v2780 = vadd.f32 %v2495, %v2675
  %v2781 = vadd.f32 %v2496, %v2676
  %v2782 = vadd.f32 %v2497, %v2677
  %v2783 = vadd.f32 %v2498, %v2678
  %v2784 = vadd.f32 %v2499, %v2679
  %v2785 = vadd.f32 %v2500, %v2680
  %v2786 = vadd.f32 %v2501, %v2681
  %v2787 = vadd.f32 %v2502, %v2682
  %v2788 = vadd.f32 %v2503, %v2683
  %v2789 = vadd.f32 %v2504, %v2684
  %v2790 = vadd.f32 %v2505, %v2685
  %v2791 = vadd.f32 %v2506, %v2686
  %v2792 = vadd.f32 %v2507, %v2687
  %v2793 = vadd.f32 %v2508, %v2688
  %v2794 = vadd.f32 %v2509, %v2689
  %2796 = vset.pattern.permute.xlu0 0
  %2797 = vperm.xlu0 %2796, %v2390
  %v2798 = vpop.permute.xlu0 %2797
  %2801 = vset.pattern.permute.xlu0 0
  %2802 = vperm.xlu0 %2801, %v2391
  %v2803 = vpop.permute.xlu0 %2802
  %2806 = vset.pattern.permute.xlu0 0
  %2807 = vperm.xlu0 %2806, %v2392
  %v2808 = vpop.permute.xlu0 %2807
  %2811 = vset.pattern.permute.xlu0 0
  %2812 = vperm.xlu0 %2811, %v2393
  %v2813 = vpop.permute.xlu0 %2812
  %2816 = vset.pattern.permute.xlu0 0
  %2817 = vperm.xlu0 %2816, %v2394
  %v2818 = vpop.permute.xlu0 %2817
  %2821 = vset.pattern.permute.xlu0 0
  %2822 = vperm.xlu0 %2821, %v2395
  %v2823 = vpop.permute.xlu0 %2822
  %2826 = vset.pattern.permute.xlu0 0
  %2827 = vperm.xlu0 %2826, %v2396
  %v2828 = vpop.permute.xlu0 %2827
  %2831 = vset.pattern.permute.xlu0 0
  %2832 = vperm.xlu0 %2831, %v2397
  %v2833 = vpop.permute.xlu0 %2832
  %2836 = vset.pattern.permute.xlu0 0
  %2837 = vperm.xlu0 %2836, %v2398
  %v2838 = vpop.permute.xlu0 %2837
  %2841 = vset.pattern.permute.xlu0 0
  %2842 = vperm.xlu0 %2841, %v2399
  %v2843 = vpop.permute.xlu0 %2842
  %2846 = vset.pattern.permute.xlu0 0
  %2847 = vperm.xlu0 %2846, %v2400
  %v2848 = vpop.permute.xlu0 %2847
  %2851 = vset.pattern.permute.xlu0 0
  %2852 = vperm.xlu0 %2851, %v2401
  %v2853 = vpop.permute.xlu0 %2852
  %2856 = vset.pattern.permute.xlu0 0
  %2857 = vperm.xlu0 %2856, %v2402
  %v2858 = vpop.permute.xlu0 %2857
  %2861 = vset.pattern.permute.xlu0 0
  %2862 = vperm.xlu0 %2861, %v2403
  %v2863 = vpop.permute.xlu0 %2862
  %2866 = vset.pattern.permute.xlu0 0
  %2867 = vperm.xlu0 %2866, %v2404
  %v2868 = vpop.permute.xlu0 %2867
  %v2870 = vadd.f32 %v2690, %v2798
  %v2871 = vadd.f32 %v2691, %v2798
  %v2872 = vadd.f32 %v2692, %v2798
  %v2873 = vadd.f32 %v2693, %v2798
  %v2874 = vadd.f32 %v2694, %v2798
  %v2875 = vadd.f32 %v2695, %v2798
  %v2876 = vadd.f32 %v2696, %v2798
  %v2877 = vadd.f32 %v2697, %v2803
  %v2878 = vadd.f32 %v2698, %v2803
  %v2879 = vadd.f32 %v2699, %v2803
  %v2880 = vadd.f32 %v2700, %v2803
  %v2881 = vadd.f32 %v2701, %v2803
  %v2882 = vadd.f32 %v2702, %v2803
  %v2883 = vadd.f32 %v2703, %v2803
  %v2884 = vadd.f32 %v2704, %v2808
  %v2885 = vadd.f32 %v2705, %v2808
  %v2886 = vadd.f32 %v2706, %v2808
  %v2887 = vadd.f32 %v2707, %v2808
  %v2888 = vadd.f32 %v2708, %v2808
  %v2889 = vadd.f32 %v2709, %v2808
  %v2890 = vadd.f32 %v2710, %v2808
  %v2891 = vadd.f32 %v2711, %v2813
  %v2892 = vadd.f32 %v2712, %v2813
  %v2893 = vadd.f32 %v2713, %v2813
  %v2894 = vadd.f32 %v2714, %v2813
  %v2895 = vadd.f32 %v2715, %v2813
  %v2896 = vadd.f32 %v2716, %v2813
  %v2897 = vadd.f32 %v2717, %v2813
  %v2898 = vadd.f32 %v2718, %v2818
  %v2899 = vadd.f32 %v2719, %v2818
  %v2900 = vadd.f32 %v2720, %v2818
  %v2901 = vadd.f32 %v2721, %v2818
  %v2902 = vadd.f32 %v2722, %v2818
  %v2903 = vadd.f32 %v2723, %v2818
  %v2904 = vadd.f32 %v2724, %v2818
  %v2905 = vadd.f32 %v2725, %v2823
  %v2906 = vadd.f32 %v2726, %v2823
  %v2907 = vadd.f32 %v2727, %v2823
  %v2908 = vadd.f32 %v2728, %v2823
  %v2909 = vadd.f32 %v2729, %v2823
  %v2910 = vadd.f32 %v2730, %v2823
  %v2911 = vadd.f32 %v2731, %v2823
  %v2912 = vadd.f32 %v2732, %v2828
  %v2913 = vadd.f32 %v2733, %v2828
  %v2914 = vadd.f32 %v2734, %v2828
  %v2915 = vadd.f32 %v2735, %v2828
  %v2916 = vadd.f32 %v2736, %v2828
  %v2917 = vadd.f32 %v2737, %v2828
  %v2918 = vadd.f32 %v2738, %v2828
  %v2919 = vadd.f32 %v2739, %v2833
  %v2920 = vadd.f32 %v2740, %v2833
  %v2921 = vadd.f32 %v2741, %v2833
  %v2922 = vadd.f32 %v2742, %v2833
  %v2923 = vadd.f32 %v2743, %v2833
  %v2924 = vadd.f32 %v2744, %v2833
  %v2925 = vadd.f32 %v2745, %v2833
  %v2926 = vadd.f32 %v2746, %v2838
  %v2927 = vadd.f32 %v2747, %v2838
  %v2928 = vadd.f32 %v2748, %v2838
  %v2929 = vadd.f32 %v2749, %v2838
  %v2930 = vadd.f32 %v2750, %v2838
  %v2931 = vadd.f32 %v2751, %v2838
  %v2932 = vadd.f32 %v2752, %v2838
  %v2933 = vadd.f32 %v2753, %v2843
  %v2934 = vadd.f32 %v2754, %v2843
  %v2935 = vadd.f32 %v2755, %v2843
  %v2936 = vadd.f32 %v2756, %v2843
  %v2937 = vadd.f32 %v2757, %v2843
  %v2938 = vadd.f32 %v2758, %v2843
  %v2939 = vadd.f32 %v2759, %v2843
  %v2940 = vadd.f32 %v2760, %v2848
  %v2941 = vadd.f32 %v2761, %v2848
  %v2942 = vadd.f32 %v2762, %v2848
  %v2943 = vadd.f32 %v2763, %v2848
  %v2944 = vadd.f32 %v2764, %v2848
  %v2945 = vadd.f32 %v2765, %v2848
  %v2946 = vadd.f32 %v2766, %v2848
  %v2947 = vadd.f32 %v2767, %v2853
  %v2948 = vadd.f32 %v2768, %v2853
  %v2949 = vadd.f32 %v2769, %v2853
  %v2950 = vadd.f32 %v2770, %v2853
  %v2951 = vadd.f32 %v2771, %v2853
  %v2952 = vadd.f32 %v2772, %v2853
  %v2953 = vadd.f32 %v2773, %v2853
  %v2954 = vadd.f32 %v2774, %v2858
  %v2955 = vadd.f32 %v2775, %v2858
  %v2956 = vadd.f32 %v2776, %v2858
  %v2957 = vadd.f32 %v2777, %v2858
  %v2958 = vadd.f32 %v2778, %v2858
  %v2959 = vadd.f32 %v2779, %v2858
  %v2960 = vadd.f32 %v2780, %v2858
  %v2961 = vadd.f32 %v2781, %v2863
  %v2962 = vadd.f32 %v2782, %v2863
  %v2963 = vadd.f32 %v2783, %v2863
  %v2964 = vadd.f32 %v2784, %v2863
  %v2965 = vadd.f32 %v2785, %v2863
  %v2966 = vadd.f32 %v2786, %v2863
  %v2967 = vadd.f32 %v2787, %v2863
  %v2968 = vadd.f32 %v2788, %v2868
  %v2969 = vadd.f32 %v2789, %v2868
  %v2970 = vadd.f32 %v2790, %v2868
  %v2971 = vadd.f32 %v2791, %v2868
  %v2972 = vadd.f32 %v2792, %v2868
  %v2973 = vadd.f32 %v2793, %v2868
  %v2974 = vadd.f32 %v2794, %v2868
  %v2975 = vmax.f32 %v2870, 0.0
  %v2976 = vmax.f32 %v2871, 0.0
  %v2977 = vmax.f32 %v2872, 0.0
  %v2978 = vmax.f32 %v2873, 0.0
  %v2979 = vmax.f32 %v2874, 0.0
  %v2980 = vmax.f32 %v2875, 0.0
  %v2981 = vmax.f32 %v2876, 0.0
  %v2982 = vmax.f32 %v2877, 0.0
  %v2983 = vmax.f32 %v2878, 0.0
  %v2984 = vmax.f32 %v2879, 0.0
  %v2985 = vmax.f32 %v2880, 0.0
  %v2986 = vmax.f32 %v2881, 0.0
  %v2987 = vmax.f32 %v2882, 0.0
  %v2988 = vmax.f32 %v2883, 0.0
  %v2989 = vmax.f32 %v2884, 0.0
  %v2990 = vmax.f32 %v2885, 0.0
  %v2991 = vmax.f32 %v2886, 0.0
  %v2992 = vmax.f32 %v2887, 0.0
  %v2993 = vmax.f32 %v2888, 0.0
  %v2994 = vmax.f32 %v2889, 0.0
  %v2995 = vmax.f32 %v2890, 0.0
  %v2996 = vmax.f32 %v2891, 0.0
  %v2997 = vmax.f32 %v2892, 0.0
  %v2998 = vmax.f32 %v2893, 0.0
  %v2999 = vmax.f32 %v2894, 0.0
  %v3000 = vmax.f32 %v2895, 0.0
  %v3001 = vmax.f32 %v2896, 0.0
  %v3002 = vmax.f32 %v2897, 0.0
  %v3003 = vmax.f32 %v2898, 0.0
  %v3004 = vmax.f32 %v2899, 0.0
  %v3005 = vmax.f32 %v2900, 0.0
  %v3006 = vmax.f32 %v2901, 0.0
  %v3007 = vmax.f32 %v2902, 0.0
  %v3008 = vmax.f32 %v2903, 0.0
  %v3009 = vmax.f32 %v2904, 0.0
  %v3010 = vmax.f32 %v2905, 0.0
  %v3011 = vmax.f32 %v2906, 0.0
  %v3012 = vmax.f32 %v2907, 0.0
  %v3013 = vmax.f32 %v2908, 0.0
  %v3014 = vmax.f32 %v2909, 0.0
  %v3015 = vmax.f32 %v2910, 0.0
  %v3016 = vmax.f32 %v2911, 0.0
  %v3017 = vmax.f32 %v2912, 0.0
  %v3018 = vmax.f32 %v2913, 0.0
  %v3019 = vmax.f32 %v2914, 0.0
  %v3020 = vmax.f32 %v2915, 0.0
  %v3021 = vmax.f32 %v2916, 0.0
  %v3022 = vmax.f32 %v2917, 0.0
  %v3023 = vmax.f32 %v2918, 0.0
  %v3024 = vmax.f32 %v2919, 0.0
  %v3025 = vmax.f32 %v2920, 0.0
  %v3026 = vmax.f32 %v2921, 0.0
  %v3027 = vmax.f32 %v2922, 0.0
  %v3028 = vmax.f32 %v2923, 0.0
  %v3029 = vmax.f32 %v2924, 0.0
  %v3030 = vmax.f32 %v2925, 0.0
  %v3031 = vmax.f32 %v2926, 0.0
  %v3032 = vmax.f32 %v2927, 0.0
  %v3033 = vmax.f32 %v2928, 0.0
  %v3034 = vmax.f32 %v2929, 0.0
  %v3035 = vmax.f32 %v2930, 0.0
  %v3036 = vmax.f32 %v2931, 0.0
  %v3037 = vmax.f32 %v2932, 0.0
  %v3038 = vmax.f32 %v2933, 0.0
  %v3039 = vmax.f32 %v2934, 0.0
  %v3040 = vmax.f32 %v2935, 0.0
  %v3041 = vmax.f32 %v2936, 0.0
  %v3042 = vmax.f32 %v2937, 0.0
  %v3043 = vmax.f32 %v2938, 0.0
  %v3044 = vmax.f32 %v2939, 0.0
  %v3045 = vmax.f32 %v2940, 0.0
  %v3046 = vmax.f32 %v2941, 0.0
  %v3047 = vmax.f32 %v2942, 0.0
  %v3048 = vmax.f32 %v2943, 0.0
  %v3049 = vmax.f32 %v2944, 0.0
  %v3050 = vmax.f32 %v2945, 0.0
  %v3051 = vmax.f32 %v2946, 0.0
  %v3052 = vmax.f32 %v2947, 0.0
  %v3053 = vmax.f32 %v2948, 0.0
  %v3054 = vmax.f32 %v2949, 0.0
  %v3055 = vmax.f32 %v2950, 0.0
  %v3056 = vmax.f32 %v2951, 0.0
  %v3057 = vmax.f32 %v2952, 0.0
  %v3058 = vmax.f32 %v2953, 0.0
  %v3059 = vmax.f32 %v2954, 0.0
  %v3060 = vmax.f32 %v2955, 0.0
  %v3061 = vmax.f32 %v2956, 0.0
  %v3062 = vmax.f32 %v2957, 0.0
  %v3063 = vmax.f32 %v2958, 0.0
  %v3064 = vmax.f32 %v2959, 0.0
  %v3065 = vmax.f32 %v2960, 0.0
  %v3066 = vmax.f32 %v2961, 0.0
  %v3067 = vmax.f32 %v2962, 0.0
  %v3068 = vmax.f32 %v2963, 0.0
  %v3069 = vmax.f32 %v2964, 0.0
  %v3070 = vmax.f32 %v2965, 0.0
  %v3071 = vmax.f32 %v2966, 0.0
  %v3072 = vmax.f32 %v2967, 0.0
  %v3073 = vmax.f32 %v2968, 0.0
  %v3074 = vmax.f32 %v2969, 0.0
  %v3075 = vmax.f32 %v2970, 0.0
  %v3076 = vmax.f32 %v2971, 0.0
  %v3077 = vmax.f32 %v2972, 0.0
  %v3078 = vmax.f32 %v2973, 0.0
  %v3079 = vmax.f32 %v2974, 0.0
  %3080 = vst [vmem:[%s6] sm:$0xff] %v2975
  %3081 = vst [vmem:[%s6 + $0x8] sm:$0xff] %v2976
  %3082 = vst [vmem:[%s6 + $0x10] sm:$0xff] %v2977
  %3083 = vst [vmem:[%s6 + $0x18] sm:$0xff] %v2978
  %3084 = vst [vmem:[%s6 + $0x20] sm:$0xff] %v2979
  %3085 = vst [vmem:[%s6 + $0x28] sm:$0xff] %v2980
  %3086 = vst.msk [vmem:[%s6 + $0x30] sm:$0xff] %vm954, %v2981
  %3087 = vst [vmem:[%s6 + $0x38] sm:$0xff] %v2982
  %3088 = vst [vmem:[%s6 + $0x40] sm:$0xff] %v2983
  %3089 = vst [vmem:[%s6 + $0x48] sm:$0xff] %v2984
  %3090 = vst [vmem:[%s6 + $0x50] sm:$0xff] %v2985
  %3091 = vst [vmem:[%s6 + $0x58] sm:$0xff] %v2986
  %3092 = vst [vmem:[%s6 + $0x60] sm:$0xff] %v2987
  %3093 = vst.msk [vmem:[%s6 + $0x68] sm:$0xff] %vm954, %v2988
  %3094 = vst [vmem:[%s6 + $0x70] sm:$0xff] %v2989
  %3095 = vst [vmem:[%s6 + $0x78] sm:$0xff] %v2990
  %3096 = vst [vmem:[%s6 + $0x80] sm:$0xff] %v2991
  %3097 = vst [vmem:[%s6 + $0x88] sm:$0xff] %v2992
  %3098 = vst [vmem:[%s6 + $0x90] sm:$0xff] %v2993
  %3099 = vst [vmem:[%s6 + $0x98] sm:$0xff] %v2994
  %3100 = vst.msk [vmem:[%s6 + $0xa0] sm:$0xff] %vm954, %v2995
  %3101 = vst [vmem:[%s6 + $0xa8] sm:$0xff] %v2996
  %3102 = vst [vmem:[%s6 + $0xb0] sm:$0xff] %v2997
  %3103 = vst [vmem:[%s6 + $0xb8] sm:$0xff] %v2998
  %3104 = vst [vmem:[%s6 + $0xc0] sm:$0xff] %v2999
  %3105 = vst [vmem:[%s6 + $0xc8] sm:$0xff] %v3000
  %3106 = vst [vmem:[%s6 + $0xd0] sm:$0xff] %v3001
  %3107 = vst.msk [vmem:[%s6 + $0xd8] sm:$0xff] %vm954, %v3002
  %3108 = vst [vmem:[%s6 + $0xe0] sm:$0xff] %v3003
  %3109 = vst [vmem:[%s6 + $0xe8] sm:$0xff] %v3004
  %3110 = vst [vmem:[%s6 + $0xf0] sm:$0xff] %v3005
  %3111 = vst [vmem:[%s6 + $0xf8] sm:$0xff] %v3006
  %3112 = vst [vmem:[%s6 + $0x100] sm:$0xff] %v3007
  %3113 = vst [vmem:[%s6 + $0x108] sm:$0xff] %v3008
  %3114 = vst.msk [vmem:[%s6 + $0x110] sm:$0xff] %vm954, %v3009
  %3115 = vst [vmem:[%s6 + $0x118] sm:$0xff] %v3010
  %3116 = vst [vmem:[%s6 + $0x120] sm:$0xff] %v3011
  %3117 = vst [vmem:[%s6 + $0x128] sm:$0xff] %v3012
  %3118 = vst [vmem:[%s6 + $0x130] sm:$0xff] %v3013
  %3119 = vst [vmem:[%s6 + $0x138] sm:$0xff] %v3014
  %3120 = vst [vmem:[%s6 + $0x140] sm:$0xff] %v3015
  %3121 = vst.msk [vmem:[%s6 + $0x148] sm:$0xff] %vm954, %v3016
  %3122 = vst [vmem:[%s6 + $0x150] sm:$0xff] %v3017
  %3123 = vst [vmem:[%s6 + $0x158] sm:$0xff] %v3018
  %3124 = vst [vmem:[%s6 + $0x160] sm:$0xff] %v3019
  %3125 = vst [vmem:[%s6 + $0x168] sm:$0xff] %v3020
  %3126 = vst [vmem:[%s6 + $0x170] sm:$0xff] %v3021
  %3127 = vst [vmem:[%s6 + $0x178] sm:$0xff] %v3022
  %3128 = vst.msk [vmem:[%s6 + $0x180] sm:$0xff] %vm954, %v3023
  %3129 = vst [vmem:[%s6 + $0x188] sm:$0xff] %v3024
  %3130 = vst [vmem:[%s6 + $0x190] sm:$0xff] %v3025
  %3131 = vst [vmem:[%s6 + $0x198] sm:$0xff] %v3026
  %3132 = vst [vmem:[%s6 + $0x1a0] sm:$0xff] %v3027
  %3133 = vst [vmem:[%s6 + $0x1a8] sm:$0xff] %v3028
  %3134 = vst [vmem:[%s6 + $0x1b0] sm:$0xff] %v3029
  %3135 = vst.msk [vmem:[%s6 + $0x1b8] sm:$0xff] %vm954, %v3030
  %3136 = vst [vmem:[%s6 + $0x1c0] sm:$0xff] %v3031
  %3137 = vst [vmem:[%s6 + $0x1c8] sm:$0xff] %v3032
  %3138 = vst [vmem:[%s6 + $0x1d0] sm:$0xff] %v3033
  %3139 = vst [vmem:[%s6 + $0x1d8] sm:$0xff] %v3034
  %3140 = vst [vmem:[%s6 + $0x1e0] sm:$0xff] %v3035
  %3141 = vst [vmem:[%s6 + $0x1e8] sm:$0xff] %v3036
  %3142 = vst.msk [vmem:[%s6 + $0x1f0] sm:$0xff] %vm954, %v3037
  %3143 = vst [vmem:[%s6 + $0x1f8] sm:$0xff] %v3038
  %3144 = vst [vmem:[%s6 + $0x200] sm:$0xff] %v3039
  %3145 = vst [vmem:[%s6 + $0x208] sm:$0xff] %v3040
  %3146 = vst [vmem:[%s6 + $0x210] sm:$0xff] %v3041
  %3147 = vst [vmem:[%s6 + $0x218] sm:$0xff] %v3042
  %3148 = vst [vmem:[%s6 + $0x220] sm:$0xff] %v3043
  %3149 = vst.msk [vmem:[%s6 + $0x228] sm:$0xff] %vm954, %v3044
  %3150 = vst [vmem:[%s6 + $0x230] sm:$0xff] %v3045
  %3151 = vst [vmem:[%s6 + $0x238] sm:$0xff] %v3046
  %3152 = vst [vmem:[%s6 + $0x240] sm:$0xff] %v3047
  %3153 = vst [vmem:[%s6 + $0x248] sm:$0xff] %v3048
  %3154 = vst [vmem:[%s6 + $0x250] sm:$0xff] %v3049
  %3155 = vst [vmem:[%s6 + $0x258] sm:$0xff] %v3050
  %3156 = vst.msk [vmem:[%s6 + $0x260] sm:$0xff] %vm954, %v3051
  %3157 = vst [vmem:[%s6 + $0x268] sm:$0xff] %v3052
  %3158 = vst [vmem:[%s6 + $0x270] sm:$0xff] %v3053
  %3159 = vst [vmem:[%s6 + $0x278] sm:$0xff] %v3054
  %3160 = vst [vmem:[%s6 + $0x280] sm:$0xff] %v3055
  %3161 = vst [vmem:[%s6 + $0x288] sm:$0xff] %v3056
  %3162 = vst [vmem:[%s6 + $0x290] sm:$0xff] %v3057
  %3163 = vst.msk [vmem:[%s6 + $0x298] sm:$0xff] %vm954, %v3058
  %3164 = vst [vmem:[%s6 + $0x2a0] sm:$0xff] %v3059
  %3165 = vst [vmem:[%s6 + $0x2a8] sm:$0xff] %v3060
  %3166 = vst [vmem:[%s6 + $0x2b0] sm:$0xff] %v3061
  %3167 = vst [vmem:[%s6 + $0x2b8] sm:$0xff] %v3062
  %3168 = vst [vmem:[%s6 + $0x2c0] sm:$0xff] %v3063
  %3169 = vst [vmem:[%s6 + $0x2c8] sm:$0xff] %v3064
  %3170 = vst.msk [vmem:[%s6 + $0x2d0] sm:$0xff] %vm954, %v3065
  %3171 = vst [vmem:[%s6 + $0x2d8] sm:$0xff] %v3066
  %3172 = vst [vmem:[%s6 + $0x2e0] sm:$0xff] %v3067
  %3173 = vst [vmem:[%s6 + $0x2e8] sm:$0xff] %v3068
  %3174 = vst [vmem:[%s6 + $0x2f0] sm:$0xff] %v3069
  %3175 = vst [vmem:[%s6 + $0x2f8] sm:$0xff] %v3070
  %3176 = vst [vmem:[%s6 + $0x300] sm:$0xff] %v3071
  %3177 = vst.msk [vmem:[%s6 + $0x308] sm:$0xff] %vm954, %v3072
  %3178 = vst [vmem:[%s6 + $0x310] sm:$0xff] %v3073
  %3179 = vst [vmem:[%s6 + $0x318] sm:$0xff] %v3074
  %3180 = vst [vmem:[%s6 + $0x320] sm:$0xff] %v3075
  %3181 = vst [vmem:[%s6 + $0x328] sm:$0xff] %v3076
  %3182 = vst [vmem:[%s6 + $0x330] sm:$0xff] %v3077
  %3183 = vst [vmem:[%s6 + $0x338] sm:$0xff] %v3078
  %3184 = vst.msk [vmem:[%s6 + $0x340] sm:$0xff] %vm954, %v3079
  // Predicated region
  $region26: #{fused_forward.1} parent=0 // pred_check
    _
  $region27: #{fused_forward.1} parent=0 // pred_check_branch
    %3186 = sbr.rel (0) target = $region29
  $region28: #{fused_forward.1} parent=0 // pred_region
    _
  $region29: #{fused_forward.1} parent=0 // pred_fallthru
    _
  // Predicated region
  $region30: #{fused_forward.1} parent=0 // pred_check
    _
  $region31: #{fused_forward.1} parent=0 // pred_check_branch
    %3188 = sbr.rel (0) target = $region33
  $region32: #{fused_forward.1} parent=0 // pred_region
    _
  $region33: #{fused_forward.1} parent=0 // pred_fallthru
    _

</llo_original>
